<compile_context>
chip_gen: v7x
topology: tpu7x:2x2x1
jax: 0.10.0
libtpu: 0.0.40
codegen_flags: <defaults>
</compile_context>

<pallas_src>
import functools

import jax
import jax.numpy as jnp
from jax.experimental import pallas as pl
from jax.experimental.pallas import tpu as pltpu

# ----------------------------- model dims (small demo) ----------------------
CLIP_DIM = 16
VISUAL_TOKENS = 4
TEXT_LEN = 8
N_EMBD = 32
N_HEAD = 4
N_LAYER = 2
VOCAB = 64
VOCAB_PAD = 128            # lane-dense logits + one-hot contraction width
MAX_POS = 64
BATCH = 2


# ------------------------------- fused kernel -------------------------------
def _clipcap_kernel(
    tok_ref,                                        # (B*T, 1) int32 token ids
    clip_ref, proj_w_ref, proj_b_ref,               # projector
    wte_ref, wpe_ref,                               # embeddings (wte tied with LM head, vocab-padded, bf16)
    bias_ref, hmask_ref,                            # (S, H*S) causal bias, (H*S, E) head->lane mask
    ln1g_ref, ln1b_ref, wqkv_ref, bqkv_ref, wap_ref, bap_ref,
    ln2g_ref, ln2b_ref, wfc_ref, bfc_ref, wmp_ref, bmp_ref,   # per-layer (leading dim 1)
    lnfg_ref, lnfb_ref, lab_ref,                    # final LN + pre-shifted labels (B*S, 1)
    logits_ref, loss_ref,                           # outputs: (B*S, Vpad) f32, (1,1) f32
    x_ref,                                          # VMEM scratch (B, S, E) bf16, persists over layers
    *, B, T, Vt, E, H, V, Vpad):
    S = Vt + T
    D = E // H
    HS = H * S
    l = pl.program_id(0)
    n_layers = pl.num_programs(0)

    def mm(a, w):  # bf16 MXU matmul with f32 accumulation (casts are no-ops for bf16 weights)
        return jnp.dot(a.astype(jnp.bfloat16), w.astype(jnp.bfloat16),
                       preferred_element_type=jnp.float32)

    def layernorm(x, g, b):
        mu = jnp.mean(x, axis=-1, keepdims=True)
        var = jnp.mean((x - mu) ** 2, axis=-1, keepdims=True)
        return (x - mu) * jax.lax.rsqrt(var + 1e-5) * g + b

    # ---- first grid step: projector + one-hot token embedding + positions ----
    @pl.when(l == 0)
    def _init():
        # projector: tanh(clip @ Wp + bp) -> (B, Vt*E)
        vis = jnp.tanh(mm(clip_ref[...], proj_w_ref[...]) + proj_b_ref[...])
        vis = vis.reshape(B, Vt, E)
        # token embedding: one-hot (B*T, Vpad) built from an iota compare, one MXU matmul.
        # TODO(synk): at real GPT-2 vocab keep wte in HBM (memory_space=pl.ANY) and
        # DMA-gather embedding rows instead of a one-hot matmul against a VMEM table.
        onehot = (tok_ref[...] ==
                  jax.lax.broadcasted_iota(jnp.int32, (B * T, Vpad), 1)).astype(jnp.float32)
        text = mm(onehot, wte_ref[...]).reshape(B, T, E)
        x0 = jnp.concatenate([vis, text], axis=1) + wpe_ref[...][None, :, :]
        x_ref[...] = x0.astype(x_ref.dtype)                 # single full-tile store

    # ---- one GPT-2 block per grid step (weights of layer l resident in VMEM) ----
    x = x_ref[...].astype(jnp.float32)                      # (B, S, E), math in f32

    h = layernorm(x, ln1g_ref[0], ln1b_ref[0])
    qkv = (mm(h.reshape(B * S, E), wqkv_ref[0]) + bqkv_ref[0]).reshape(B, S, 3 * E)

    q = qkv[:, :, 0:E]                                      # (B, S, E)
    k = qkv[:, :, E:2 * E]
    v = qkv[:, :, 2 * E:3 * E]

    # head-expanded K/V: tile along sublanes, mask so row m only keeps head (m // S) lanes.
    hm = hmask_ref[...]                                      # (HS, E) {0,1} f32
    k_exp = jnp.concatenate([k] * H, axis=1) * hm[None]      # (B, HS, E)
    v_exp = jnp.concatenate([v] * H, axis=1) * hm[None]

    scale = 1.0 / float(D) ** 0.5
    s = jnp.einsum("bqe,bme->bqm",
                   q.astype(jnp.bfloat16), k_exp.astype(jnp.bfloat16),
                   preferred_element_type=jnp.float32) * scale       # (B, S, HS)
    s = s + bias_ref[...][None]                                       # causal bias per head segment
    m = jnp.max(s, axis=-1, keepdims=True)                            # shared row max (exact softmax)
    p = jnp.exp(s - m)                                                # (B, S, HS)

    # per-head softmax denominators broadcast to lanes with one 2-D matmul against hm
    denom = mm(p.reshape(B * S, HS), hm).reshape(B, S, E)             # (B, S, E)
    pv = jnp.einsum("bqm,bme->bqe",
                    p.astype(jnp.bfloat16), v_exp.astype(jnp.bfloat16),
                    preferred_element_type=jnp.float32)               # (B, S, E)
    a = pv * pl.reciprocal(jnp.maximum(denom, 1e-20), approx=True)

    attn_out = mm(a.reshape(B * S, E), wap_ref[0]) + bap_ref[0]
    x = x + attn_out.reshape(B, S, E)

    h2 = layernorm(x, ln2g_ref[0], ln2b_ref[0])
    m1 = jax.nn.gelu(mm(h2.reshape(B * S, E), wfc_ref[0]) + bfc_ref[0],
                     approximate=True)                                # GPT-2 gelu_new
    m2 = mm(m1, wmp_ref[0]) + bmp_ref[0]
    x = x + m2.reshape(B, S, E)
    x_ref[...] = x.astype(x_ref.dtype)

    # ---- last grid step: final LN + tied LM head + fused shifted masked CE ---
    @pl.when(l == n_layers - 1)
    def _finalize():
        xf = layernorm(x.reshape(B * S, E), lnfg_ref[...], lnfb_ref[...])
        # tied LM head: contract the shared E axis against the (vocab-padded) wte.
        # TODO(synk): at real vocab (50257) tile this matmul + CE over the vocab axis
        # (streamed running max/LSE) instead of materializing the full logits tile.
        logits = jax.lax.dot_general(
            xf.astype(jnp.bfloat16), wte_ref[...],
            dimension_numbers=(((1,), (1,)), ((), ())),
            preferred_element_type=jnp.float32)                       # (B*S, Vpad)
        logits_ref[...] = logits                                      # lane-dense store

        labels = lab_ref[...]                                         # (B*S, 1), pre-shifted, -100 = ignore
        vio = jax.lax.broadcasted_iota(jnp.int32, (B * S, Vpad), 1)
        lce = jnp.where(vio < V, logits, -1e30)                       # mask padded vocab columns
        mx = jnp.max(lce, axis=-1, keepdims=True)
        lse = mx + jnp.log(jnp.sum(jnp.exp(lce - mx), axis=-1, keepdims=True))
        lbl_logit = jnp.sum(lce * (labels == vio).astype(jnp.float32),
                            axis=-1, keepdims=True)
        valid = (labels != -100).astype(jnp.float32)
        num = jnp.sum((lse - lbl_logit) * valid, axis=0, keepdims=True)   # (1,1)
        den = jnp.maximum(jnp.sum(valid, axis=0, keepdims=True), 1.0)     # (1,1)
        loss_ref[...] = num / den


# --------------------------- params & wrapper --------------------------------
def init_params(key):
    n_keys = 6 + N_LAYER * 6
    keys = iter(jax.random.split(key, n_keys))
    nrm = lambda shape, std=0.02: jax.random.normal(next(keys), shape, jnp.float32) * std

    params = {
        "wte": nrm((VOCAB, N_EMBD)),
        "wpe": nrm((MAX_POS, N_EMBD), 0.01),
        "proj_w": nrm((CLIP_DIM, N_EMBD * VISUAL_TOKENS)),
        "proj_b": jnp.zeros((N_EMBD * VISUAL_TOKENS,), jnp.float32),
        "ln_f_g": jnp.ones((N_EMBD,), jnp.float32),
        "ln_f_b": jnp.zeros((N_EMBD,), jnp.float32),
        "blocks": [],
    }
    for _ in range(N_LAYER):
        params["blocks"].append({
            "ln1_g": jnp.ones((N_EMBD,), jnp.float32),
            "ln1_b": jnp.zeros((N_EMBD,), jnp.float32),
            "w_qkv": nrm((N_EMBD, 3 * N_EMBD)),
            "b_qkv": jnp.zeros((3 * N_EMBD,), jnp.float32),
            "w_ap": nrm((N_EMBD, N_EMBD)),
            "b_ap": jnp.zeros((N_EMBD,), jnp.float32),
            "ln2_g": jnp.ones((N_EMBD,), jnp.float32),
            "ln2_b": jnp.zeros((N_EMBD,), jnp.float32),
            "w_fc": nrm((N_EMBD, 4 * N_EMBD)),
            "b_fc": jnp.zeros((4 * N_EMBD,), jnp.float32),
            "w_mp": nrm((4 * N_EMBD, N_EMBD)),
            "b_mp": jnp.zeros((N_EMBD,), jnp.float32),
        })
    return params


_BF16_WEIGHTS = {"w_qkv", "w_ap", "w_fc", "w_mp"}


def _stack(blocks, name):
    dt = jnp.bfloat16 if name in _BF16_WEIGHTS else jnp.float32
    arrs = [b[name].astype(dt) for b in blocks]
    if arrs[0].ndim == 1:
        arrs = [a.reshape(1, -1) for a in arrs]
    return jnp.stack(arrs, axis=0)                 # (L, ...) for layer grid axis


@jax.jit
def clip_caption_forward(params, text_tokens, clip_embed):
    B, T = text_tokens.shape
    E, H, Vt, V, Vpad, L = N_EMBD, N_HEAD, VISUAL_TOKENS, VOCAB, VOCAB_PAD, N_LAYER
    S = Vt + T
    HS = H * S
    D = E // H

    tok = text_tokens.reshape(B * T, 1).astype(jnp.int32)

    # HF GPT-2 semantics: labels = [-100]*Vt ++ text_tokens, shifted CE.
    labels = jnp.concatenate(
        [jnp.full((B, Vt), -100, jnp.int32), text_tokens.astype(jnp.int32)], axis=1)
    shift_labels = jnp.concatenate(
        [labels[:, 1:], jnp.full((B, 1), -100, jnp.int32)], axis=1).reshape(B * S, 1)

    # Constants hoisted out of the per-layer kernel body (computed once, never re-DMA'd):
    #   attn_bias[q, h*S + k] = 0 if q >= k else -1e30        (causal per head segment)
    #   head_mask[h*S + k, e] = 1 if e // D == h else 0        (segment -> lane mask)
    rows = jnp.arange(S, dtype=jnp.int32)[:, None]
    kidx = jnp.tile(jnp.arange(S, dtype=jnp.int32)[None, :], (1, H))
    attn_bias = jnp.where(rows >= kidx, 0.0, -1e30).astype(jnp.float32)        # (S, HS)
    seg = jnp.repeat(jnp.arange(H, dtype=jnp.int32), S)[:, None]               # (HS, 1)
    lane_head = (jnp.arange(E, dtype=jnp.int32) // D)[None, :]                 # (1, E)
    head_mask = (seg == lane_head).astype(jnp.float32)                         # (HS, E)

    # Vocab padded to 128 lanes so both the one-hot gather and the logits store are lane-dense.
    wte_pad = jnp.pad(params["wte"].astype(jnp.bfloat16), ((0, Vpad - V), (0, 0)))

    blocks = params["blocks"]
    st = {k: _stack(blocks, k) for k in blocks[0]}

    def full_spec(arr):
        nd = arr.ndim
        return pl.BlockSpec(arr.shape, lambda l, _nd=nd: (0,) * _nd)

    def layer_spec(arr):
        tail = arr.shape[1:]
        return pl.BlockSpec((1,) + tail,
                            lambda l, _n=len(tail): (l,) + (0,) * _n)

    tensor_inputs = [
        tok,
        clip_embed,
        params["proj_w"].astype(jnp.bfloat16), params["proj_b"].reshape(1, -1),
        wte_pad, params["wpe"][:S],
        attn_bias, head_mask,
        st["ln1_g"], st["ln1_b"],
        st["w_qkv"], st["b_qkv"],
        st["w_ap"], st["b_ap"],
        st["ln2_g"], st["ln2_b"],
        st["w_fc"], st["b_fc"],
        st["w_mp"], st["b_mp"],
        params["ln_f_g"].reshape(1, -1), params["ln_f_b"].reshape(1, -1),
        shift_labels,
    ]
    in_specs = [
        full_spec(tensor_inputs[0]),
        full_spec(tensor_inputs[1]),
        full_spec(tensor_inputs[2]), full_spec(tensor_inputs[3]),
        full_spec(tensor_inputs[4]), full_spec(tensor_inputs[5]),
        full_spec(tensor_inputs[6]), full_spec(tensor_inputs[7]),
        layer_spec(st["ln1_g"]), layer_spec(st["ln1_b"]),
        layer_spec(st["w_qkv"]), layer_spec(st["b_qkv"]),
        layer_spec(st["w_ap"]), layer_spec(st["b_ap"]),
        layer_spec(st["ln2_g"]), layer_spec(st["ln2_b"]),
        layer_spec(st["w_fc"]), layer_spec(st["b_fc"]),
        layer_spec(st["w_mp"]), layer_spec(st["b_mp"]),
        full_spec(tensor_inputs[20]), full_spec(tensor_inputs[21]),
        full_spec(shift_labels),
    ]

    grid_spec = pltpu.PrefetchScalarGridSpec(
        num_scalar_prefetch=0,
        grid=(L,),                                # grid axis = transformer layer
        in_specs=in_specs,
        out_specs=[
            pl.BlockSpec((B * S, Vpad), lambda l: (0, 0)),      # lane-dense logits
            pl.BlockSpec((1, 1), lambda l: (0, 0)),
        ],
        scratch_shapes=[pltpu.VMEM((B, S, E), jnp.bfloat16)],   # activation carried across layers
    )

    logits_pad, loss = pl.pallas_call(
        functools.partial(_clipcap_kernel, B=B, T=T, Vt=Vt, E=E, H=H, V=V, Vpad=Vpad),
        out_shape=(jax.ShapeDtypeStruct((B * S, Vpad), jnp.float32),
                   jax.ShapeDtypeStruct((1, 1), jnp.float32)),
        grid_spec=grid_spec,
        compiler_params=pltpu.CompilerParams(
            dimension_semantics=("arbitrary",),   # layer axis is sequential (x lives in scratch)
            vmem_limit_bytes=32 * 1024 * 1024),
    )(*tensor_inputs)

    logits = logits_pad.reshape(B, S, Vpad)[:, :, :V]
    return loss[0, 0], logits


# ------------------------------- main ----------------------------------------
if __name__ == "__main__":
    key = jax.random.PRNGKey(0)
    k_param, k_clip, k_tok = jax.random.split(key, 3)

    params = init_params(k_param)
    clip_embed = jax.random.normal(k_clip, (BATCH, CLIP_DIM), jnp.float32)
    text_tokens = jax.random.randint(k_tok, (BATCH, TEXT_LEN), 0, VOCAB, jnp.int32)

    loss, logits = clip_caption_forward(params, text_tokens, clip_embed)
    jax.block_until_ready((loss, logits))

    assert logits.shape == (BATCH, VISUAL_TOKENS + TEXT_LEN, VOCAB)
    assert bool(jnp.isfinite(loss))
    print("KERNEL_OK")
</pallas_src>

<mosaic_0001>
module attributes {stable_mosaic.version = 11 : i64} {
  func.func @_clipcap_kernel(%arg0: i32, %arg1: memref<16x1xi32, #tpu.memory_space<vmem>>, %arg2: memref<2x16xf32, #tpu.memory_space<vmem>>, %arg3: memref<16x128xbf16, #tpu.memory_space<vmem>>, %arg4: memref<1x128xf32, #tpu.memory_space<vmem>>, %arg5: memref<128x32xbf16, #tpu.memory_space<vmem>>, %arg6: memref<12x32xf32, #tpu.memory_space<vmem>>, %arg7: memref<12x48xf32, #tpu.memory_space<vmem>>, %arg8: memref<48x32xf32, #tpu.memory_space<vmem>>, %arg9: memref<1x1x32xf32, #tpu.memory_space<vmem>>, %arg10: memref<1x1x32xf32, #tpu.memory_space<vmem>>, %arg11: memref<1x32x96xbf16, #tpu.memory_space<vmem>>, %arg12: memref<1x1x96xf32, #tpu.memory_space<vmem>>, %arg13: memref<1x32x32xbf16, #tpu.memory_space<vmem>>, %arg14: memref<1x1x32xf32, #tpu.memory_space<vmem>>, %arg15: memref<1x1x32xf32, #tpu.memory_space<vmem>>, %arg16: memref<1x1x32xf32, #tpu.memory_space<vmem>>, %arg17: memref<1x32x128xbf16, #tpu.memory_space<vmem>>, %arg18: memref<1x1x128xf32, #tpu.memory_space<vmem>>, %arg19: memref<1x128x32xbf16, #tpu.memory_space<vmem>>, %arg20: memref<1x1x32xf32, #tpu.memory_space<vmem>>, %arg21: memref<1x32xf32, #tpu.memory_space<vmem>>, %arg22: memref<1x32xf32, #tpu.memory_space<vmem>>, %arg23: memref<24x1xi32, #tpu.memory_space<vmem>>, %arg24: memref<24x128xf32, #tpu.memory_space<vmem>>, %arg25: memref<1x1xf32, #tpu.memory_space<vmem>>, %arg26: memref<2x12x32xbf16, #tpu.memory_space<vmem>>) attributes {dimension_semantics = [#tpu.dimension_semantics<arbitrary>], iteration_bounds = array<i64: 2>, scalar_prefetch = 0 : i64, scratch_operands = 1 : i64, tpu.core_type = #tpu.core_type<tc>, window_params = [{pipeline_mode = #tpu.pipeline_mode<synchronous>, transform_indices = @transform_0, window_bounds = array<i64: 16, 1>}, {pipeline_mode = #tpu.pipeline_mode<synchronous>, transform_indices = @transform_1, window_bounds = array<i64: 2, 16>}, {pipeline_mode = #tpu.pipeline_mode<synchronous>, transform_indices = @transform_2, window_bounds = array<i64: 16, 128>}, {pipeline_mode = #tpu.pipeline_mode<synchronous>, transform_indices = @transform_3, window_bounds = array<i64: 1, 128>}, {pipeline_mode = #tpu.pipeline_mode<synchronous>, transform_indices = @transform_4, window_bounds = array<i64: 128, 32>}, {pipeline_mode = #tpu.pipeline_mode<synchronous>, transform_indices = @transform_5, window_bounds = array<i64: 12, 32>}, {pipeline_mode = #tpu.pipeline_mode<synchronous>, transform_indices = @transform_6, window_bounds = array<i64: 12, 48>}, {pipeline_mode = #tpu.pipeline_mode<synchronous>, transform_indices = @transform_7, window_bounds = array<i64: 48, 32>}, {transform_indices = @transform_8, window_bounds = array<i64: 1, 1, 32>}, {transform_indices = @transform_9, window_bounds = array<i64: 1, 1, 32>}, {transform_indices = @transform_10, window_bounds = array<i64: 1, 32, 96>}, {transform_indices = @transform_11, window_bounds = array<i64: 1, 1, 96>}, {transform_indices = @transform_12, window_bounds = array<i64: 1, 32, 32>}, {transform_indices = @transform_13, window_bounds = array<i64: 1, 1, 32>}, {transform_indices = @transform_14, window_bounds = array<i64: 1, 1, 32>}, {transform_indices = @transform_15, window_bounds = array<i64: 1, 1, 32>}, {transform_indices = @transform_16, window_bounds = array<i64: 1, 32, 128>}, {transform_indices = @transform_17, window_bounds = array<i64: 1, 1, 128>}, {transform_indices = @transform_18, window_bounds = array<i64: 1, 128, 32>}, {transform_indices = @transform_19, window_bounds = array<i64: 1, 1, 32>}, {pipeline_mode = #tpu.pipeline_mode<synchronous>, transform_indices = @transform_20, window_bounds = array<i64: 1, 32>}, {pipeline_mode = #tpu.pipeline_mode<synchronous>, transform_indices = @transform_21, window_bounds = array<i64: 1, 32>}, {pipeline_mode = #tpu.pipeline_mode<synchronous>, transform_indices = @transform_22, window_bounds = array<i64: 24, 1>}, {pipeline_mode = #tpu.pipeline_mode<synchronous>, transform_indices = @transform_23, window_bounds = array<i64: 24, 128>}, {pipeline_mode = #tpu.pipeline_mode<synchronous>, transform_indices = @transform_24, window_bounds = array<i64: 1, 1>}]} {
    %c0_i32 = arith.constant 0 : i32
    %0 = arith.cmpi eq, %arg0, %c0_i32 : i32
    %1 = arith.extui %0 : i1 to i32
    %c0_i32_0 = arith.constant 0 : i32
    %2 = arith.cmpi ne, %1, %c0_i32_0 : i32
    scf.if %2 {
      %c0_70 = arith.constant 0 : index
      %c0_71 = arith.constant 0 : index
      %157 = vector.load %arg2[%c0_70, %c0_71] : memref<2x16xf32, #tpu.memory_space<vmem>>, vector<2x16xf32>
      %c0_72 = arith.constant 0 : index
      %c0_73 = arith.constant 0 : index
      %158 = vector.load %arg3[%c0_72, %c0_73] : memref<16x128xbf16, #tpu.memory_space<vmem>>, vector<16x128xbf16>
      %159 = arith.truncf %157 : vector<2x16xf32> to vector<2x16xbf16>
      %cst_74 = arith.constant dense<0.000000e+00> : vector<2x128xf32>
      %160 = tpu.matmul %159, %158, %cst_74 {dimension_numbers = #tpu.dot_dimension_numbers<[1], [0], [0], [1], [0, 0, 1, 1], [], []>} : vector<2x16xbf16>, vector<16x128xbf16>, vector<2x128xf32> -> vector<2x128xf32>
      %c0_75 = arith.constant 0 : index
      %c0_76 = arith.constant 0 : index
      %161 = vector.load %arg4[%c0_75, %c0_76] : memref<1x128xf32, #tpu.memory_space<vmem>>, vector<1x128xf32>
      %162 = vector.broadcast %161 : vector<1x128xf32> to vector<2x128xf32>
      %163 = arith.addf %160, %162 : vector<2x128xf32>
      %164 = math.tanh %163 : vector<2x128xf32>
      %165 = vector.shape_cast %164 : vector<2x128xf32> to vector<2x4x32xf32>
      %c0_77 = arith.constant 0 : index
      %c0_78 = arith.constant 0 : index
      %166 = vector.load %arg1[%c0_77, %c0_78] : memref<16x1xi32, #tpu.memory_space<vmem>>, vector<16x1xi32>
      %167 = tpu.iota {dimensions = array<i32: 1>} : vector<16x128xi32>
      %168 = vector.broadcast %166 : vector<16x1xi32> to vector<16x128xi32>
      %169 = arith.cmpi eq, %168, %167 : vector<16x128xi32>
      %170 = arith.extui %169 : vector<16x128xi1> to vector<16x128xi32>
      %171 = arith.sitofp %170 : vector<16x128xi32> to vector<16x128xf32>
      %c0_79 = arith.constant 0 : index
      %c0_80 = arith.constant 0 : index
      %172 = vector.load %arg5[%c0_79, %c0_80] : memref<128x32xbf16, #tpu.memory_space<vmem>>, vector<128x32xbf16>
      %173 = arith.truncf %171 : vector<16x128xf32> to vector<16x128xbf16>
      %cst_81 = arith.constant dense<0.000000e+00> : vector<16x32xf32>
      %174 = tpu.matmul %173, %172, %cst_81 {dimension_numbers = #tpu.dot_dimension_numbers<[1], [0], [0], [1], [0, 0, 1, 1], [], []>} : vector<16x128xbf16>, vector<128x32xbf16>, vector<16x32xf32> -> vector<16x32xf32>
      %175 = vector.shape_cast %174 : vector<16x32xf32> to vector<2x8x32xf32>
      %176 = tpu.concatenate %165, %175 in 1 : vector<2x4x32xf32>, vector<2x8x32xf32> -> vector<2x12x32xf32>
      %c0_82 = arith.constant 0 : index
      %c0_83 = arith.constant 0 : index
      %177 = vector.load %arg6[%c0_82, %c0_83] : memref<12x32xf32, #tpu.memory_space<vmem>>, vector<12x32xf32>
      %178 = vector.shape_cast %177 : vector<12x32xf32> to vector<1x12x32xf32>
      %179 = vector.broadcast %178 : vector<1x12x32xf32> to vector<2x12x32xf32>
      %180 = arith.addf %176, %179 : vector<2x12x32xf32>
      %181 = arith.truncf %180 : vector<2x12x32xf32> to vector<2x12x32xbf16>
      %c0_84 = arith.constant 0 : index
      %c0_85 = arith.constant 0 : index
      %c0_86 = arith.constant 0 : index
      %182 = vector.load %arg26[%c0_84, %c0_85, %c0_86] : memref<2x12x32xbf16, #tpu.memory_space<vmem>>, vector<2x12x32xbf16>
      tpu.vector_store %arg26[%c0_84, %c0_85, %c0_86], %181 {strides = array<i32>} : memref<2x12x32xbf16, #tpu.memory_space<vmem>>, vector<2x12x32xbf16>,
    } else {
    }
    %c0 = arith.constant 0 : index
    %c0_1 = arith.constant 0 : index
    %c0_2 = arith.constant 0 : index
    %3 = vector.load %arg26[%c0, %c0_1, %c0_2] : memref<2x12x32xbf16, #tpu.memory_space<vmem>>, vector<2x12x32xbf16>
    %4 = arith.extf %3 : vector<2x12x32xbf16> to vector<2x12x32xf32>
    %c0_3 = arith.constant 0 : index
    %c0_4 = arith.constant 0 : index
    %c0_5 = arith.constant 0 : index
    %5 = vector.load %arg9[%c0_3, %c0_4, %c0_5] : memref<1x1x32xf32, #tpu.memory_space<vmem>>, vector<1x1x32xf32>
    %6 = vector.shape_cast %5 : vector<1x1x32xf32> to vector<1x32xf32>
    %c0_6 = arith.constant 0 : index
    %c0_7 = arith.constant 0 : index
    %c0_8 = arith.constant 0 : index
    %7 = vector.load %arg10[%c0_6, %c0_7, %c0_8] : memref<1x1x32xf32, #tpu.memory_space<vmem>>, vector<1x1x32xf32>
    %8 = vector.shape_cast %7 : vector<1x1x32xf32> to vector<1x32xf32>
    %cst = arith.constant dense<0.000000e+00> : vector<2x12xf32>
    %9 = vector.multi_reduction <add>, %4, %cst [2] : vector<2x12x32xf32> to vector<2x12xf32>
    %10 = vector.shape_cast %9 : vector<2x12xf32> to vector<2x12x1xf32>
    %cst_9 = arith.constant 3.200000e+01 : f32
    %11 = vector.broadcast %cst_9 : f32 to vector<2x12x1xf32>
    %12 = arith.divf %10, %11 : vector<2x12x1xf32>
    %13 = vector.broadcast %12 : vector<2x12x1xf32> to vector<2x12x32xf32>
    %14 = arith.subf %4, %13 : vector<2x12x32xf32>
    %15 = arith.mulf %14, %14 : vector<2x12x32xf32>
    %cst_10 = arith.constant dense<0.000000e+00> : vector<2x12xf32>
    %16 = vector.multi_reduction <add>, %15, %cst_10 [2] : vector<2x12x32xf32> to vector<2x12xf32>
    %17 = vector.shape_cast %16 : vector<2x12xf32> to vector<2x12x1xf32>
    %cst_11 = arith.constant 3.200000e+01 : f32
    %18 = vector.broadcast %cst_11 : f32 to vector<2x12x1xf32>
    %19 = arith.divf %17, %18 : vector<2x12x1xf32>
    %20 = vector.broadcast %12 : vector<2x12x1xf32> to vector<2x12x32xf32>
    %21 = arith.subf %4, %20 : vector<2x12x32xf32>
    %cst_12 = arith.constant 9.99999974E-6 : f32
    %22 = vector.broadcast %cst_12 : f32 to vector<2x12x1xf32>
    %23 = arith.addf %19, %22 : vector<2x12x1xf32>
    %24 = math.rsqrt %23 : vector<2x12x1xf32>
    %25 = vector.broadcast %24 : vector<2x12x1xf32> to vector<2x12x32xf32>
    %26 = arith.mulf %21, %25 : vector<2x12x32xf32>
    %27 = vector.shape_cast %6 : vector<1x32xf32> to vector<1x1x32xf32>
    %28 = vector.broadcast %27 : vector<1x1x32xf32> to vector<2x12x32xf32>
    %29 = arith.mulf %26, %28 : vector<2x12x32xf32>
    %30 = vector.shape_cast %8 : vector<1x32xf32> to vector<1x1x32xf32>
    %31 = vector.broadcast %30 : vector<1x1x32xf32> to vector<2x12x32xf32>
    %32 = arith.addf %29, %31 : vector<2x12x32xf32>
    %33 = vector.shape_cast %32 : vector<2x12x32xf32> to vector<24x32xf32>
    %c0_13 = arith.constant 0 : index
    %c0_14 = arith.constant 0 : index
    %c0_15 = arith.constant 0 : index
    %34 = vector.load %arg11[%c0_13, %c0_14, %c0_15] : memref<1x32x96xbf16, #tpu.memory_space<vmem>>, vector<1x32x96xbf16>
    %35 = vector.shape_cast %34 : vector<1x32x96xbf16> to vector<32x96xbf16>
    %36 = arith.truncf %33 : vector<24x32xf32> to vector<24x32xbf16>
    %cst_16 = arith.constant dense<0.000000e+00> : vector<24x96xf32>
    %37 = tpu.matmul %36, %35, %cst_16 {dimension_numbers = #tpu.dot_dimension_numbers<[1], [0], [0], [1], [0, 0, 1, 1], [], []>} : vector<24x32xbf16>, vector<32x96xbf16>, vector<24x96xf32> -> vector<24x96xf32>
    %c0_17 = arith.constant 0 : index
    %c0_18 = arith.constant 0 : index
    %c0_19 = arith.constant 0 : index
    %38 = vector.load %arg12[%c0_17, %c0_18, %c0_19] : memref<1x1x96xf32, #tpu.memory_space<vmem>>, vector<1x1x96xf32>
    %39 = vector.shape_cast %38 : vector<1x1x96xf32> to vector<1x96xf32>
    %40 = vector.broadcast %39 : vector<1x96xf32> to vector<24x96xf32>
    %41 = arith.addf %37, %40 : vector<24x96xf32>
    %42 = vector.shape_cast %41 : vector<24x96xf32> to vector<2x12x96xf32>
    %43 = vector.extract_strided_slice %42 {offsets = [0, 0, 0], sizes = [2, 12, 32], strides = [1, 1, 1]} : vector<2x12x96xf32> to vector<2x12x32xf32>
    %44 = vector.extract_strided_slice %42 {offsets = [0, 0, 32], sizes = [2, 12, 32], strides = [1, 1, 1]} : vector<2x12x96xf32> to vector<2x12x32xf32>
    %45 = vector.extract_strided_slice %42 {offsets = [0, 0, 64], sizes = [2, 12, 32], strides = [1, 1, 1]} : vector<2x12x96xf32> to vector<2x12x32xf32>
    %c0_20 = arith.constant 0 : index
    %c0_21 = arith.constant 0 : index
    %46 = vector.load %arg8[%c0_20, %c0_21] : memref<48x32xf32, #tpu.memory_space<vmem>>, vector<48x32xf32>
    %47 = tpu.concatenate %44, %44, %44, %44 in 1 : vector<2x12x32xf32>, vector<2x12x32xf32>, vector<2x12x32xf32>, vector<2x12x32xf32> -> vector<2x48x32xf32>
    %48 = vector.shape_cast %46 : vector<48x32xf32> to vector<1x48x32xf32>
    %49 = vector.broadcast %48 : vector<1x48x32xf32> to vector<2x48x32xf32>
    %50 = arith.mulf %47, %49 : vector<2x48x32xf32>
    %51 = tpu.concatenate %45, %45, %45, %45 in 1 : vector<2x12x32xf32>, vector<2x12x32xf32>, vector<2x12x32xf32>, vector<2x12x32xf32> -> vector<2x48x32xf32>
    %52 = vector.shape_cast %46 : vector<48x32xf32> to vector<1x48x32xf32>
    %53 = vector.broadcast %52 : vector<1x48x32xf32> to vector<2x48x32xf32>
    %54 = arith.mulf %51, %53 : vector<2x48x32xf32>
    %55 = arith.truncf %43 : vector<2x12x32xf32> to vector<2x12x32xbf16>
    %56 = arith.truncf %50 : vector<2x48x32xf32> to vector<2x48x32xbf16>
    "tpu.trace_start"() <{level = 10 : i32, message = "bqe,bme->bqm"}> : () -> ()
    %cst_22 = arith.constant dense<0.000000e+00> : vector<2x12x48xf32>
    %57 = tpu.matmul %55, %56, %cst_22 {dimension_numbers = #tpu.dot_dimension_numbers<[2], [2], [1], [1], [0, 0, 0, 1, 1, 1], [0], [0]>} : vector<2x12x32xbf16>, vector<2x48x32xbf16>, vector<2x12x48xf32> -> vector<2x12x48xf32>
    "tpu.trace_stop"() : () -> ()
    %cst_23 = arith.constant 0.353553385 : f32
    %58 = vector.broadcast %cst_23 : f32 to vector<2x12x48xf32>
    %59 = arith.mulf %57, %58 : vector<2x12x48xf32>
    %c0_24 = arith.constant 0 : index
    %c0_25 = arith.constant 0 : index
    %60 = vector.load %arg7[%c0_24, %c0_25] : memref<12x48xf32, #tpu.memory_space<vmem>>, vector<12x48xf32>
    %61 = vector.shape_cast %60 : vector<12x48xf32> to vector<1x12x48xf32>
    %62 = vector.broadcast %61 : vector<1x12x48xf32> to vector<2x12x48xf32>
    %63 = arith.addf %59, %62 : vector<2x12x48xf32>
    %cst_26 = arith.constant dense<0xFF800000> : vector<2x12xf32>
    %64 = vector.multi_reduction <maximumf>, %63, %cst_26 [2] : vector<2x12x48xf32> to vector<2x12xf32>
    %65 = vector.shape_cast %64 : vector<2x12xf32> to vector<2x12x1xf32>
    %66 = vector.broadcast %65 : vector<2x12x1xf32> to vector<2x12x48xf32>
    %67 = arith.subf %63, %66 : vector<2x12x48xf32>
    %68 = math.exp %67 : vector<2x12x48xf32>
    %69 = vector.shape_cast %68 : vector<2x12x48xf32> to vector<24x48xf32>
    %70 = arith.truncf %69 : vector<24x48xf32> to vector<24x48xbf16>
    %71 = arith.truncf %46 : vector<48x32xf32> to vector<48x32xbf16>
    %cst_27 = arith.constant dense<0.000000e+00> : vector<24x32xf32>
    %72 = tpu.matmul %70, %71, %cst_27 {dimension_numbers = #tpu.dot_dimension_numbers<[1], [0], [0], [1], [0, 0, 1, 1], [], []>} : vector<24x48xbf16>, vector<48x32xbf16>, vector<24x32xf32> -> vector<24x32xf32>
    %73 = vector.shape_cast %72 : vector<24x32xf32> to vector<2x12x32xf32>
    %74 = arith.truncf %68 : vector<2x12x48xf32> to vector<2x12x48xbf16>
    %75 = arith.truncf %54 : vector<2x48x32xf32> to vector<2x48x32xbf16>
    "tpu.trace_start"() <{level = 10 : i32, message = "bqm,bme->bqe"}> : () -> ()
    %cst_28 = arith.constant dense<0.000000e+00> : vector<2x12x32xf32>
    %76 = tpu.matmul %74, %75, %cst_28 {dimension_numbers = #tpu.dot_dimension_numbers<[2], [1], [1], [2], [0, 0, 0, 1, 1, 2], [0], [0]>} : vector<2x12x48xbf16>, vector<2x48x32xbf16>, vector<2x12x32xf32> -> vector<2x12x32xf32>
    "tpu.trace_stop"() : () -> ()
    %cst_29 = arith.constant 9.99999968E-21 : f32
    %77 = vector.broadcast %cst_29 : f32 to vector<2x12x32xf32>
    %78 = arith.maximumf %73, %77 : vector<2x12x32xf32>
    %79 = tpu.reciprocal %78 {approx = true} : vector<2x12x32xf32> -> vector<2x12x32xf32>
    %80 = arith.mulf %76, %79 : vector<2x12x32xf32>
    %81 = vector.shape_cast %80 : vector<2x12x32xf32> to vector<24x32xf32>
    %c0_30 = arith.constant 0 : index
    %c0_31 = arith.constant 0 : index
    %c0_32 = arith.constant 0 : index
    %82 = vector.load %arg13[%c0_30, %c0_31, %c0_32] : memref<1x32x32xbf16, #tpu.memory_space<vmem>>, vector<1x32x32xbf16>
    %83 = vector.shape_cast %82 : vector<1x32x32xbf16> to vector<32x32xbf16>
    %84 = arith.truncf %81 : vector<24x32xf32> to vector<24x32xbf16>
    %cst_33 = arith.constant dense<0.000000e+00> : vector<24x32xf32>
    %85 = tpu.matmul %84, %83, %cst_33 {dimension_numbers = #tpu.dot_dimension_numbers<[1], [0], [0], [1], [0, 0, 1, 1], [], []>} : vector<24x32xbf16>, vector<32x32xbf16>, vector<24x32xf32> -> vector<24x32xf32>
    %c0_34 = arith.constant 0 : index
    %c0_35 = arith.constant 0 : index
    %c0_36 = arith.constant 0 : index
    %86 = vector.load %arg14[%c0_34, %c0_35, %c0_36] : memref<1x1x32xf32, #tpu.memory_space<vmem>>, vector<1x1x32xf32>
    %87 = vector.shape_cast %86 : vector<1x1x32xf32> to vector<1x32xf32>
    %88 = vector.broadcast %87 : vector<1x32xf32> to vector<24x32xf32>
    %89 = arith.addf %85, %88 : vector<24x32xf32>
    %90 = vector.shape_cast %89 : vector<24x32xf32> to vector<2x12x32xf32>
    %91 = arith.addf %4, %90 : vector<2x12x32xf32>
    %c0_37 = arith.constant 0 : index
    %c0_38 = arith.constant 0 : index
    %c0_39 = arith.constant 0 : index
    %92 = vector.load %arg15[%c0_37, %c0_38, %c0_39] : memref<1x1x32xf32, #tpu.memory_space<vmem>>, vector<1x1x32xf32>
    %93 = vector.shape_cast %92 : vector<1x1x32xf32> to vector<1x32xf32>
    %c0_40 = arith.constant 0 : index
    %c0_41 = arith.constant 0 : index
    %c0_42 = arith.constant 0 : index
    %94 = vector.load %arg16[%c0_40, %c0_41, %c0_42] : memref<1x1x32xf32, #tpu.memory_space<vmem>>, vector<1x1x32xf32>
    %95 = vector.shape_cast %94 : vector<1x1x32xf32> to vector<1x32xf32>
    %cst_43 = arith.constant dense<0.000000e+00> : vector<2x12xf32>
    %96 = vector.multi_reduction <add>, %91, %cst_43 [2] : vector<2x12x32xf32> to vector<2x12xf32>
    %97 = vector.shape_cast %96 : vector<2x12xf32> to vector<2x12x1xf32>
    %cst_44 = arith.constant 3.200000e+01 : f32
    %98 = vector.broadcast %cst_44 : f32 to vector<2x12x1xf32>
    %99 = arith.divf %97, %98 : vector<2x12x1xf32>
    %100 = vector.broadcast %99 : vector<2x12x1xf32> to vector<2x12x32xf32>
    %101 = arith.subf %91, %100 : vector<2x12x32xf32>
    %102 = arith.mulf %101, %101 : vector<2x12x32xf32>
    %cst_45 = arith.constant dense<0.000000e+00> : vector<2x12xf32>
    %103 = vector.multi_reduction <add>, %102, %cst_45 [2] : vector<2x12x32xf32> to vector<2x12xf32>
    %104 = vector.shape_cast %103 : vector<2x12xf32> to vector<2x12x1xf32>
    %cst_46 = arith.constant 3.200000e+01 : f32
    %105 = vector.broadcast %cst_46 : f32 to vector<2x12x1xf32>
    %106 = arith.divf %104, %105 : vector<2x12x1xf32>
    %107 = vector.broadcast %99 : vector<2x12x1xf32> to vector<2x12x32xf32>
    %108 = arith.subf %91, %107 : vector<2x12x32xf32>
    %cst_47 = arith.constant 9.99999974E-6 : f32
    %109 = vector.broadcast %cst_47 : f32 to vector<2x12x1xf32>
    %110 = arith.addf %106, %109 : vector<2x12x1xf32>
    %111 = math.rsqrt %110 : vector<2x12x1xf32>
    %112 = vector.broadcast %111 : vector<2x12x1xf32> to vector<2x12x32xf32>
    %113 = arith.mulf %108, %112 : vector<2x12x32xf32>
    %114 = vector.shape_cast %93 : vector<1x32xf32> to vector<1x1x32xf32>
    %115 = vector.broadcast %114 : vector<1x1x32xf32> to vector<2x12x32xf32>
    %116 = arith.mulf %113, %115 : vector<2x12x32xf32>
    %117 = vector.shape_cast %95 : vector<1x32xf32> to vector<1x1x32xf32>
    %118 = vector.broadcast %117 : vector<1x1x32xf32> to vector<2x12x32xf32>
    %119 = arith.addf %116, %118 : vector<2x12x32xf32>
    %120 = vector.shape_cast %119 : vector<2x12x32xf32> to vector<24x32xf32>
    %c0_48 = arith.constant 0 : index
    %c0_49 = arith.constant 0 : index
    %c0_50 = arith.constant 0 : index
    %121 = vector.load %arg17[%c0_48, %c0_49, %c0_50] : memref<1x32x128xbf16, #tpu.memory_space<vmem>>, vector<1x32x128xbf16>
    %122 = vector.shape_cast %121 : vector<1x32x128xbf16> to vector<32x128xbf16>
    %123 = arith.truncf %120 : vector<24x32xf32> to vector<24x32xbf16>
    %cst_51 = arith.constant dense<0.000000e+00> : vector<24x128xf32>
    %124 = tpu.matmul %123, %122, %cst_51 {dimension_numbers = #tpu.dot_dimension_numbers<[1], [0], [0], [1], [0, 0, 1, 1], [], []>} : vector<24x32xbf16>, vector<32x128xbf16>, vector<24x128xf32> -> vector<24x128xf32>
    %c0_52 = arith.constant 0 : index
    %c0_53 = arith.constant 0 : index
    %c0_54 = arith.constant 0 : index
    %125 = vector.load %arg18[%c0_52, %c0_53, %c0_54] : memref<1x1x128xf32, #tpu.memory_space<vmem>>, vector<1x1x128xf32>
    %126 = vector.shape_cast %125 : vector<1x1x128xf32> to vector<1x128xf32>
    %127 = vector.broadcast %126 : vector<1x128xf32> to vector<24x128xf32>
    %128 = arith.addf %124, %127 : vector<24x128xf32>
    %129 = arith.mulf %128, %128 : vector<24x128xf32>
    %130 = arith.mulf %128, %129 : vector<24x128xf32>
    %cst_55 = arith.constant 4.471500e-02 : f32
    %131 = vector.broadcast %cst_55 : f32 to vector<24x128xf32>
    %132 = arith.mulf %131, %130 : vector<24x128xf32>
    %133 = arith.addf %128, %132 : vector<24x128xf32>
    %cst_56 = arith.constant 0.797884583 : f32
    %134 = vector.broadcast %cst_56 : f32 to vector<24x128xf32>
    %135 = arith.mulf %134, %133 : vector<24x128xf32>
    %136 = math.tanh %135 : vector<24x128xf32>
    %cst_57 = arith.constant 1.000000e+00 : f32
    %137 = vector.broadcast %cst_57 : f32 to vector<24x128xf32>
    %138 = arith.addf %137, %136 : vector<24x128xf32>
    %cst_58 = arith.constant 5.000000e-01 : f32
    %139 = vector.broadcast %cst_58 : f32 to vector<24x128xf32>
    %140 = arith.mulf %139, %138 : vector<24x128xf32>
    %141 = arith.mulf %128, %140 : vector<24x128xf32>
    %c0_59 = arith.constant 0 : index
    %c0_60 = arith.constant 0 : index
    %c0_61 = arith.constant 0 : index
    %142 = vector.load %arg19[%c0_59, %c0_60, %c0_61] : memref<1x128x32xbf16, #tpu.memory_space<vmem>>, vector<1x128x32xbf16>
    %143 = vector.shape_cast %142 : vector<1x128x32xbf16> to vector<128x32xbf16>
    %144 = arith.truncf %141 : vector<24x128xf32> to vector<24x128xbf16>
    %cst_62 = arith.constant dense<0.000000e+00> : vector<24x32xf32>
    %145 = tpu.matmul %144, %143, %cst_62 {dimension_numbers = #tpu.dot_dimension_numbers<[1], [0], [0], [1], [0, 0, 1, 1], [], []>} : vector<24x128xbf16>, vector<128x32xbf16>, vector<24x32xf32> -> vector<24x32xf32>
    %c0_63 = arith.constant 0 : index
    %c0_64 = arith.constant 0 : index
    %c0_65 = arith.constant 0 : index
    %146 = vector.load %arg20[%c0_63, %c0_64, %c0_65] : memref<1x1x32xf32, #tpu.memory_space<vmem>>, vector<1x1x32xf32>
    %147 = vector.shape_cast %146 : vector<1x1x32xf32> to vector<1x32xf32>
    %148 = vector.broadcast %147 : vector<1x32xf32> to vector<24x32xf32>
    %149 = arith.addf %145, %148 : vector<24x32xf32>
    %150 = vector.shape_cast %149 : vector<24x32xf32> to vector<2x12x32xf32>
    %151 = arith.addf %91, %150 : vector<2x12x32xf32>
    %152 = arith.truncf %151 : vector<2x12x32xf32> to vector<2x12x32xbf16>
    %c0_66 = arith.constant 0 : index
    %c0_67 = arith.constant 0 : index
    %c0_68 = arith.constant 0 : index
    %153 = vector.load %arg26[%c0_66, %c0_67, %c0_68] : memref<2x12x32xbf16, #tpu.memory_space<vmem>>, vector<2x12x32xbf16>
    tpu.vector_store %arg26[%c0_66, %c0_67, %c0_68], %152 {strides = array<i32>} : memref<2x12x32xbf16, #tpu.memory_space<vmem>>, vector<2x12x32xbf16>,
    %c1_i32 = arith.constant 1 : i32
    %154 = arith.cmpi eq, %arg0, %c1_i32 : i32
    %155 = arith.extui %154 : i1 to i32
    %c0_i32_69 = arith.constant 0 : i32
    %156 = arith.cmpi ne, %155, %c0_i32_69 : i32
    scf.if %156 {
      %157 = vector.shape_cast %151 : vector<2x12x32xf32> to vector<24x32xf32>
      %c0_70 = arith.constant 0 : index
      %c0_71 = arith.constant 0 : index
      %158 = vector.load %arg21[%c0_70, %c0_71] : memref<1x32xf32, #tpu.memory_space<vmem>>, vector<1x32xf32>
      %c0_72 = arith.constant 0 : index
      %c0_73 = arith.constant 0 : index
      %159 = vector.load %arg22[%c0_72, %c0_73] : memref<1x32xf32, #tpu.memory_space<vmem>>, vector<1x32xf32>
      %cst_74 = arith.constant dense<0.000000e+00> : vector<24xf32>
      %160 = vector.multi_reduction <add>, %157, %cst_74 [1] : vector<24x32xf32> to vector<24xf32>
      %161 = vector.shape_cast %160 : vector<24xf32> to vector<24x1xf32>
      %cst_75 = arith.constant 3.200000e+01 : f32
      %162 = vector.broadcast %cst_75 : f32 to vector<24x1xf32>
      %163 = arith.divf %161, %162 : vector<24x1xf32>
      %164 = vector.broadcast %163 : vector<24x1xf32> to vector<24x32xf32>
      %165 = arith.subf %157, %164 : vector<24x32xf32>
      %166 = arith.mulf %165, %165 : vector<24x32xf32>
      %cst_76 = arith.constant dense<0.000000e+00> : vector<24xf32>
      %167 = vector.multi_reduction <add>, %166, %cst_76 [1] : vector<24x32xf32> to vector<24xf32>
      %168 = vector.shape_cast %167 : vector<24xf32> to vector<24x1xf32>
      %cst_77 = arith.constant 3.200000e+01 : f32
      %169 = vector.broadcast %cst_77 : f32 to vector<24x1xf32>
      %170 = arith.divf %168, %169 : vector<24x1xf32>
      %171 = vector.broadcast %163 : vector<24x1xf32> to vector<24x32xf32>
      %172 = arith.subf %157, %171 : vector<24x32xf32>
      %cst_78 = arith.constant 9.99999974E-6 : f32
      %173 = vector.broadcast %cst_78 : f32 to vector<24x1xf32>
      %174 = arith.addf %170, %173 : vector<24x1xf32>
      %175 = math.rsqrt %174 : vector<24x1xf32>
      %176 = vector.broadcast %175 : vector<24x1xf32> to vector<24x32xf32>
      %177 = arith.mulf %172, %176 : vector<24x32xf32>
      %178 = vector.broadcast %158 : vector<1x32xf32> to vector<24x32xf32>
      %179 = arith.mulf %177, %178 : vector<24x32xf32>
      %180 = vector.broadcast %159 : vector<1x32xf32> to vector<24x32xf32>
      %181 = arith.addf %179, %180 : vector<24x32xf32>
      %182 = arith.truncf %181 : vector<24x32xf32> to vector<24x32xbf16>
      %c0_79 = arith.constant 0 : index
      %c0_80 = arith.constant 0 : index
      %183 = vector.load %arg5[%c0_79, %c0_80] : memref<128x32xbf16, #tpu.memory_space<vmem>>, vector<128x32xbf16>
      %cst_81 = arith.constant dense<0.000000e+00> : vector<24x128xf32>
      %184 = tpu.matmul %182, %183, %cst_81 {dimension_numbers = #tpu.dot_dimension_numbers<[1], [1], [0], [0], [0, 0, 1, 0], [], []>} : vector<24x32xbf16>, vector<128x32xbf16>, vector<24x128xf32> -> vector<24x128xf32>
      %c0_82 = arith.constant 0 : index
      %c0_83 = arith.constant 0 : index
      %185 = vector.load %arg24[%c0_82, %c0_83] : memref<24x128xf32, #tpu.memory_space<vmem>>, vector<24x128xf32>
      tpu.vector_store %arg24[%c0_82, %c0_83], %184 {strides = array<i32>} : memref<24x128xf32, #tpu.memory_space<vmem>>, vector<24x128xf32>,
      %c0_84 = arith.constant 0 : index
      %c0_85 = arith.constant 0 : index
      %186 = vector.load %arg23[%c0_84, %c0_85] : memref<24x1xi32, #tpu.memory_space<vmem>>, vector<24x1xi32>
      %187 = tpu.iota {dimensions = array<i32: 1>} : vector<24x128xi32>
      %c64_i32 = arith.constant 64 : i32
      %188 = vector.broadcast %c64_i32 : i32 to vector<24x128xi32>
      %189 = arith.cmpi slt, %187, %188 : vector<24x128xi32>
      %cst_86 = arith.constant -1.000000e+30 : f32
      %190 = vector.broadcast %cst_86 : f32 to vector<24x128xf32>
      %191 = arith.select %189, %184, %190 : vector<24x128xi1>, vector<24x128xf32>
      %cst_87 = arith.constant dense<0xFF800000> : vector<24xf32>
      %192 = vector.multi_reduction <maximumf>, %191, %cst_87 [1] : vector<24x128xf32> to vector<24xf32>
      %193 = vector.shape_cast %192 : vector<24xf32> to vector<24x1xf32>
      %194 = vector.broadcast %193 : vector<24x1xf32> to vector<24x128xf32>
      %195 = arith.subf %191, %194 : vector<24x128xf32>
      %196 = math.exp %195 : vector<24x128xf32>
      %cst_88 = arith.constant dense<0.000000e+00> : vector<24xf32>
      %197 = vector.multi_reduction <add>, %196, %cst_88 [1] : vector<24x128xf32> to vector<24xf32>
      %198 = vector.shape_cast %197 : vector<24xf32> to vector<24x1xf32>
      %199 = math.log %198 : vector<24x1xf32>
      %200 = arith.addf %193, %199 : vector<24x1xf32>
      %201 = vector.broadcast %186 : vector<24x1xi32> to vector<24x128xi32>
      %202 = arith.cmpi eq, %201, %187 : vector<24x128xi32>
      %203 = arith.extui %202 : vector<24x128xi1> to vector<24x128xi32>
      %204 = arith.sitofp %203 : vector<24x128xi32> to vector<24x128xf32>
      %205 = arith.mulf %191, %204 : vector<24x128xf32>
      %cst_89 = arith.constant dense<0.000000e+00> : vector<24xf32>
      %206 = vector.multi_reduction <add>, %205, %cst_89 [1] : vector<24x128xf32> to vector<24xf32>
      %207 = vector.shape_cast %206 : vector<24xf32> to vector<24x1xf32>
      %c-100_i32 = arith.constant -100 : i32
      %208 = vector.broadcast %c-100_i32 : i32 to vector<24x1xi32>
      %209 = arith.cmpi ne, %186, %208 : vector<24x1xi32>
      %210 = arith.extui %209 : vector<24x1xi1> to vector<24x1xi32>
      %211 = arith.sitofp %210 : vector<24x1xi32> to vector<24x1xf32>
      %212 = arith.subf %200, %207 : vector<24x1xf32>
      %213 = arith.mulf %212, %211 : vector<24x1xf32>
      %cst_90 = arith.constant dense<0.000000e+00> : vector<1xf32>
      %214 = vector.multi_reduction <add>, %213, %cst_90 [0] : vector<24x1xf32> to vector<1xf32>
      %215 = vector.shape_cast %214 : vector<1xf32> to vector<1x1xf32>
      %cst_91 = arith.constant dense<0.000000e+00> : vector<1xf32>
      %216 = vector.multi_reduction <add>, %211, %cst_91 [0] : vector<24x1xf32> to vector<1xf32>
      %217 = vector.shape_cast %216 : vector<1xf32> to vector<1x1xf32>
      %cst_92 = arith.constant 1.000000e+00 : f32
      %218 = vector.broadcast %cst_92 : f32 to vector<1x1xf32>
      %219 = arith.maximumf %217, %218 : vector<1x1xf32>
      %220 = arith.divf %215, %219 : vector<1x1xf32>
      %c0_93 = arith.constant 0 : index
      %c0_94 = arith.constant 0 : index
      %221 = vector.load %arg25[%c0_93, %c0_94] : memref<1x1xf32, #tpu.memory_space<vmem>>, vector<1x1xf32>
      tpu.vector_store %arg25[%c0_93, %c0_94], %220 {strides = array<i32>} : memref<1x1xf32, #tpu.memory_space<vmem>>, vector<1x1xf32>,
    } else {
    }
    return
  }
  func.func @transform_0(%arg0: i32) -> (i32, i32) {
    %c0_i32 = arith.constant 0 : i32
    %c0_i32_0 = arith.constant 0 : i32
    %c0_i32_1 = arith.constant 0 : i32
    return %c0_i32, %c0_i32_0 : i32, i32
  }
  func.func @transform_1(%arg0: i32) -> (i32, i32) {
    %c0_i32 = arith.constant 0 : i32
    %c0_i32_0 = arith.constant 0 : i32
    %c0_i32_1 = arith.constant 0 : i32
    return %c0_i32, %c0_i32_0 : i32, i32
  }
  func.func @transform_2(%arg0: i32) -> (i32, i32) {
    %c0_i32 = arith.constant 0 : i32
    %c0_i32_0 = arith.constant 0 : i32
    %c0_i32_1 = arith.constant 0 : i32
    return %c0_i32, %c0_i32_0 : i32, i32
  }
  func.func @transform_3(%arg0: i32) -> (i32, i32) {
    %c0_i32 = arith.constant 0 : i32
    %c0_i32_0 = arith.constant 0 : i32
    %c0_i32_1 = arith.constant 0 : i32
    return %c0_i32, %c0_i32_0 : i32, i32
  }
  func.func @transform_4(%arg0: i32) -> (i32, i32) {
    %c0_i32 = arith.constant 0 : i32
    %c0_i32_0 = arith.constant 0 : i32
    %c0_i32_1 = arith.constant 0 : i32
    return %c0_i32, %c0_i32_0 : i32, i32
  }
  func.func @transform_5(%arg0: i32) -> (i32, i32) {
    %c0_i32 = arith.constant 0 : i32
    %c0_i32_0 = arith.constant 0 : i32
    %c0_i32_1 = arith.constant 0 : i32
    return %c0_i32, %c0_i32_0 : i32, i32
  }
  func.func @transform_6(%arg0: i32) -> (i32, i32) {
    %c0_i32 = arith.constant 0 : i32
    %c0_i32_0 = arith.constant 0 : i32
    %c0_i32_1 = arith.constant 0 : i32
    return %c0_i32, %c0_i32_0 : i32, i32
  }
  func.func @transform_7(%arg0: i32) -> (i32, i32) {
    %c0_i32 = arith.constant 0 : i32
    %c0_i32_0 = arith.constant 0 : i32
    %c0_i32_1 = arith.constant 0 : i32
    return %c0_i32, %c0_i32_0 : i32, i32
  }
  func.func @transform_8(%arg0: i32) -> (i32, i32, i32) {
    %c0_i32 = arith.constant 0 : i32
    %c0_i32_0 = arith.constant 0 : i32
    %c0_i32_1 = arith.constant 0 : i32
    return %arg0, %c0_i32, %c0_i32_0 : i32, i32, i32
  }
  func.func @transform_9(%arg0: i32) -> (i32, i32, i32) {
    %c0_i32 = arith.constant 0 : i32
    %c0_i32_0 = arith.constant 0 : i32
    %c0_i32_1 = arith.constant 0 : i32
    return %arg0, %c0_i32, %c0_i32_0 : i32, i32, i32
  }
  func.func @transform_10(%arg0: i32) -> (i32, i32, i32) {
    %c0_i32 = arith.constant 0 : i32
    %c0_i32_0 = arith.constant 0 : i32
    %c0_i32_1 = arith.constant 0 : i32
    return %arg0, %c0_i32, %c0_i32_0 : i32, i32, i32
  }
  func.func @transform_11(%arg0: i32) -> (i32, i32, i32) {
    %c0_i32 = arith.constant 0 : i32
    %c0_i32_0 = arith.constant 0 : i32
    %c0_i32_1 = arith.constant 0 : i32
    return %arg0, %c0_i32, %c0_i32_0 : i32, i32, i32
  }
  func.func @transform_12(%arg0: i32) -> (i32, i32, i32) {
    %c0_i32 = arith.constant 0 : i32
    %c0_i32_0 = arith.constant 0 : i32
    %c0_i32_1 = arith.constant 0 : i32
    return %arg0, %c0_i32, %c0_i32_0 : i32, i32, i32
  }
  func.func @transform_13(%arg0: i32) -> (i32, i32, i32) {
    %c0_i32 = arith.constant 0 : i32
    %c0_i32_0 = arith.constant 0 : i32
    %c0_i32_1 = arith.constant 0 : i32
    return %arg0, %c0_i32, %c0_i32_0 : i32, i32, i32
  }
  func.func @transform_14(%arg0: i32) -> (i32, i32, i32) {
    %c0_i32 = arith.constant 0 : i32
    %c0_i32_0 = arith.constant 0 : i32
    %c0_i32_1 = arith.constant 0 : i32
    return %arg0, %c0_i32, %c0_i32_0 : i32, i32, i32
  }
  func.func @transform_15(%arg0: i32) -> (i32, i32, i32) {
    %c0_i32 = arith.constant 0 : i32
    %c0_i32_0 = arith.constant 0 : i32
    %c0_i32_1 = arith.constant 0 : i32
    return %arg0, %c0_i32, %c0_i32_0 : i32, i32, i32
  }
  func.func @transform_16(%arg0: i32) -> (i32, i32, i32) {
    %c0_i32 = arith.constant 0 : i32
    %c0_i32_0 = arith.constant 0 : i32
    %c0_i32_1 = arith.constant 0 : i32
    return %arg0, %c0_i32, %c0_i32_0 : i32, i32, i32
  }
  func.func @transform_17(%arg0: i32) -> (i32, i32, i32) {
    %c0_i32 = arith.constant 0 : i32
    %c0_i32_0 = arith.constant 0 : i32
    %c0_i32_1 = arith.constant 0 : i32
    return %arg0, %c0_i32, %c0_i32_0 : i32, i32, i32
  }
  func.func @transform_18(%arg0: i32) -> (i32, i32, i32) {
    %c0_i32 = arith.constant 0 : i32
    %c0_i32_0 = arith.constant 0 : i32
    %c0_i32_1 = arith.constant 0 : i32
    return %arg0, %c0_i32, %c0_i32_0 : i32, i32, i32
  }
  func.func @transform_19(%arg0: i32) -> (i32, i32, i32) {
    %c0_i32 = arith.constant 0 : i32
    %c0_i32_0 = arith.constant 0 : i32
    %c0_i32_1 = arith.constant 0 : i32
    return %arg0, %c0_i32, %c0_i32_0 : i32, i32, i32
  }
  func.func @transform_20(%arg0: i32) -> (i32, i32) {
    %c0_i32 = arith.constant 0 : i32
    %c0_i32_0 = arith.constant 0 : i32
    %c0_i32_1 = arith.constant 0 : i32
    return %c0_i32, %c0_i32_0 : i32, i32
  }
  func.func @transform_21(%arg0: i32) -> (i32, i32) {
    %c0_i32 = arith.constant 0 : i32
    %c0_i32_0 = arith.constant 0 : i32
    %c0_i32_1 = arith.constant 0 : i32
    return %c0_i32, %c0_i32_0 : i32, i32
  }
  func.func @transform_22(%arg0: i32) -> (i32, i32) {
    %c0_i32 = arith.constant 0 : i32
    %c0_i32_0 = arith.constant 0 : i32
    %c0_i32_1 = arith.constant 0 : i32
    return %c0_i32, %c0_i32_0 : i32, i32
  }
  func.func @transform_23(%arg0: i32) -> (i32, i32) {
    %c0_i32 = arith.constant 0 : i32
    %c0_i32_0 = arith.constant 0 : i32
    %c0_i32_1 = arith.constant 0 : i32
    return %c0_i32, %c0_i32_0 : i32, i32
  }
  func.func @transform_24(%arg0: i32) -> (i32, i32) {
    %c0_i32 = arith.constant 0 : i32
    %c0_i32_0 = arith.constant 0 : i32
    %c0_i32_1 = arith.constant 0 : i32
    return %c0_i32, %c0_i32_0 : i32, i32
  }
}

</mosaic_0001>

<llo_original>
// kernel: eq.8
$region0: #{eq.8}
  %s0 = inlined_call_operand.vmem [shape: s32[4,12], index: 0, kind: input, shape index: {}]
  %s1 = inlined_call_operand.vmem [shape: s32[48], index: 1, kind: output, shape index: {}]
  $region1: #{eq.8} parent=0
    #allocation0 [shape = 'u8[4096]{0}', space=vmem, size = 0x1000, scoped, tag = 'scoped mem for output reshape']
    #allocation1 [shape = 'u8[4096]{0}', space=vmem, size = 0x1000, scoped, tag = 'scoped mem for input reshape']
    %s3 = sshllo.u32 0, 4
    %v4 = vld [vmem:[%s0] sm:%s3]
    %5 = vst [vmem:[#allocation1] sm:%s3] %v4
    %v6 = vld [vmem:[#allocation1] sm:$0x1]
    %vm7 = vcmask 97280
    %8 = vst.msk [vmem:[#allocation0] sm:$0x1] %vm7, %v6
    %s9 = scalar_lea.vmem [#allocation1], 3
    %v10 = vld [vmem:[%s9] sm:$0x1]
    %11 = vrot.lane.b32.xlu0 %v10, 36
    %v12 = vpop.permute.xlu0 %11
    %vm13 = vcmask 392480
    %14 = vst.msk [vmem:[#allocation0] sm:$0x1] %vm13, %v12
    %s15 = scalar_lea.vmem [#allocation1], 2
    %v16 = vld [vmem:[%s15] sm:$0x1]
    %17 = vrot.lane.b32.xlu0 %v16, 24
    %v18 = vpop.permute.xlu0 %17
    %vm19 = vcmask 294080
    %20 = vst.msk [vmem:[#allocation0] sm:$0x1] %vm19, %v18
    %s21 = scalar_lea.vmem [#allocation1], 1
    %v22 = vld [vmem:[%s21] sm:$0x1]
    %23 = vrot.lane.b32.xlu0 %v22, 12
    %v24 = vpop.permute.xlu0 %23
    %vm25 = vcmask 195680
    %26 = vst.msk [vmem:[#allocation0] sm:$0x1] %vm25, %v24
    %s28 = sshllo.u32 0, 1
    %v30 = vld [vmem:[#allocation0] sm:%s28]
    %s31 = sshllo.u32 0, 1
    %32 = vst [vmem:[%s1] sm:%s31] %v30

// kernel: clip_caption_forward.1
$region0: #{clip_caption_forward.1}
  #allocation0 [shape = 'u32[]', space=smem, size = 0x4, offset = 0x4, fixed_abs, tag = 'smem constant byte address 0x4 - core index']
  #allocation1 [shape = 'u32[144,128]{1,0:T(1,128)}', space=vmem, size = 0x12000, scoped, tag = 'internal scratch']
  #allocation2 [shape = 'bf16[2,12,32]{2,1,0:T(8,128)(2,1)}', space=vmem, size = 0x2000, scoped, tag = 'scratch operand']
  %s0 = inlined_call_operand.vmem [shape: s32[16,1], index: 0, kind: input, shape index: {}]
  %s1 = inlined_call_operand.vmem [shape: f32[2,16], index: 1, kind: input, shape index: {}]
  %s2 = inlined_call_operand.vmem [shape: bf16[16,128], index: 2, kind: input, shape index: {}]
  %s3 = inlined_call_operand.vmem [shape: f32[1,128], index: 3, kind: input, shape index: {}]
  %s4 = inlined_call_operand.vmem [shape: bf16[128,32], index: 4, kind: input, shape index: {}]
  %s5 = inlined_call_operand.vmem [shape: f32[12,32], index: 5, kind: input, shape index: {}]
  %s6 = inlined_call_operand.vmem [shape: f32[12,48], index: 6, kind: input, shape index: {}]
  %s7 = inlined_call_operand.vmem [shape: f32[48,32], index: 7, kind: input, shape index: {}]
  %s8 = inlined_call_operand.vmem [shape: f32[2,1,32], index: 8, kind: input, shape index: {}]
  %s9 = inlined_call_operand.vmem [shape: f32[2,1,32], index: 9, kind: input, shape index: {}]
  %s10 = inlined_call_operand.vmem [shape: bf16[2,32,96], index: 10, kind: input, shape index: {}]
  %s11 = inlined_call_operand.vmem [shape: f32[2,1,96], index: 11, kind: input, shape index: {}]
  %s12 = inlined_call_operand.vmem [shape: bf16[2,32,32], index: 12, kind: input, shape index: {}]
  %s13 = inlined_call_operand.vmem [shape: f32[2,1,32], index: 13, kind: input, shape index: {}]
  %s14 = inlined_call_operand.vmem [shape: f32[2,1,32], index: 14, kind: input, shape index: {}]
  %s15 = inlined_call_operand.vmem [shape: f32[2,1,32], index: 15, kind: input, shape index: {}]
  %s16 = inlined_call_operand.vmem [shape: bf16[2,32,128], index: 16, kind: input, shape index: {}]
  %s17 = inlined_call_operand.vmem [shape: f32[2,1,128], index: 17, kind: input, shape index: {}]
  %s18 = inlined_call_operand.vmem [shape: bf16[2,128,32], index: 18, kind: input, shape index: {}]
  %s19 = inlined_call_operand.vmem [shape: f32[2,1,32], index: 19, kind: input, shape index: {}]
  %s20 = inlined_call_operand.vmem [shape: f32[1,32], index: 20, kind: input, shape index: {}]
  %s21 = inlined_call_operand.vmem [shape: f32[1,32], index: 21, kind: input, shape index: {}]
  %s22 = inlined_call_operand.vmem [shape: s32[24,1], index: 22, kind: input, shape index: {}]
  %s23 = inlined_call_operand.vmem [shape: f32[24,128], index: 23, kind: output, shape index: {0}]
  %s24 = inlined_call_operand.hbm [shape: f32[1,1], index: 24, kind: output, shape index: {1}]
  %25 = xla_tuple %s23, %s24
  %s26 = sld [smem:[#allocation0]]
  $region141: #{clip_caption_forward.1} parent=0
    _
  %s28 = ssub.s32 1, %s26
  %s29 = scalar_select 0, %s28, %s26
  $region1: #{clip_caption_forward.1} parent=0
    #allocation3 [shape = 'u8[512]{0}', space=vmem, size = 0x400, scoped, tag = 'output window, operand 1, single buffered']
    #allocation4 [shape = 's32[2]{0}', space=sflag, size = 0x8, scoped, tag = 'scoped memory for clip_caption_forward.1']
    %30 = vsyncpa [#allocation4], 0
    loop: start=0, step=1, limit=4
    $region2: #{clip_caption_forward.1} parent=1 // loop_pre_header
      _
    $region3: #{clip_caption_forward.1} parent=1 // loop_header
      %s32 = sphi 0, %s36
      %p33 = scmp.ge.s32.totalorder %s32, 4
      %s40 = sphi 0, %s40
      %s42 = sphi 0, %s40
      %s43 = sphi 0, %s42
      %s57 = sphi 0, %s43
      %s61 = sphi 0, %s61
      %s63 = sphi 0, %s61
      %s64 = sphi 0, %s63
      %s78 = sphi 0, %s64
      %s82 = sphi 0, %s82
      %s84 = sphi 0, %s82
      %s85 = sphi 0, %s84
      %s99 = sphi 0, %s85
      %s103 = sphi 0, %s103
      %s105 = sphi 0, %s103
      %s106 = sphi 0, %s105
      %s120 = sphi 0, %s106
      %s124 = sphi 0, %s124
      %s126 = sphi 0, %s124
      %s127 = sphi 0, %s126
      %s141 = sphi 0, %s127
      %s145 = sphi 0, %s145
      %s147 = sphi 0, %s145
      %s148 = sphi 0, %s147
      %s162 = sphi 0, %s148
      %s166 = sphi 0, %s166
      %s168 = sphi 0, %s166
      %s169 = sphi 0, %s168
      %s183 = sphi 0, %s169
      %s187 = sphi 0, %s187
      %s189 = sphi 0, %s187
      %s190 = sphi 0, %s189
      %s204 = sphi 0, %s190
      %s210 = sphi 0, %s212
      %s213 = sphi 0, %s210
      %s214 = sphi 0, %s213
      %s230 = sphi 0, %s214
      %s236 = sphi 0, %s238
      %s239 = sphi 0, %s236
      %s240 = sphi 0, %s239
      %s256 = sphi 0, %s240
      %s262 = sphi 0, %s264
      %s265 = sphi 0, %s262
      %s266 = sphi 0, %s265
      %s282 = sphi 0, %s266
      %s288 = sphi 0, %s290
      %s291 = sphi 0, %s288
      %s292 = sphi 0, %s291
      %s308 = sphi 0, %s292
      %s314 = sphi 0, %s316
      %s317 = sphi 0, %s314
      %s318 = sphi 0, %s317
      %s334 = sphi 0, %s318
      %s340 = sphi 0, %s342
      %s343 = sphi 0, %s340
      %s344 = sphi 0, %s343
      %s360 = sphi 0, %s344
      %s366 = sphi 0, %s368
      %s369 = sphi 0, %s366
      %s370 = sphi 0, %s369
      %s386 = sphi 0, %s370
      %s392 = sphi 0, %s394
      %s395 = sphi 0, %s392
      %s396 = sphi 0, %s395
      %s412 = sphi 0, %s396
      %s418 = sphi 0, %s420
      %s421 = sphi 0, %s418
      %s422 = sphi 0, %s421
      %s438 = sphi 0, %s422
      %s444 = sphi 0, %s446
      %s447 = sphi 0, %s444
      %s448 = sphi 0, %s447
      %s464 = sphi 0, %s448
      %s470 = sphi 0, %s472
      %s473 = sphi 0, %s470
      %s474 = sphi 0, %s473
      %s490 = sphi 0, %s474
      %s496 = sphi 0, %s498
      %s499 = sphi 0, %s496
      %s500 = sphi 0, %s499
      %s516 = sphi 0, %s500
      %s520 = sphi 0, %s520
      %s522 = sphi 0, %s520
      %s523 = sphi 0, %s522
      %s537 = sphi 0, %s523
      %s541 = sphi 0, %s541
      %s543 = sphi 0, %s541
      %s544 = sphi 0, %s543
      %s558 = sphi 0, %s544
      %s562 = sphi 0, %s562
      %s564 = sphi 0, %s562
      %s565 = sphi 0, %s564
      %s579 = sphi 0, %s565
      %s583 = sphi 0, %s583
      %s585 = sphi 0, %s583
      %s586 = sphi 0, %s585
      %s600 = sphi 0, %s586
      %s604 = sphi 0, %s604
      %s606 = sphi 0, %s604
      %s607 = sphi 0, %s606
      %s621 = sphi 0, %s607
    $region4: #{clip_caption_forward.1} parent=1 // loop_header_branch
      %35 = sbr.rel (%p33) target = $region8
    $region5: #{clip_caption_forward.1} parent=1 // loop_body
      %s37 = ssub.s32 %s32, 1
      %s38 = ssub.s32 %s32, 2
      %s39 = sadd.s32 %s32, 1
      %s41 = sadd.s32 %s40, 1
      %p44 = scmp.eq.s32.totalorder %s32, 1
      %p45 = scmp.ne.s32.totalorder %s40, %s42
      %p46 = scmp.eq.s32.totalorder %s32, 0
      %p47 = por %p45, %p46
      %p48 = scmp.ne.s32.totalorder %s40, %s42
      %p49 = scmp.eq.s32.totalorder %s37, 1
      %p50 = por %p48, %p49
      %p51 = scmp.ne.s32.totalorder %s42, %s43
      %p52 = scmp.eq.s32.totalorder %s37, 0
      %p53 = por %p51, %p52
      %p54 = scmp.ne.s32.totalorder %s42, %s43
      %p55 = scmp.eq.s32.totalorder %s38, 1
      %p56 = por %p54, %p55
      %p58 = scmp.ne.s32.totalorder %s43, %s57
      %p59 = scmp.eq.s32.totalorder %s38, 0
      %p60 = por %p58, %p59
      %s62 = sadd.s32 %s61, 1
      %p65 = scmp.eq.s32.totalorder %s32, 1
      %p66 = scmp.ne.s32.totalorder %s61, %s63
      %p67 = scmp.eq.s32.totalorder %s32, 0
      %p68 = por %p66, %p67
      %p69 = scmp.ne.s32.totalorder %s61, %s63
      %p70 = scmp.eq.s32.totalorder %s37, 1
      %p71 = por %p69, %p70
      %p72 = scmp.ne.s32.totalorder %s63, %s64
      %p73 = scmp.eq.s32.totalorder %s37, 0
      %p74 = por %p72, %p73
      %p75 = scmp.ne.s32.totalorder %s63, %s64
      %p76 = scmp.eq.s32.totalorder %s38, 1
      %p77 = por %p75, %p76
      %p79 = scmp.ne.s32.totalorder %s64, %s78
      %p80 = scmp.eq.s32.totalorder %s38, 0
      %p81 = por %p79, %p80
      %s83 = sadd.s32 %s82, 1
      %p86 = scmp.eq.s32.totalorder %s32, 1
      %p87 = scmp.ne.s32.totalorder %s82, %s84
      %p88 = scmp.eq.s32.totalorder %s32, 0
      %p89 = por %p87, %p88
      %p90 = scmp.ne.s32.totalorder %s82, %s84
      %p91 = scmp.eq.s32.totalorder %s37, 1
      %p92 = por %p90, %p91
      %p93 = scmp.ne.s32.totalorder %s84, %s85
      %p94 = scmp.eq.s32.totalorder %s37, 0
      %p95 = por %p93, %p94
      %p96 = scmp.ne.s32.totalorder %s84, %s85
      %p97 = scmp.eq.s32.totalorder %s38, 1
      %p98 = por %p96, %p97
      %p100 = scmp.ne.s32.totalorder %s85, %s99
      %p101 = scmp.eq.s32.totalorder %s38, 0
      %p102 = por %p100, %p101
      %s104 = sadd.s32 %s103, 1
      %p107 = scmp.eq.s32.totalorder %s32, 1
      %p108 = scmp.ne.s32.totalorder %s103, %s105
      %p109 = scmp.eq.s32.totalorder %s32, 0
      %p110 = por %p108, %p109
      %p111 = scmp.ne.s32.totalorder %s103, %s105
      %p112 = scmp.eq.s32.totalorder %s37, 1
      %p113 = por %p111, %p112
      %p114 = scmp.ne.s32.totalorder %s105, %s106
      %p115 = scmp.eq.s32.totalorder %s37, 0
      %p116 = por %p114, %p115
      %p117 = scmp.ne.s32.totalorder %s105, %s106
      %p118 = scmp.eq.s32.totalorder %s38, 1
      %p119 = por %p117, %p118
      %p121 = scmp.ne.s32.totalorder %s106, %s120
      %p122 = scmp.eq.s32.totalorder %s38, 0
      %p123 = por %p121, %p122
      %s125 = sadd.s32 %s124, 1
      %p128 = scmp.eq.s32.totalorder %s32, 1
      %p129 = scmp.ne.s32.totalorder %s124, %s126
      %p130 = scmp.eq.s32.totalorder %s32, 0
      %p131 = por %p129, %p130
      %p132 = scmp.ne.s32.totalorder %s124, %s126
      %p133 = scmp.eq.s32.totalorder %s37, 1
      %p134 = por %p132, %p133
      %p135 = scmp.ne.s32.totalorder %s126, %s127
      %p136 = scmp.eq.s32.totalorder %s37, 0
      %p137 = por %p135, %p136
      %p138 = scmp.ne.s32.totalorder %s126, %s127
      %p139 = scmp.eq.s32.totalorder %s38, 1
      %p140 = por %p138, %p139
      %p142 = scmp.ne.s32.totalorder %s127, %s141
      %p143 = scmp.eq.s32.totalorder %s38, 0
      %p144 = por %p142, %p143
      %s146 = sadd.s32 %s145, 1
      %p149 = scmp.eq.s32.totalorder %s32, 1
      %p150 = scmp.ne.s32.totalorder %s145, %s147
      %p151 = scmp.eq.s32.totalorder %s32, 0
      %p152 = por %p150, %p151
      %p153 = scmp.ne.s32.totalorder %s145, %s147
      %p154 = scmp.eq.s32.totalorder %s37, 1
      %p155 = por %p153, %p154
      %p156 = scmp.ne.s32.totalorder %s147, %s148
      %p157 = scmp.eq.s32.totalorder %s37, 0
      %p158 = por %p156, %p157
      %p159 = scmp.ne.s32.totalorder %s147, %s148
      %p160 = scmp.eq.s32.totalorder %s38, 1
      %p161 = por %p159, %p160
      %p163 = scmp.ne.s32.totalorder %s148, %s162
      %p164 = scmp.eq.s32.totalorder %s38, 0
      %p165 = por %p163, %p164
      %s167 = sadd.s32 %s166, 1
      %p170 = scmp.eq.s32.totalorder %s32, 1
      %p171 = scmp.ne.s32.totalorder %s166, %s168
      %p172 = scmp.eq.s32.totalorder %s32, 0
      %p173 = por %p171, %p172
      %p174 = scmp.ne.s32.totalorder %s166, %s168
      %p175 = scmp.eq.s32.totalorder %s37, 1
      %p176 = por %p174, %p175
      %p177 = scmp.ne.s32.totalorder %s168, %s169
      %p178 = scmp.eq.s32.totalorder %s37, 0
      %p179 = por %p177, %p178
      %p180 = scmp.ne.s32.totalorder %s168, %s169
      %p181 = scmp.eq.s32.totalorder %s38, 1
      %p182 = por %p180, %p181
      %p184 = scmp.ne.s32.totalorder %s169, %s183
      %p185 = scmp.eq.s32.totalorder %s38, 0
      %p186 = por %p184, %p185
      %s188 = sadd.s32 %s187, 1
      %p191 = scmp.eq.s32.totalorder %s32, 1
      %p192 = scmp.ne.s32.totalorder %s187, %s189
      %p193 = scmp.eq.s32.totalorder %s32, 0
      %p194 = por %p192, %p193
      %p195 = scmp.ne.s32.totalorder %s187, %s189
      %p196 = scmp.eq.s32.totalorder %s37, 1
      %p197 = por %p195, %p196
      %p198 = scmp.ne.s32.totalorder %s189, %s190
      %p199 = scmp.eq.s32.totalorder %s37, 0
      %p200 = por %p198, %p199
      %p201 = scmp.ne.s32.totalorder %s189, %s190
      %p202 = scmp.eq.s32.totalorder %s38, 1
      %p203 = por %p201, %p202
      %p205 = scmp.ne.s32.totalorder %s190, %s204
      %p206 = scmp.eq.s32.totalorder %s38, 0
      %p207 = por %p205, %p206
      %s208 = ssub.s32 %s32, %s39
      %p209 = scmp.eq.s32.totalorder %s208, 0
      %s211 = sadd.s32 %s210, 1
      %s212 = scalar_select %p209, %s210, %s211
      %p215 = pneg %p209
      %p216 = scmp.eq.s32.totalorder %s32, 1
      %p217 = por %p215, %p216
      %p218 = scmp.ne.s32.totalorder %s210, %s213
      %p219 = scmp.eq.s32.totalorder %s32, 0
      %p220 = por %p218, %p219
      %p221 = scmp.ne.s32.totalorder %s210, %s213
      %p222 = scmp.eq.s32.totalorder %s37, 1
      %p223 = por %p221, %p222
      %p224 = scmp.ne.s32.totalorder %s213, %s214
      %p225 = scmp.eq.s32.totalorder %s37, 0
      %p226 = por %p224, %p225
      %p227 = scmp.ne.s32.totalorder %s213, %s214
      %p228 = scmp.eq.s32.totalorder %s38, 1
      %p229 = por %p227, %p228
      %p231 = scmp.ne.s32.totalorder %s214, %s230
      %p232 = scmp.eq.s32.totalorder %s38, 0
      %p233 = por %p231, %p232
      %s234 = ssub.s32 %s32, %s39
      %p235 = scmp.eq.s32.totalorder %s234, 0
      %s237 = sadd.s32 %s236, 1
      %s238 = scalar_select %p235, %s236, %s237
      %p241 = pneg %p235
      %p242 = scmp.eq.s32.totalorder %s32, 1
      %p243 = por %p241, %p242
      %p244 = scmp.ne.s32.totalorder %s236, %s239
      %p245 = scmp.eq.s32.totalorder %s32, 0
      %p246 = por %p244, %p245
      %p247 = scmp.ne.s32.totalorder %s236, %s239
      %p248 = scmp.eq.s32.totalorder %s37, 1
      %p249 = por %p247, %p248
      %p250 = scmp.ne.s32.totalorder %s239, %s240
      %p251 = scmp.eq.s32.totalorder %s37, 0
      %p252 = por %p250, %p251
      %p253 = scmp.ne.s32.totalorder %s239, %s240
      %p254 = scmp.eq.s32.totalorder %s38, 1
      %p255 = por %p253, %p254
      %p257 = scmp.ne.s32.totalorder %s240, %s256
      %p258 = scmp.eq.s32.totalorder %s38, 0
      %p259 = por %p257, %p258
      %s260 = ssub.s32 %s32, %s39
      %p261 = scmp.eq.s32.totalorder %s260, 0
      %s263 = sadd.s32 %s262, 1
      %s264 = scalar_select %p261, %s262, %s263
      %p267 = pneg %p261
      %p268 = scmp.eq.s32.totalorder %s32, 1
      %p269 = por %p267, %p268
      %p270 = scmp.ne.s32.totalorder %s262, %s265
      %p271 = scmp.eq.s32.totalorder %s32, 0
      %p272 = por %p270, %p271
      %p273 = scmp.ne.s32.totalorder %s262, %s265
      %p274 = scmp.eq.s32.totalorder %s37, 1
      %p275 = por %p273, %p274
      %p276 = scmp.ne.s32.totalorder %s265, %s266
      %p277 = scmp.eq.s32.totalorder %s37, 0
      %p278 = por %p276, %p277
      %p279 = scmp.ne.s32.totalorder %s265, %s266
      %p280 = scmp.eq.s32.totalorder %s38, 1
      %p281 = por %p279, %p280
      %p283 = scmp.ne.s32.totalorder %s266, %s282
      %p284 = scmp.eq.s32.totalorder %s38, 0
      %p285 = por %p283, %p284
      %s286 = ssub.s32 %s32, %s39
      %p287 = scmp.eq.s32.totalorder %s286, 0
      %s289 = sadd.s32 %s288, 1
      %s290 = scalar_select %p287, %s288, %s289
      %p293 = pneg %p287
      %p294 = scmp.eq.s32.totalorder %s32, 1
      %p295 = por %p293, %p294
      %p296 = scmp.ne.s32.totalorder %s288, %s291
      %p297 = scmp.eq.s32.totalorder %s32, 0
      %p298 = por %p296, %p297
      %p299 = scmp.ne.s32.totalorder %s288, %s291
      %p300 = scmp.eq.s32.totalorder %s37, 1
      %p301 = por %p299, %p300
      %p302 = scmp.ne.s32.totalorder %s291, %s292
      %p303 = scmp.eq.s32.totalorder %s37, 0
      %p304 = por %p302, %p303
      %p305 = scmp.ne.s32.totalorder %s291, %s292
      %p306 = scmp.eq.s32.totalorder %s38, 1
      %p307 = por %p305, %p306
      %p309 = scmp.ne.s32.totalorder %s292, %s308
      %p310 = scmp.eq.s32.totalorder %s38, 0
      %p311 = por %p309, %p310
      %s312 = ssub.s32 %s32, %s39
      %p313 = scmp.eq.s32.totalorder %s312, 0
      %s315 = sadd.s32 %s314, 1
      %s316 = scalar_select %p313, %s314, %s315
      %p319 = pneg %p313
      %p320 = scmp.eq.s32.totalorder %s32, 1
      %p321 = por %p319, %p320
      %p322 = scmp.ne.s32.totalorder %s314, %s317
      %p323 = scmp.eq.s32.totalorder %s32, 0
      %p324 = por %p322, %p323
      %p325 = scmp.ne.s32.totalorder %s314, %s317
      %p326 = scmp.eq.s32.totalorder %s37, 1
      %p327 = por %p325, %p326
      %p328 = scmp.ne.s32.totalorder %s317, %s318
      %p329 = scmp.eq.s32.totalorder %s37, 0
      %p330 = por %p328, %p329
      %p331 = scmp.ne.s32.totalorder %s317, %s318
      %p332 = scmp.eq.s32.totalorder %s38, 1
      %p333 = por %p331, %p332
      %p335 = scmp.ne.s32.totalorder %s318, %s334
      %p336 = scmp.eq.s32.totalorder %s38, 0
      %p337 = por %p335, %p336
      %s338 = ssub.s32 %s32, %s39
      %p339 = scmp.eq.s32.totalorder %s338, 0
      %s341 = sadd.s32 %s340, 1
      %s342 = scalar_select %p339, %s340, %s341
      %p345 = pneg %p339
      %p346 = scmp.eq.s32.totalorder %s32, 1
      %p347 = por %p345, %p346
      %p348 = scmp.ne.s32.totalorder %s340, %s343
      %p349 = scmp.eq.s32.totalorder %s32, 0
      %p350 = por %p348, %p349
      %p351 = scmp.ne.s32.totalorder %s340, %s343
      %p352 = scmp.eq.s32.totalorder %s37, 1
      %p353 = por %p351, %p352
      %p354 = scmp.ne.s32.totalorder %s343, %s344
      %p355 = scmp.eq.s32.totalorder %s37, 0
      %p356 = por %p354, %p355
      %p357 = scmp.ne.s32.totalorder %s343, %s344
      %p358 = scmp.eq.s32.totalorder %s38, 1
      %p359 = por %p357, %p358
      %p361 = scmp.ne.s32.totalorder %s344, %s360
      %p362 = scmp.eq.s32.totalorder %s38, 0
      %p363 = por %p361, %p362
      %s364 = ssub.s32 %s32, %s39
      %p365 = scmp.eq.s32.totalorder %s364, 0
      %s367 = sadd.s32 %s366, 1
      %s368 = scalar_select %p365, %s366, %s367
      %p371 = pneg %p365
      %p372 = scmp.eq.s32.totalorder %s32, 1
      %p373 = por %p371, %p372
      %p374 = scmp.ne.s32.totalorder %s366, %s369
      %p375 = scmp.eq.s32.totalorder %s32, 0
      %p376 = por %p374, %p375
      %p377 = scmp.ne.s32.totalorder %s366, %s369
      %p378 = scmp.eq.s32.totalorder %s37, 1
      %p379 = por %p377, %p378
      %p380 = scmp.ne.s32.totalorder %s369, %s370
      %p381 = scmp.eq.s32.totalorder %s37, 0
      %p382 = por %p380, %p381
      %p383 = scmp.ne.s32.totalorder %s369, %s370
      %p384 = scmp.eq.s32.totalorder %s38, 1
      %p385 = por %p383, %p384
      %p387 = scmp.ne.s32.totalorder %s370, %s386
      %p388 = scmp.eq.s32.totalorder %s38, 0
      %p389 = por %p387, %p388
      %s390 = ssub.s32 %s32, %s39
      %p391 = scmp.eq.s32.totalorder %s390, 0
      %s393 = sadd.s32 %s392, 1
      %s394 = scalar_select %p391, %s392, %s393
      %p397 = pneg %p391
      %p398 = scmp.eq.s32.totalorder %s32, 1
      %p399 = por %p397, %p398
      %p400 = scmp.ne.s32.totalorder %s392, %s395
      %p401 = scmp.eq.s32.totalorder %s32, 0
      %p402 = por %p400, %p401
      %p403 = scmp.ne.s32.totalorder %s392, %s395
      %p404 = scmp.eq.s32.totalorder %s37, 1
      %p405 = por %p403, %p404
      %p406 = scmp.ne.s32.totalorder %s395, %s396
      %p407 = scmp.eq.s32.totalorder %s37, 0
      %p408 = por %p406, %p407
      %p409 = scmp.ne.s32.totalorder %s395, %s396
      %p410 = scmp.eq.s32.totalorder %s38, 1
      %p411 = por %p409, %p410
      %p413 = scmp.ne.s32.totalorder %s396, %s412
      %p414 = scmp.eq.s32.totalorder %s38, 0
      %p415 = por %p413, %p414
      %s416 = ssub.s32 %s32, %s39
      %p417 = scmp.eq.s32.totalorder %s416, 0
      %s419 = sadd.s32 %s418, 1
      %s420 = scalar_select %p417, %s418, %s419
      %p423 = pneg %p417
      %p424 = scmp.eq.s32.totalorder %s32, 1
      %p425 = por %p423, %p424
      %p426 = scmp.ne.s32.totalorder %s418, %s421
      %p427 = scmp.eq.s32.totalorder %s32, 0
      %p428 = por %p426, %p427
      %p429 = scmp.ne.s32.totalorder %s418, %s421
      %p430 = scmp.eq.s32.totalorder %s37, 1
      %p431 = por %p429, %p430
      %p432 = scmp.ne.s32.totalorder %s421, %s422
      %p433 = scmp.eq.s32.totalorder %s37, 0
      %p434 = por %p432, %p433
      %p435 = scmp.ne.s32.totalorder %s421, %s422
      %p436 = scmp.eq.s32.totalorder %s38, 1
      %p437 = por %p435, %p436
      %p439 = scmp.ne.s32.totalorder %s422, %s438
      %p440 = scmp.eq.s32.totalorder %s38, 0
      %p441 = por %p439, %p440
      %s442 = ssub.s32 %s32, %s39
      %p443 = scmp.eq.s32.totalorder %s442, 0
      %s445 = sadd.s32 %s444, 1
      %s446 = scalar_select %p443, %s444, %s445
      %p449 = pneg %p443
      %p450 = scmp.eq.s32.totalorder %s32, 1
      %p451 = por %p449, %p450
      %p452 = scmp.ne.s32.totalorder %s444, %s447
      %p453 = scmp.eq.s32.totalorder %s32, 0
      %p454 = por %p452, %p453
      %p455 = scmp.ne.s32.totalorder %s444, %s447
      %p456 = scmp.eq.s32.totalorder %s37, 1
      %p457 = por %p455, %p456
      %p458 = scmp.ne.s32.totalorder %s447, %s448
      %p459 = scmp.eq.s32.totalorder %s37, 0
      %p460 = por %p458, %p459
      %p461 = scmp.ne.s32.totalorder %s447, %s448
      %p462 = scmp.eq.s32.totalorder %s38, 1
      %p463 = por %p461, %p462
      %p465 = scmp.ne.s32.totalorder %s448, %s464
      %p466 = scmp.eq.s32.totalorder %s38, 0
      %p467 = por %p465, %p466
      %s468 = ssub.s32 %s32, %s39
      %p469 = scmp.eq.s32.totalorder %s468, 0
      %s471 = sadd.s32 %s470, 1
      %s472 = scalar_select %p469, %s470, %s471
      %p475 = pneg %p469
      %p476 = scmp.eq.s32.totalorder %s32, 1
      %p477 = por %p475, %p476
      %p478 = scmp.ne.s32.totalorder %s470, %s473
      %p479 = scmp.eq.s32.totalorder %s32, 0
      %p480 = por %p478, %p479
      %p481 = scmp.ne.s32.totalorder %s470, %s473
      %p482 = scmp.eq.s32.totalorder %s37, 1
      %p483 = por %p481, %p482
      %p484 = scmp.ne.s32.totalorder %s473, %s474
      %p485 = scmp.eq.s32.totalorder %s37, 0
      %p486 = por %p484, %p485
      %p487 = scmp.ne.s32.totalorder %s473, %s474
      %p488 = scmp.eq.s32.totalorder %s38, 1
      %p489 = por %p487, %p488
      %p491 = scmp.ne.s32.totalorder %s474, %s490
      %p492 = scmp.eq.s32.totalorder %s38, 0
      %p493 = por %p491, %p492
      %s494 = ssub.s32 %s32, %s39
      %p495 = scmp.eq.s32.totalorder %s494, 0
      %s497 = sadd.s32 %s496, 1
      %s498 = scalar_select %p495, %s496, %s497
      %p501 = pneg %p495
      %p502 = scmp.eq.s32.totalorder %s32, 1
      %p503 = por %p501, %p502
      %p504 = scmp.ne.s32.totalorder %s496, %s499
      %p505 = scmp.eq.s32.totalorder %s32, 0
      %p506 = por %p504, %p505
      %p507 = scmp.ne.s32.totalorder %s496, %s499
      %p508 = scmp.eq.s32.totalorder %s37, 1
      %p509 = por %p507, %p508
      %p510 = scmp.ne.s32.totalorder %s499, %s500
      %p511 = scmp.eq.s32.totalorder %s37, 0
      %p512 = por %p510, %p511
      %p513 = scmp.ne.s32.totalorder %s499, %s500
      %p514 = scmp.eq.s32.totalorder %s38, 1
      %p515 = por %p513, %p514
      %p517 = scmp.ne.s32.totalorder %s500, %s516
      %p518 = scmp.eq.s32.totalorder %s38, 0
      %p519 = por %p517, %p518
      %s521 = sadd.s32 %s520, 1
      %p524 = scmp.eq.s32.totalorder %s32, 1
      %p525 = scmp.ne.s32.totalorder %s520, %s522
      %p526 = scmp.eq.s32.totalorder %s32, 0
      %p527 = por %p525, %p526
      %p528 = scmp.ne.s32.totalorder %s520, %s522
      %p529 = scmp.eq.s32.totalorder %s37, 1
      %p530 = por %p528, %p529
      %p531 = scmp.ne.s32.totalorder %s522, %s523
      %p532 = scmp.eq.s32.totalorder %s37, 0
      %p533 = por %p531, %p532
      %p534 = scmp.ne.s32.totalorder %s522, %s523
      %p535 = scmp.eq.s32.totalorder %s38, 1
      %p536 = por %p534, %p535
      %p538 = scmp.ne.s32.totalorder %s523, %s537
      %p539 = scmp.eq.s32.totalorder %s38, 0
      %p540 = por %p538, %p539
      %s542 = sadd.s32 %s541, 1
      %p545 = scmp.eq.s32.totalorder %s32, 1
      %p546 = scmp.ne.s32.totalorder %s541, %s543
      %p547 = scmp.eq.s32.totalorder %s32, 0
      %p548 = por %p546, %p547
      %p549 = scmp.ne.s32.totalorder %s541, %s543
      %p550 = scmp.eq.s32.totalorder %s37, 1
      %p551 = por %p549, %p550
      %p552 = scmp.ne.s32.totalorder %s543, %s544
      %p553 = scmp.eq.s32.totalorder %s37, 0
      %p554 = por %p552, %p553
      %p555 = scmp.ne.s32.totalorder %s543, %s544
      %p556 = scmp.eq.s32.totalorder %s38, 1
      %p557 = por %p555, %p556
      %p559 = scmp.ne.s32.totalorder %s544, %s558
      %p560 = scmp.eq.s32.totalorder %s38, 0
      %p561 = por %p559, %p560
      %s563 = sadd.s32 %s562, 1
      %p566 = scmp.eq.s32.totalorder %s32, 1
      %p567 = scmp.ne.s32.totalorder %s562, %s564
      %p568 = scmp.eq.s32.totalorder %s32, 0
      %p569 = por %p567, %p568
      %p570 = scmp.ne.s32.totalorder %s562, %s564
      %p571 = scmp.eq.s32.totalorder %s37, 1
      %p572 = por %p570, %p571
      %p573 = scmp.ne.s32.totalorder %s564, %s565
      %p574 = scmp.eq.s32.totalorder %s37, 0
      %p575 = por %p573, %p574
      %p576 = scmp.ne.s32.totalorder %s564, %s565
      %p577 = scmp.eq.s32.totalorder %s38, 1
      %p578 = por %p576, %p577
      %p580 = scmp.ne.s32.totalorder %s565, %s579
      %p581 = scmp.eq.s32.totalorder %s38, 0
      %p582 = por %p580, %p581
      %s584 = sadd.s32 %s583, 1
      %p587 = scmp.eq.s32.totalorder %s32, 1
      %p588 = scmp.ne.s32.totalorder %s583, %s585
      %p589 = scmp.eq.s32.totalorder %s32, 0
      %p590 = por %p588, %p589
      %p591 = scmp.ne.s32.totalorder %s583, %s585
      %p592 = scmp.eq.s32.totalorder %s37, 1
      %p593 = por %p591, %p592
      %p594 = scmp.ne.s32.totalorder %s585, %s586
      %p595 = scmp.eq.s32.totalorder %s37, 0
      %p596 = por %p594, %p595
      %p597 = scmp.ne.s32.totalorder %s585, %s586
      %p598 = scmp.eq.s32.totalorder %s38, 1
      %p599 = por %p597, %p598
      %p601 = scmp.ne.s32.totalorder %s586, %s600
      %p602 = scmp.eq.s32.totalorder %s38, 0
      %p603 = por %p601, %p602
      %s605 = sadd.s32 %s604, 1
      %p608 = scmp.eq.s32.totalorder %s32, 1
      %p609 = scmp.ne.s32.totalorder %s604, %s606
      %p610 = scmp.eq.s32.totalorder %s32, 0
      %p611 = por %p609, %p610
      %p612 = scmp.ne.s32.totalorder %s604, %s606
      %p613 = scmp.eq.s32.totalorder %s37, 1
      %p614 = por %p612, %p613
      %p615 = scmp.ne.s32.totalorder %s606, %s607
      %p616 = scmp.eq.s32.totalorder %s37, 0
      %p617 = por %p615, %p616
      %p618 = scmp.ne.s32.totalorder %s606, %s607
      %p619 = scmp.eq.s32.totalorder %s38, 1
      %p620 = por %p618, %p619
      %p622 = scmp.ne.s32.totalorder %s607, %s621
      %p623 = scmp.eq.s32.totalorder %s38, 0
      %p624 = por %p622, %p623
      %p625 = scmp.le.s32.totalorder 1, %s32
      %p626 = scmp.lt.s32.totalorder %s32, 3
      %p627 = pnand %p625, %p626
      %p628 = pneg %p627
      // Predicated region
      $region9: #{clip_caption_forward.1} parent=5 // pred_check
        _
      $region10: #{clip_caption_forward.1} parent=5 // pred_check_branch
        %630 = sbr.rel (%p627) target = $region12
      $region11: #{clip_caption_forward.1} parent=5 // pred_region
        %s631 = ssub.s32 %s32, 1
        // Predicated region
        $region13: #{clip_caption_forward.1} parent=11 // pred_check
          %p632 = pneg %p53
        $region14: #{clip_caption_forward.1} parent=11 // pred_check_branch
          %634 = sbr.rel (%p632) target = $region16
        $region15: #{clip_caption_forward.1} parent=11 // pred_region
          _
        $region16: #{clip_caption_forward.1} parent=11 // pred_fallthru
          _
        // Predicated region
        $region17: #{clip_caption_forward.1} parent=11 // pred_check
          %p635 = pneg %p74
        $region18: #{clip_caption_forward.1} parent=11 // pred_check_branch
          %637 = sbr.rel (%p635) target = $region20
        $region19: #{clip_caption_forward.1} parent=11 // pred_region
          _
        $region20: #{clip_caption_forward.1} parent=11 // pred_fallthru
          _
        // Predicated region
        $region21: #{clip_caption_forward.1} parent=11 // pred_check
          %p638 = pneg %p95
        $region22: #{clip_caption_forward.1} parent=11 // pred_check_branch
          %640 = sbr.rel (%p638) target = $region24
        $region23: #{clip_caption_forward.1} parent=11 // pred_region
          _
        $region24: #{clip_caption_forward.1} parent=11 // pred_fallthru
          _
        // Predicated region
        $region25: #{clip_caption_forward.1} parent=11 // pred_check
          %p641 = pneg %p116
        $region26: #{clip_caption_forward.1} parent=11 // pred_check_branch
          %643 = sbr.rel (%p641) target = $region28
        $region27: #{clip_caption_forward.1} parent=11 // pred_region
          _
        $region28: #{clip_caption_forward.1} parent=11 // pred_fallthru
          _
        // Predicated region
        $region29: #{clip_caption_forward.1} parent=11 // pred_check
          %p644 = pneg %p137
        $region30: #{clip_caption_forward.1} parent=11 // pred_check_branch
          %646 = sbr.rel (%p644) target = $region32
        $region31: #{clip_caption_forward.1} parent=11 // pred_region
          _
        $region32: #{clip_caption_forward.1} parent=11 // pred_fallthru
          _
        // Predicated region
        $region33: #{clip_caption_forward.1} parent=11 // pred_check
          %p647 = pneg %p158
        $region34: #{clip_caption_forward.1} parent=11 // pred_check_branch
          %649 = sbr.rel (%p647) target = $region36
        $region35: #{clip_caption_forward.1} parent=11 // pred_region
          _
        $region36: #{clip_caption_forward.1} parent=11 // pred_fallthru
          _
        // Predicated region
        $region37: #{clip_caption_forward.1} parent=11 // pred_check
          %p650 = pneg %p179
        $region38: #{clip_caption_forward.1} parent=11 // pred_check_branch
          %652 = sbr.rel (%p650) target = $region40
        $region39: #{clip_caption_forward.1} parent=11 // pred_region
          _
        $region40: #{clip_caption_forward.1} parent=11 // pred_fallthru
          _
        // Predicated region
        $region41: #{clip_caption_forward.1} parent=11 // pred_check
          %p653 = pneg %p200
        $region42: #{clip_caption_forward.1} parent=11 // pred_check_branch
          %655 = sbr.rel (%p653) target = $region44
        $region43: #{clip_caption_forward.1} parent=11 // pred_region
          _
        $region44: #{clip_caption_forward.1} parent=11 // pred_fallthru
          _
        // Predicated region
        $region45: #{clip_caption_forward.1} parent=11 // pred_check
          %p656 = pneg %p533
        $region46: #{clip_caption_forward.1} parent=11 // pred_check_branch
          %658 = sbr.rel (%p656) target = $region48
        $region47: #{clip_caption_forward.1} parent=11 // pred_region
          _
        $region48: #{clip_caption_forward.1} parent=11 // pred_fallthru
          _
        // Predicated region
        $region49: #{clip_caption_forward.1} parent=11 // pred_check
          %p659 = pneg %p554
        $region50: #{clip_caption_forward.1} parent=11 // pred_check_branch
          %661 = sbr.rel (%p659) target = $region52
        $region51: #{clip_caption_forward.1} parent=11 // pred_region
          _
        $region52: #{clip_caption_forward.1} parent=11 // pred_fallthru
          _
        // Predicated region
        $region53: #{clip_caption_forward.1} parent=11 // pred_check
          %p662 = pneg %p575
        $region54: #{clip_caption_forward.1} parent=11 // pred_check_branch
          %664 = sbr.rel (%p662) target = $region56
        $region55: #{clip_caption_forward.1} parent=11 // pred_region
          _
        $region56: #{clip_caption_forward.1} parent=11 // pred_fallthru
          _
      $region12: #{clip_caption_forward.1} parent=5 // pred_fallthru
        _
      %p665 = scmp.lt.s32.totalorder %s32, 2
      // Predicated region
      $region57: #{clip_caption_forward.1} parent=5 // pred_check
        %p666 = pneg %p665
      $region58: #{clip_caption_forward.1} parent=5 // pred_check_branch
        %668 = sbr.rel (%p666) target = $region60
      $region59: #{clip_caption_forward.1} parent=5 // pred_region
        // Predicated region
        $region61: #{clip_caption_forward.1} parent=59 // pred_check
          %p669 = pneg %p220
        $region62: #{clip_caption_forward.1} parent=59 // pred_check_branch
          %671 = sbr.rel (%p669) target = $region64
        $region63: #{clip_caption_forward.1} parent=59 // pred_region
          %p672 = scmp.lt.s32.totalorder %s32, 1
          %s673 = scalar_select %p672, %s32, 1
          %s674 = scalar_lea.vmem %s8, %s673
        $region64: #{clip_caption_forward.1} parent=59 // pred_fallthru
          _
        // Predicated region
        $region65: #{clip_caption_forward.1} parent=59 // pred_check
          %p675 = pneg %p246
        $region66: #{clip_caption_forward.1} parent=59 // pred_check_branch
          %677 = sbr.rel (%p675) target = $region68
        $region67: #{clip_caption_forward.1} parent=59 // pred_region
          %p678 = scmp.lt.s32.totalorder %s32, 1
          %s679 = scalar_select %p678, %s32, 1
          %s680 = scalar_lea.vmem %s9, %s679
        $region68: #{clip_caption_forward.1} parent=59 // pred_fallthru
          _
        // Predicated region
        $region69: #{clip_caption_forward.1} parent=59 // pred_check
          %p681 = pneg %p272
        $region70: #{clip_caption_forward.1} parent=59 // pred_check_branch
          %683 = sbr.rel (%p681) target = $region72
        $region71: #{clip_caption_forward.1} parent=59 // pred_region
          %p684 = scmp.lt.s32.totalorder %s32, 1
          %s685 = scalar_select %p684, %s32, 1
          %s686 = smul.addr %s685, 4
          %s687 = smul.addr %s686, 4
          %s688 = scalar_lea.vmem %s10, %s687
        $region72: #{clip_caption_forward.1} parent=59 // pred_fallthru
          _
        // Predicated region
        $region73: #{clip_caption_forward.1} parent=59 // pred_check
          %p689 = pneg %p298
        $region74: #{clip_caption_forward.1} parent=59 // pred_check_branch
          %691 = sbr.rel (%p689) target = $region76
        $region75: #{clip_caption_forward.1} parent=59 // pred_region
          %p692 = scmp.lt.s32.totalorder %s32, 1
          %s693 = scalar_select %p692, %s32, 1
          %s694 = scalar_lea.vmem %s11, %s693
        $region76: #{clip_caption_forward.1} parent=59 // pred_fallthru
          _
        // Predicated region
        $region77: #{clip_caption_forward.1} parent=59 // pred_check
          %p695 = pneg %p324
        $region78: #{clip_caption_forward.1} parent=59 // pred_check_branch
          %697 = sbr.rel (%p695) target = $region80
        $region79: #{clip_caption_forward.1} parent=59 // pred_region
          %p698 = scmp.lt.s32.totalorder %s32, 1
          %s699 = scalar_select %p698, %s32, 1
          %s700 = smul.addr %s699, 4
          %s701 = smul.addr %s700, 4
          %s702 = scalar_lea.vmem %s12, %s701
        $region80: #{clip_caption_forward.1} parent=59 // pred_fallthru
          _
        // Predicated region
        $region81: #{clip_caption_forward.1} parent=59 // pred_check
          %p703 = pneg %p350
        $region82: #{clip_caption_forward.1} parent=59 // pred_check_branch
          %705 = sbr.rel (%p703) target = $region84
        $region83: #{clip_caption_forward.1} parent=59 // pred_region
          %p706 = scmp.lt.s32.totalorder %s32, 1
          %s707 = scalar_select %p706, %s32, 1
          %s708 = scalar_lea.vmem %s13, %s707
        $region84: #{clip_caption_forward.1} parent=59 // pred_fallthru
          _
        // Predicated region
        $region85: #{clip_caption_forward.1} parent=59 // pred_check
          %p709 = pneg %p376
        $region86: #{clip_caption_forward.1} parent=59 // pred_check_branch
          %711 = sbr.rel (%p709) target = $region88
        $region87: #{clip_caption_forward.1} parent=59 // pred_region
          %p712 = scmp.lt.s32.totalorder %s32, 1
          %s713 = scalar_select %p712, %s32, 1
          %s714 = scalar_lea.vmem %s14, %s713
        $region88: #{clip_caption_forward.1} parent=59 // pred_fallthru
          _
        // Predicated region
        $region89: #{clip_caption_forward.1} parent=59 // pred_check
          %p715 = pneg %p402
        $region90: #{clip_caption_forward.1} parent=59 // pred_check_branch
          %717 = sbr.rel (%p715) target = $region92
        $region91: #{clip_caption_forward.1} parent=59 // pred_region
          %p718 = scmp.lt.s32.totalorder %s32, 1
          %s719 = scalar_select %p718, %s32, 1
          %s720 = scalar_lea.vmem %s15, %s719
        $region92: #{clip_caption_forward.1} parent=59 // pred_fallthru
          _
        // Predicated region
        $region93: #{clip_caption_forward.1} parent=59 // pred_check
          %p721 = pneg %p428
        $region94: #{clip_caption_forward.1} parent=59 // pred_check_branch
          %723 = sbr.rel (%p721) target = $region96
        $region95: #{clip_caption_forward.1} parent=59 // pred_region
          %p724 = scmp.lt.s32.totalorder %s32, 1
          %s725 = scalar_select %p724, %s32, 1
          %s726 = smul.addr %s725, 4
          %s727 = smul.addr %s726, 4
          %s728 = scalar_lea.vmem %s16, %s727
        $region96: #{clip_caption_forward.1} parent=59 // pred_fallthru
          _
        // Predicated region
        $region97: #{clip_caption_forward.1} parent=59 // pred_check
          %p729 = pneg %p454
        $region98: #{clip_caption_forward.1} parent=59 // pred_check_branch
          %731 = sbr.rel (%p729) target = $region100
        $region99: #{clip_caption_forward.1} parent=59 // pred_region
          %p732 = scmp.lt.s32.totalorder %s32, 1
          %s733 = scalar_select %p732, %s32, 1
          %s734 = scalar_lea.vmem %s17, %s733
        $region100: #{clip_caption_forward.1} parent=59 // pred_fallthru
          _
        // Predicated region
        $region101: #{clip_caption_forward.1} parent=59 // pred_check
          %p735 = pneg %p480
        $region102: #{clip_caption_forward.1} parent=59 // pred_check_branch
          %737 = sbr.rel (%p735) target = $region104
        $region103: #{clip_caption_forward.1} parent=59 // pred_region
          %p738 = scmp.lt.s32.totalorder %s32, 1
          %s739 = scalar_select %p738, %s32, 1
          %s740 = smul.addr %s739, 16
          %s741 = smul.addr %s740, 4
          %s742 = scalar_lea.vmem %s18, %s741
        $region104: #{clip_caption_forward.1} parent=59 // pred_fallthru
          _
        // Predicated region
        $region105: #{clip_caption_forward.1} parent=59 // pred_check
          %p743 = pneg %p506
        $region106: #{clip_caption_forward.1} parent=59 // pred_check_branch
          %745 = sbr.rel (%p743) target = $region108
        $region107: #{clip_caption_forward.1} parent=59 // pred_region
          %p746 = scmp.lt.s32.totalorder %s32, 1
          %s747 = scalar_select %p746, %s32, 1
          %s748 = scalar_lea.vmem %s19, %s747
        $region108: #{clip_caption_forward.1} parent=59 // pred_fallthru
          _
      $region60: #{clip_caption_forward.1} parent=5 // pred_fallthru
        _
      %p749 = scmp.le.s32.totalorder 1, %s32
      %p750 = scmp.lt.s32.totalorder %s32, 3
      %p751 = pnand %p749, %p750
      %p752 = pneg %p751
      // Predicated region
      $region109: #{clip_caption_forward.1} parent=5 // pred_check
        _
      $region110: #{clip_caption_forward.1} parent=5 // pred_check_branch
        %754 = sbr.rel (%p751) target = $region112
      $region111: #{clip_caption_forward.1} parent=5 // pred_region
        %s755 = ssub.s32 %s32, 1
        %p756 = pneg %p53
        %p757 = pneg %p50
        %p758 = pneg %p74
        %p759 = pneg %p71
        %p760 = pneg %p95
        %p761 = pneg %p92
        %p762 = pneg %p116
        %p763 = pneg %p113
        %p764 = pneg %p137
        %p765 = pneg %p134
        %p766 = pneg %p158
        %p767 = pneg %p155
        %p768 = pneg %p179
        %p769 = pneg %p176
        %p770 = pneg %p200
        %p771 = pneg %p197
        %p772 = scmp.lt.s32.totalorder %s37, 1
        %s773 = scalar_select %p772, %s37, 1
        %s774 = scalar_lea.vmem %s8, %s773
        %p775 = pneg %p226
        %p776 = pneg %p223
        %p777 = scmp.lt.s32.totalorder %s37, 1
        %s778 = scalar_select %p777, %s37, 1
        %s779 = scalar_lea.vmem %s9, %s778
        %p780 = pneg %p252
        %p781 = pneg %p249
        %p782 = scmp.lt.s32.totalorder %s37, 1
        %s783 = scalar_select %p782, %s37, 1
        %s784 = smul.addr %s783, 4
        %s785 = smul.addr %s784, 4
        %s786 = scalar_lea.vmem %s10, %s785
        %p787 = pneg %p278
        %p788 = pneg %p275
        %p789 = scmp.lt.s32.totalorder %s37, 1
        %s790 = scalar_select %p789, %s37, 1
        %s791 = scalar_lea.vmem %s11, %s790
        %p792 = pneg %p304
        %p793 = pneg %p301
        %p794 = scmp.lt.s32.totalorder %s37, 1
        %s795 = scalar_select %p794, %s37, 1
        %s796 = smul.addr %s795, 4
        %s797 = smul.addr %s796, 4
        %s798 = scalar_lea.vmem %s12, %s797
        %p799 = pneg %p330
        %p800 = pneg %p327
        %p801 = scmp.lt.s32.totalorder %s37, 1
        %s802 = scalar_select %p801, %s37, 1
        %s803 = scalar_lea.vmem %s13, %s802
        %p804 = pneg %p356
        %p805 = pneg %p353
        %p806 = scmp.lt.s32.totalorder %s37, 1
        %s807 = scalar_select %p806, %s37, 1
        %s808 = scalar_lea.vmem %s14, %s807
        %p809 = pneg %p382
        %p810 = pneg %p379
        %p811 = scmp.lt.s32.totalorder %s37, 1
        %s812 = scalar_select %p811, %s37, 1
        %s813 = scalar_lea.vmem %s15, %s812
        %p814 = pneg %p408
        %p815 = pneg %p405
        %p816 = scmp.lt.s32.totalorder %s37, 1
        %s817 = scalar_select %p816, %s37, 1
        %s818 = smul.addr %s817, 4
        %s819 = smul.addr %s818, 4
        %s820 = scalar_lea.vmem %s16, %s819
        %p821 = pneg %p434
        %p822 = pneg %p431
        %p823 = scmp.lt.s32.totalorder %s37, 1
        %s824 = scalar_select %p823, %s37, 1
        %s825 = scalar_lea.vmem %s17, %s824
        %p826 = pneg %p460
        %p827 = pneg %p457
        %p828 = scmp.lt.s32.totalorder %s37, 1
        %s829 = scalar_select %p828, %s37, 1
        %s830 = smul.addr %s829, 16
        %s831 = smul.addr %s830, 4
        %s832 = scalar_lea.vmem %s18, %s831
        %p833 = pneg %p486
        %p834 = pneg %p483
        %p835 = scmp.lt.s32.totalorder %s37, 1
        %s836 = scalar_select %p835, %s37, 1
        %s837 = scalar_lea.vmem %s19, %s836
        %p838 = pneg %p512
        %p839 = pneg %p509
        %p840 = pneg %p533
        %p841 = pneg %p530
        %p842 = pneg %p554
        %p843 = pneg %p551
        %p844 = pneg %p575
        %p845 = pneg %p572
        %p846 = pneg %p596
        %p847 = pneg %p593
        %p848 = pneg %p617
        %p849 = pneg %p614
        %p850 = scmp.lt.s32.totalorder %s37, 1
        %s851 = scalar_select %p850, %s37, 1
        %s852 = scalar_lea.vmem %s8, %s851
        %p853 = scmp.lt.s32.totalorder %s37, 1
        %s854 = scalar_select %p853, %s37, 1
        %s855 = scalar_lea.vmem %s9, %s854
        %p856 = scmp.lt.s32.totalorder %s37, 1
        %s857 = scalar_select %p856, %s37, 1
        %s858 = smul.addr %s857, 4
        %s859 = smul.addr %s858, 4
        %s860 = scalar_lea.vmem %s10, %s859
        %p861 = scmp.lt.s32.totalorder %s37, 1
        %s862 = scalar_select %p861, %s37, 1
        %s863 = scalar_lea.vmem %s11, %s862
        %p864 = scmp.lt.s32.totalorder %s37, 1
        %s865 = scalar_select %p864, %s37, 1
        %s866 = smul.addr %s865, 4
        %s867 = smul.addr %s866, 4
        %s868 = scalar_lea.vmem %s12, %s867
        %p869 = scmp.lt.s32.totalorder %s37, 1
        %s870 = scalar_select %p869, %s37, 1
        %s871 = scalar_lea.vmem %s13, %s870
        %p872 = scmp.lt.s32.totalorder %s37, 1
        %s873 = scalar_select %p872, %s37, 1
        %s874 = scalar_lea.vmem %s14, %s873
        %p875 = scmp.lt.s32.totalorder %s37, 1
        %s876 = scalar_select %p875, %s37, 1
        %s877 = scalar_lea.vmem %s15, %s876
        %p878 = scmp.lt.s32.totalorder %s37, 1
        %s879 = scalar_select %p878, %s37, 1
        %s880 = smul.addr %s879, 4
        %s881 = smul.addr %s880, 4
        %s882 = scalar_lea.vmem %s16, %s881
        %p883 = scmp.lt.s32.totalorder %s37, 1
        %s884 = scalar_select %p883, %s37, 1
        %s885 = scalar_lea.vmem %s17, %s884
        %p886 = scmp.lt.s32.totalorder %s37, 1
        %s887 = scalar_select %p886, %s37, 1
        %s888 = smul.addr %s887, 16
        %s889 = smul.addr %s888, 4
        %s890 = scalar_lea.vmem %s18, %s889
        %p891 = scmp.lt.s32.totalorder %s37, 1
        %s892 = scalar_select %p891, %s37, 1
        %s893 = scalar_lea.vmem %s19, %s892
        %p895 = scmp.eq.s32.totalorder %s37, 0
        // Predicated region
        $region113: #{clip_caption_forward.1} parent=111 // pred_check
          %p896 = pneg %p895
        $region114: #{clip_caption_forward.1} parent=111 // pred_check_branch
          %898 = sbr.rel (%p896) target = $region116
        $region115: #{clip_caption_forward.1} parent=111 // pred_region
          %v899 = vld [vmem:[%s1] sm:$0x3]
          %v900 = vld [vmem:[%s2] sm:$0xf]
          %v901 = vld [vmem:[%s2 + $0x4] sm:$0xf]
          %v902 = vpack.c.bf16 %v899, %v899
          %v903 = vld [vmem:[%s3] sm:$0x1]
          %v905 = vlaneseq
          %v906 = vshrl.u32 %v905, 7
          %v907 = vsub.s32 0, %v906
          %v908 = vrot.slane %v903, %v907
          %v912 = vunpack.c.l.b16 %v900
          %v913 = vunpack.c.l.b16 %v901
          %v914 = vpack.c.b16 %v913, %v912
          %vm916 = vcmask 130048
          %v918 = vsel %vm916, %v902, 0
          %920 = vmatprep.subr.bf16.mxu0 0
          %921 = vmatpush1.bf16.msra.mxu0 %v914
          %922 = vmatprep.subr.bf16.mxu0 0
          %923 = vmatpush1.bf16.msra.mxu0 0
          %924 = vmatprep.subr.bf16.mxu0 0
          %925 = vmatpush1.bf16.msra.mxu0 0
          %926 = vmatprep.subr.bf16.mxu0 0
          %927 = vmatpush1.bf16.msra.mxu0 0
          %928 = vmatprep.subr.bf16.mxu0 0
          %929 = vmatpush1.bf16.msra.mxu0 0
          %930 = vmatprep.subr.bf16.mxu0 0
          %931 = vmatpush1.bf16.msra.mxu0 0
          %932 = vmatprep.subr.bf16.mxu0 0
          %933 = vmatpush1.bf16.msra.mxu0 0
          %934 = vmatprep.subr.bf16.mxu0 0
          %935 = vmatpush1.bf16.msra.mxu0 0
          %936 = vmatprep.subr.bf16.mxu0 0
          %937 = vmatpush1.bf16.msra.mxu0 0
          %938 = vmatprep.subr.bf16.mxu0 0
          %939 = vmatpush1.bf16.msra.mxu0 0
          %940 = vmatprep.subr.bf16.mxu0 0
          %941 = vmatpush1.bf16.msra.mxu0 0
          %942 = vmatprep.subr.bf16.mxu0 0
          %943 = vmatpush1.bf16.msra.mxu0 0
          %944 = vmatprep.subr.bf16.mxu0 0
          %945 = vmatpush1.bf16.msra.mxu0 0
          %946 = vmatprep.subr.bf16.mxu0 0
          %947 = vmatpush1.bf16.msra.mxu0 0
          %948 = vmatprep.subr.bf16.mxu0 0
          %949 = vmatpush1.bf16.msra.mxu0 0
          %950 = vmatprep.subr.bf16.mxu0 0
          %951 = vmatpush1.bf16.msra.mxu0 0
          %952 = vmatprep.mubr.bf16.mxu0 0
          %953 = vmatmul.mubr.bf16.gmra.mrb[0].mxu0 %v918
          %v954 = vpop.f32.mrb[0].mxu0
          %v955 = vadd.f32 %v908, %v954
          %v956 = vpop.f32.mrb[0].mxu0
          %v957 = vpop.f32.mrb[0].mxu0
          %v958 = vpop.f32.mrb[0].mxu0
          %959 = vdwg.mxu0
          %v960 = vtanh.pop %v955
          %962 = vrot.lane.b32.xlu0 %v960, 96
          %v963 = vpop.permute.xlu0 %962
          %965 = vrot.lane.b32.xlu0 %v960, 64
          %v966 = vpop.permute.xlu0 %965
          %968 = vrot.lane.b32.xlu0 %v960, 32
          %v969 = vpop.permute.xlu0 %968
          %v971 = vcombine.low %v960, %v966
          %v973 = vunpack.c.l.s4 1983009808
          %v974 = vunpack.c.0.s8 %v973
          %v975 = vlaneseq
          %v976 = vshrl.u32 %v975, 7
          %v977 = vsub.s32 %v974, %v976
          %v978 = vrot.slane %v971, %v977
          %v979 = vcombine.low %v963, %v969
          %v981 = vunpack.c.l.s4 1983009808
          %v982 = vunpack.c.0.s8 %v981
          %v983 = vlaneseq
          %v984 = vshrl.u32 %v983, 7
          %v985 = vsub.s32 %v982, %v984
          %v986 = vrot.slane %v979, %v985
          %v987 = vcombine.low %v978, %v986
          %v989 = vunpack.c.l.s4 1934713408
          %v990 = vunpack.c.0.s8 %v989
          %v991 = vlaneseq
          %v992 = vshrl.u32 %v991, 7
          %v993 = vsub.s32 %v990, %v992
          %v994 = vrot.slane %v987, %v993
          %v995 = vcombine.high %v994, 0.0
          %v996 = vld [vmem:[%s0] sm:$0xff]
          %v997 = vld [vmem:[%s0 + $0x8] sm:$0xff]
          %v998 = vlaneseq
          %v999 = vand.u32 %v998, 127
          %1000 = vset.pattern.permute.xlu0 0
          %1001 = vperm.xlu0 %1000, %v996
          %v1002 = vpop.permute.xlu0 %1001
          %1003 = vset.pattern.permute.xlu0 0
          %1004 = vperm.xlu0 %1003, %v997
          %v1005 = vpop.permute.xlu0 %1004
          %vm1006 = vcmp.eq.s32.totalorder %v1002, %v999
          %vm1007 = vcmp.eq.s32.totalorder %v1005, %v999
          %v1008 = vld [vmem:[%s4] sm:$0xf]
          %v1009 = vld [vmem:[%s4 + $0x4] sm:$0xf]
          %v1010 = vld [vmem:[%s4 + $0x8] sm:$0xf]
          %v1011 = vld [vmem:[%s4 + $0xc] sm:$0xf]
          %v1012 = vld [vmem:[%s4 + $0x10] sm:$0xf]
          %v1013 = vld [vmem:[%s4 + $0x14] sm:$0xf]
          %v1014 = vld [vmem:[%s4 + $0x18] sm:$0xf]
          %v1015 = vld [vmem:[%s4 + $0x1c] sm:$0xf]
          %v1016 = vld [vmem:[%s4 + $0x20] sm:$0xf]
          %v1017 = vld [vmem:[%s4 + $0x24] sm:$0xf]
          %v1018 = vld [vmem:[%s4 + $0x28] sm:$0xf]
          %v1019 = vld [vmem:[%s4 + $0x2c] sm:$0xf]
          %v1020 = vld [vmem:[%s4 + $0x30] sm:$0xf]
          %v1021 = vld [vmem:[%s4 + $0x34] sm:$0xf]
          %v1022 = vld [vmem:[%s4 + $0x38] sm:$0xf]
          %v1023 = vld [vmem:[%s4 + $0x3c] sm:$0xf]
          %v1024 = vsel %vm1006, 1, 0
          %v1025 = vsel %vm1007, 1, 0
          %v1026 = vcvt.s32.f32 %v1024
          %v1027 = vcvt.s32.f32 %v1025
          %v1028 = vpack.c.bf16 %v1027, %v1026
          %v1045 = vunpack.c.l.b16 %v1008
          %v1046 = vunpack.c.l.b16 %v1009
          %v1047 = vunpack.c.l.b16 %v1010
          %v1048 = vunpack.c.l.b16 %v1011
          %v1049 = vunpack.c.l.b16 %v1012
          %v1050 = vunpack.c.l.b16 %v1013
          %v1051 = vunpack.c.l.b16 %v1014
          %v1052 = vunpack.c.l.b16 %v1015
          %v1053 = vunpack.c.l.b16 %v1016
          %v1054 = vunpack.c.l.b16 %v1017
          %v1055 = vunpack.c.l.b16 %v1018
          %v1056 = vunpack.c.l.b16 %v1019
          %v1057 = vunpack.c.l.b16 %v1020
          %v1058 = vunpack.c.l.b16 %v1021
          %v1059 = vunpack.c.l.b16 %v1022
          %v1060 = vunpack.c.l.b16 %v1023
          %v1061 = vpack.c.b16 %v1046, %v1045
          %v1062 = vpack.c.b16 %v1048, %v1047
          %v1063 = vpack.c.b16 %v1050, %v1049
          %v1064 = vpack.c.b16 %v1052, %v1051
          %v1065 = vpack.c.b16 %v1054, %v1053
          %v1066 = vpack.c.b16 %v1056, %v1055
          %v1067 = vpack.c.b16 %v1058, %v1057
          %v1068 = vpack.c.b16 %v1060, %v1059
          %1077 = vmatprep.subr.bf16.mxu0 0
          %1078 = vmatpush1.bf16.msra.mxu0 %v1061
          %1079 = vmatprep.subr.bf16.mxu0 0
          %1080 = vmatpush1.bf16.msra.mxu0 %v1062
          %1081 = vmatprep.subr.bf16.mxu0 0
          %1082 = vmatpush1.bf16.msra.mxu0 %v1063
          %1083 = vmatprep.subr.bf16.mxu0 0
          %1084 = vmatpush1.bf16.msra.mxu0 %v1064
          %1085 = vmatprep.subr.bf16.mxu0 0
          %1086 = vmatpush1.bf16.msra.mxu0 %v1065
          %1087 = vmatprep.subr.bf16.mxu0 0
          %1088 = vmatpush1.bf16.msra.mxu0 %v1066
          %1089 = vmatprep.subr.bf16.mxu0 0
          %1090 = vmatpush1.bf16.msra.mxu0 %v1067
          %1091 = vmatprep.subr.bf16.mxu0 0
          %1092 = vmatpush1.bf16.msra.mxu0 %v1068
          %1093 = vmatprep.subr.bf16.mxu0 0
          %1094 = vmatpush1.bf16.msra.mxu0 0
          %1095 = vmatprep.subr.bf16.mxu0 0
          %1096 = vmatpush1.bf16.msra.mxu0 0
          %1097 = vmatprep.subr.bf16.mxu0 0
          %1098 = vmatpush1.bf16.msra.mxu0 0
          %1099 = vmatprep.subr.bf16.mxu0 0
          %1100 = vmatpush1.bf16.msra.mxu0 0
          %1101 = vmatprep.subr.bf16.mxu0 0
          %1102 = vmatpush1.bf16.msra.mxu0 0
          %1103 = vmatprep.subr.bf16.mxu0 0
          %1104 = vmatpush1.bf16.msra.mxu0 0
          %1105 = vmatprep.subr.bf16.mxu0 0
          %1106 = vmatpush1.bf16.msra.mxu0 0
          %1107 = vmatprep.subr.bf16.mxu0 0
          %1108 = vmatpush1.bf16.msra.mxu0 0
          %1109 = vmatprep.mubr.bf16.mxu0 0
          %1110 = vmatmul.mubr.bf16.gmra.mrb[0].mxu0 %v1028
          %v1111 = vpop.f32.mrb[0].mxu0
          %v1112 = vadd.f32 0.0, %v1111
          %v1113 = vpop.f32.mrb[0].mxu0
          %v1114 = vpop.f32.mrb[0].mxu0
          %v1115 = vadd.f32 0.0, %v1114
          %v1116 = vpop.f32.mrb[0].mxu0
          %1117 = vdwg.mxu0
          %v1120 = vrot.slane %v1112, 4
          %v1121 = vrot.slane %v1115, 4
          %vm1124 = vcmask 1043456
          %v1125 = vsel %vm1124, %v994, %v1120
          %v1126 = vsel %vm1124, %v995, %v1121
          %v1127 = vld [vmem:[%s5] sm:$0xff]
          %v1128 = vld [vmem:[%s5 + $0x8] sm:$0xf]
          %v1129 = vadd.f32 %v1125, %v1127
          %v1130 = vadd.f32 %v1120, %v1128
          %v1131 = vadd.f32 %v1126, %v1127
          %v1132 = vadd.f32 %v1121, %v1128
          %v1133 = vpack.c.bf16 %v1130, %v1129
          %v1134 = vpack.c.bf16 %v1132, %v1131
          %v1137 = vunpack.c.l.b16 %v1133
          %v1138 = vunpack.c.h.b16 %v1133
          %v1139 = vunpack.c.l.b16 %v1134
          %v1140 = vunpack.c.h.b16 %v1134
          %v1141 = vpack.c.b16 %v1137, %v1137
          %v1142 = vpack.c.b16 %v1138, %v1138
          %v1143 = vpack.c.b16 %v1139, %v1139
          %v1144 = vpack.c.b16 %v1140, %v1140
          %vm1149 = vcmask 257024
          %1150 = vst.msk [vmem:[#allocation2] sm:$0xf] %vm1149, %v1141
          %vm1151 = vcmask 254976
          %1152 = vst.msk [vmem:[#allocation2 + $0x4] sm:$0x3] %vm1151, %v1142
          %1153 = vst.msk [vmem:[#allocation2 + $0x8] sm:$0xf] %vm1149, %v1143
          %1154 = vst.msk [vmem:[#allocation2 + $0xc] sm:$0x3] %vm1151, %v1144
        $region116: #{clip_caption_forward.1} parent=111 // pred_fallthru
          _
        %v1155 = vld [vmem:[#allocation2] sm:$0xf]
        %v1156 = vld [vmem:[#allocation2 + $0x4] sm:$0x3]
        %v1157 = vld [vmem:[#allocation2 + $0x8] sm:$0xf]
        %v1158 = vld [vmem:[#allocation2 + $0xc] sm:$0x3]
        %v1159 = vunpack.c.l.bf16 %v1155
        %v1160 = vunpack.c.l.bf16 %v1156
        %v1161 = vunpack.c.l.bf16 %v1157
        %v1162 = vunpack.c.l.bf16 %v1158
        %v1163 = vld [vmem:[%s852] sm:$0x1]
        %v1164 = vld [vmem:[%s855] sm:$0x1]
        %vm1165 = vcmask 261120
        %v1166 = vsel %vm1165, %v1159, 0.0
        %1167 = vadd.xlane.f32.xlu0 %v1166
        %v1168 = vpop.xlane.xlu0 %1167
        %vm1169 = vcmask 257024
        %v1170 = vsel %vm1169, %v1160, 0.0
        %1171 = vadd.xlane.f32.xlu0 %v1170
        %v1172 = vpop.xlane.xlu0 %1171
        %v1173 = vsel %vm1165, %v1161, 0.0
        %1174 = vadd.xlane.f32.xlu0 %v1173
        %v1175 = vpop.xlane.xlu0 %1174
        %v1176 = vsel %vm1169, %v1162, 0.0
        %1177 = vadd.xlane.f32.xlu0 %v1176
        %v1178 = vpop.xlane.xlu0 %1177
        %v1179 = vrcp.pop 32.0
        %v1180 = vmul.f32 %v1168, %v1179
        %v1181 = vmul.f32 %v1172, %v1179
        %v1182 = vmul.f32 %v1175, %v1179
        %v1183 = vmul.f32 %v1178, %v1179
        %v1184 = vsub.f32 %v1159, %v1180
        %v1185 = vsub.f32 %v1160, %v1181
        %v1186 = vsub.f32 %v1161, %v1182
        %v1187 = vsub.f32 %v1162, %v1183
        %v1188 = vmul.f32 %v1184, %v1184
        %v1189 = vmul.f32 %v1185, %v1185
        %v1190 = vmul.f32 %v1186, %v1186
        %v1191 = vmul.f32 %v1187, %v1187
        %v1192 = vsel %vm1165, %v1188, 0.0
        %1193 = vadd.xlane.f32.xlu0 %v1192
        %v1194 = vpop.xlane.xlu0 %1193
        %v1195 = vsel %vm1169, %v1189, 0.0
        %1196 = vadd.xlane.f32.xlu0 %v1195
        %v1197 = vpop.xlane.xlu0 %1196
        %v1198 = vsel %vm1165, %v1190, 0.0
        %1199 = vadd.xlane.f32.xlu0 %v1198
        %v1200 = vpop.xlane.xlu0 %1199
        %v1201 = vsel %vm1169, %v1191, 0.0
        %1202 = vadd.xlane.f32.xlu0 %v1201
        %v1203 = vpop.xlane.xlu0 %1202
        %v1204 = vmul.f32 %v1194, %v1179
        %v1205 = vmul.f32 %v1197, %v1179
        %v1206 = vmul.f32 %v1200, %v1179
        %v1207 = vmul.f32 %v1203, %v1179
        %v1208 = vadd.f32 %v1204, 1e-05
        %v1209 = vadd.f32 %v1205, 1e-05
        %v1210 = vadd.f32 %v1206, 1e-05
        %v1211 = vadd.f32 %v1207, 1e-05
        %v1212 = vrsqrt.pop %v1208
        %v1213 = vrsqrt.pop %v1209
        %v1214 = vrsqrt.pop %v1210
        %v1215 = vrsqrt.pop %v1211
        %v1216 = vmul.f32 %v1184, %v1212
        %v1217 = vmul.f32 %v1185, %v1213
        %v1218 = vmul.f32 %v1186, %v1214
        %v1219 = vmul.f32 %v1187, %v1215
        %v1221 = vlaneseq
        %v1222 = vshrl.u32 %v1221, 7
        %v1223 = vsub.s32 0, %v1222
        %v1224 = vrot.slane %v1163, %v1223
        %v1226 = vmul.f32 %v1216, %v1224
        %v1227 = vmul.f32 %v1217, %v1224
        %v1228 = vmul.f32 %v1218, %v1224
        %v1229 = vmul.f32 %v1219, %v1224
        %v1231 = vlaneseq
        %v1232 = vshrl.u32 %v1231, 7
        %v1233 = vsub.s32 0, %v1232
        %v1234 = vrot.slane %v1164, %v1233
        %v1236 = vadd.f32 %v1226, %v1234
        %v1237 = vadd.f32 %v1227, %v1234
        %v1238 = vadd.f32 %v1228, %v1234
        %v1239 = vadd.f32 %v1229, %v1234
        %v1244 = vcombine.high %v1236, %v1236
        %v1245 = vcombine.high %v1238, %v1238
        %v1246 = vld [vmem:[%s860] sm:$0xf]
        %v1247 = vld [vmem:[%s860 + $0x4] sm:$0xf]
        %v1248 = vld [vmem:[%s860 + $0x8] sm:$0xf]
        %v1249 = vld [vmem:[%s860 + $0xc] sm:$0xf]
        %v1250 = vcombine.low %v1236, %v1244
        %v1251 = vcombine.low %v1237, %v1238
        %v1252 = vcombine.low %v1245, %v1239
        %v1256 = vpack.c.bf16 %v1251, %v1250
        %v1257 = vpack.c.bf16 %v1252, %v1252
        %v1258 = vld [vmem:[%s863] sm:$0x1]
        %v1260 = vlaneseq
        %v1261 = vshrl.u32 %v1260, 7
        %v1262 = vsub.s32 0, %v1261
        %v1263 = vrot.slane %v1258, %v1262
        %v1269 = vunpack.c.l.b16 %v1246
        %v1270 = vunpack.c.l.b16 %v1247
        %v1271 = vunpack.c.l.b16 %v1248
        %v1272 = vunpack.c.l.b16 %v1249
        %v1273 = vpack.c.b16 %v1270, %v1269
        %v1274 = vpack.c.b16 %v1272, %v1271
        %v1278 = vsel %vm1165, %v1256, 0
        %v1281 = vsel %vm1165, %v1257, 0
        %1283 = vmatprep.subr.bf16.mxu0 0
        %1284 = vmatpush1.bf16.msra.mxu0 %v1273
        %1285 = vmatprep.subr.bf16.mxu0 0
        %1286 = vmatpush1.bf16.msra.mxu0 %v1274
        %1287 = vmatprep.subr.bf16.mxu0 0
        %1288 = vmatpush1.bf16.msra.mxu0 0
        %1289 = vmatprep.subr.bf16.mxu0 0
        %1290 = vmatpush1.bf16.msra.mxu0 0
        %1291 = vmatprep.subr.bf16.mxu0 0
        %1292 = vmatpush1.bf16.msra.mxu0 0
        %1293 = vmatprep.subr.bf16.mxu0 0
        %1294 = vmatpush1.bf16.msra.mxu0 0
        %1295 = vmatprep.subr.bf16.mxu0 0
        %1296 = vmatpush1.bf16.msra.mxu0 0
        %1297 = vmatprep.subr.bf16.mxu0 0
        %1298 = vmatpush1.bf16.msra.mxu0 0
        %1299 = vmatprep.subr.bf16.mxu0 0
        %1300 = vmatpush1.bf16.msra.mxu0 0
        %1301 = vmatprep.subr.bf16.mxu0 0
        %1302 = vmatpush1.bf16.msra.mxu0 0
        %1303 = vmatprep.subr.bf16.mxu0 0
        %1304 = vmatpush1.bf16.msra.mxu0 0
        %1305 = vmatprep.subr.bf16.mxu0 0
        %1306 = vmatpush1.bf16.msra.mxu0 0
        %1307 = vmatprep.subr.bf16.mxu0 0
        %1308 = vmatpush1.bf16.msra.mxu0 0
        %1309 = vmatprep.subr.bf16.mxu0 0
        %1310 = vmatpush1.bf16.msra.mxu0 0
        %1311 = vmatprep.subr.bf16.mxu0 0
        %1312 = vmatpush1.bf16.msra.mxu0 0
        %1313 = vmatprep.subr.bf16.mxu0 0
        %1314 = vmatpush1.bf16.msra.mxu0 0
        %1315 = vmatprep.mubr.bf16.mxu0 0
        %1316 = vmatmul.mubr.bf16.gmra.mrb[0].mxu0 %v1278
        %v1317 = vpop.f32.mrb[0].mxu0
        %v1318 = vadd.f32 %v1263, %v1317
        %v1319 = vpop.f32.mrb[0].mxu0
        %v1320 = vpop.f32.mrb[0].mxu0
        %v1321 = vadd.f32 %v1263, %v1320
        %v1322 = vpop.f32.mrb[0].mxu0
        %1323 = vmatprep.mubr.bf16.mxu0 0
        %1324 = vmatmul.mubr.bf16.gmra.mrb[0].mxu0 %v1281
        %v1325 = vpop.f32.mrb[0].mxu0
        %v1326 = vadd.f32 %v1263, %v1325
        %v1327 = vpop.f32.mrb[0].mxu0
        %v1328 = vpop.f32.mrb[0].mxu0
        %v1329 = vpop.f32.mrb[0].mxu0
        %1330 = vdwg.mxu0
        %v1334 = vcombine.high %v1318, %v1318
        %v1335 = vcombine.high %v1321, %v1321
        %v1336 = vcombine.high %v1326, %v1326
        %v1338 = vld [vmem:[%s7] sm:$0xff]
        %v1339 = vld [vmem:[%s7 + $0x8] sm:$0xff]
        %v1340 = vld [vmem:[%s7 + $0x10] sm:$0xff]
        %v1341 = vld [vmem:[%s7 + $0x18] sm:$0xff]
        %v1342 = vld [vmem:[%s7 + $0x20] sm:$0xff]
        %v1343 = vld [vmem:[%s7 + $0x28] sm:$0xff]
        %v1344 = vcombine.low %v1318, %v1334
        %v1345 = vcombine.low %v1335, %v1326
        %v1348 = vcombine.low %v1318, %v1318
        %v1349 = vcombine.low %v1334, %v1321
        %v1350 = vcombine.low %v1335, %v1335
        %v1351 = vcombine.low %v1326, %v1336
        %vm1356 = vcmask 1043456
        %v1357 = vsel %vm1356, %v1321, %v1348
        %v1358 = vsel %vm1356, %v1336, %v1350
        %1365 = vrot.lane.b32.xlu0 %v1338, 32
        %v1366 = vpop.permute.xlu0 %1365
        %1367 = vrot.lane.b32.xlu0 %v1339, 32
        %v1368 = vpop.permute.xlu0 %1367
        %1369 = vrot.lane.b32.xlu0 %v1340, 32
        %v1370 = vpop.permute.xlu0 %1369
        %1371 = vrot.lane.b32.xlu0 %v1341, 32
        %v1372 = vpop.permute.xlu0 %1371
        %1373 = vrot.lane.b32.xlu0 %v1342, 32
        %v1374 = vpop.permute.xlu0 %1373
        %1375 = vrot.lane.b32.xlu0 %v1343, 32
        %v1376 = vpop.permute.xlu0 %1375
        %v1383 = vmul.f32 %v1344, %v1366
        %v1384 = vmul.f32 %v1357, %v1368
        %v1385 = vmul.f32 %v1349, %v1370
        %v1386 = vmul.f32 %v1344, %v1372
        %v1387 = vmul.f32 %v1357, %v1374
        %v1388 = vmul.f32 %v1349, %v1376
        %v1389 = vmul.f32 %v1345, %v1366
        %v1390 = vmul.f32 %v1358, %v1368
        %v1391 = vmul.f32 %v1351, %v1370
        %v1392 = vmul.f32 %v1345, %v1372
        %v1393 = vmul.f32 %v1358, %v1374
        %v1394 = vmul.f32 %v1351, %v1376
        %1395 = vrot.lane.b32.xlu0 %v1338, 64
        %v1396 = vpop.permute.xlu0 %1395
        %1397 = vrot.lane.b32.xlu0 %v1339, 64
        %v1398 = vpop.permute.xlu0 %1397
        %1399 = vrot.lane.b32.xlu0 %v1340, 64
        %v1400 = vpop.permute.xlu0 %1399
        %1401 = vrot.lane.b32.xlu0 %v1341, 64
        %v1402 = vpop.permute.xlu0 %1401
        %1403 = vrot.lane.b32.xlu0 %v1342, 64
        %v1404 = vpop.permute.xlu0 %1403
        %1405 = vrot.lane.b32.xlu0 %v1343, 64
        %v1406 = vpop.permute.xlu0 %1405
        %v1413 = vmul.f32 %v1344, %v1396
        %v1414 = vmul.f32 %v1357, %v1398
        %v1415 = vmul.f32 %v1349, %v1400
        %v1416 = vmul.f32 %v1344, %v1402
        %v1417 = vmul.f32 %v1357, %v1404
        %v1418 = vmul.f32 %v1349, %v1406
        %v1419 = vmul.f32 %v1345, %v1396
        %v1420 = vmul.f32 %v1358, %v1398
        %v1421 = vmul.f32 %v1351, %v1400
        %v1422 = vmul.f32 %v1345, %v1402
        %v1423 = vmul.f32 %v1358, %v1404
        %v1424 = vmul.f32 %v1351, %v1406
        %v1425 = vpack.c.bf16 %v1321, %v1344
        %v1426 = vpack.c.bf16 %v1336, %v1345
        %v1427 = vpack.c.bf16 %v1384, %v1383
        %v1428 = vpack.c.bf16 %v1386, %v1385
        %v1429 = vpack.c.bf16 %v1388, %v1387
        %v1430 = vpack.c.bf16 %v1390, %v1389
        %v1431 = vpack.c.bf16 %v1392, %v1391
        %v1432 = vpack.c.bf16 %v1394, %v1393
        %1436 = vrot.lane.b32.xlu0 %v1427, 96
        %v1437 = vpop.permute.xlu0 %1436
        %1438 = vrot.lane.b32.xlu0 %v1428, 96
        %v1439 = vpop.permute.xlu0 %1438
        %1440 = vrot.lane.b32.xlu0 %v1429, 96
        %v1441 = vpop.permute.xlu0 %1440
        %v1443 = vsel %vm1165, %v1425, 0
        %v1446 = vsel %vm1165, %v1437, 0
        %v1449 = vsel %vm1165, %v1439, 0
        %v1452 = vsel %vm1165, %v1441, 0
        %1454 = vmatprep.subr.bf16.mxu0 0
        %1455 = vmatpush1.bf16.xpose.msra.mxu0 %v1446
        %1456 = vmatprep.subr.bf16.mxu0 0
        %1457 = vmatpush1.bf16.xpose.msra.mxu0 %v1449
        %1458 = vmatprep.subr.bf16.mxu0 0
        %1459 = vmatpush1.bf16.xpose.msra.mxu0 %v1452
        %1460 = vmatprep.subr.bf16.mxu0 0
        %1461 = vmatpush1.bf16.xpose.msra.mxu0 0
        %1462 = vmatprep.subr.bf16.mxu0 0
        %1463 = vmatpush1.bf16.xpose.msra.mxu0 0
        %1464 = vmatprep.subr.bf16.mxu0 0
        %1465 = vmatpush1.bf16.xpose.msra.mxu0 0
        %1466 = vmatprep.subr.bf16.mxu0 0
        %1467 = vmatpush1.bf16.xpose.msra.mxu0 0
        %1468 = vmatprep.subr.bf16.mxu0 0
        %1469 = vmatpush1.bf16.xpose.msra.mxu0 0
        %1470 = vmatprep.subr.bf16.mxu0 0
        %1471 = vmatpush1.bf16.xpose.msra.mxu0 0
        %1472 = vmatprep.subr.bf16.mxu0 0
        %1473 = vmatpush1.bf16.xpose.msra.mxu0 0
        %1474 = vmatprep.subr.bf16.mxu0 0
        %1475 = vmatpush1.bf16.xpose.msra.mxu0 0
        %1476 = vmatprep.subr.bf16.mxu0 0
        %1477 = vmatpush1.bf16.xpose.msra.mxu0 0
        %1478 = vmatprep.subr.bf16.mxu0 0
        %1479 = vmatpush1.bf16.xpose.msra.mxu0 0
        %1480 = vmatprep.subr.bf16.mxu0 0
        %1481 = vmatpush1.bf16.xpose.msra.mxu0 0
        %1482 = vmatprep.subr.bf16.mxu0 0
        %1483 = vmatpush1.bf16.xpose.msra.mxu0 0
        %1484 = vmatprep.subr.bf16.mxu0 0
        %1485 = vmatpush1.bf16.xpose.msra.mxu0 0
        %1486 = vmatprep.mubr.bf16.mxu0 0
        %1487 = vmatmul.mubr.bf16.gmra.mrb[0].mxu0 %v1443
        %v1488 = vpop.f32.mrb[0].mxu0
        %v1489 = vadd.f32 0.0, %v1488
        %v1490 = vpop.f32.mrb[0].mxu0
        %v1491 = vpop.f32.mrb[0].mxu0
        %v1492 = vadd.f32 0.0, %v1491
        %v1493 = vpop.f32.mrb[0].mxu0
        %1494 = vdwg.mxu0
        %1498 = vrot.lane.b32.xlu0 %v1430, 96
        %v1499 = vpop.permute.xlu0 %1498
        %1500 = vrot.lane.b32.xlu0 %v1431, 96
        %v1501 = vpop.permute.xlu0 %1500
        %1502 = vrot.lane.b32.xlu0 %v1432, 96
        %v1503 = vpop.permute.xlu0 %1502
        %v1505 = vsel %vm1165, %v1426, 0
        %v1508 = vsel %vm1165, %v1499, 0
        %v1511 = vsel %vm1165, %v1501, 0
        %v1514 = vsel %vm1165, %v1503, 0
        %1516 = vmatprep.subr.bf16.mxu0 0
        %1517 = vmatpush1.bf16.xpose.msra.mxu0 %v1508
        %1518 = vmatprep.subr.bf16.mxu0 0
        %1519 = vmatpush1.bf16.xpose.msra.mxu0 %v1511
        %1520 = vmatprep.subr.bf16.mxu0 0
        %1521 = vmatpush1.bf16.xpose.msra.mxu0 %v1514
        %1522 = vmatprep.subr.bf16.mxu0 0
        %1523 = vmatpush1.bf16.xpose.msra.mxu0 0
        %1524 = vmatprep.subr.bf16.mxu0 0
        %1525 = vmatpush1.bf16.xpose.msra.mxu0 0
        %1526 = vmatprep.subr.bf16.mxu0 0
        %1527 = vmatpush1.bf16.xpose.msra.mxu0 0
        %1528 = vmatprep.subr.bf16.mxu0 0
        %1529 = vmatpush1.bf16.xpose.msra.mxu0 0
        %1530 = vmatprep.subr.bf16.mxu0 0
        %1531 = vmatpush1.bf16.xpose.msra.mxu0 0
        %1532 = vmatprep.subr.bf16.mxu0 0
        %1533 = vmatpush1.bf16.xpose.msra.mxu0 0
        %1534 = vmatprep.subr.bf16.mxu0 0
        %1535 = vmatpush1.bf16.xpose.msra.mxu0 0
        %1536 = vmatprep.subr.bf16.mxu0 0
        %1537 = vmatpush1.bf16.xpose.msra.mxu0 0
        %1538 = vmatprep.subr.bf16.mxu0 0
        %1539 = vmatpush1.bf16.xpose.msra.mxu0 0
        %1540 = vmatprep.subr.bf16.mxu0 0
        %1541 = vmatpush1.bf16.xpose.msra.mxu0 0
        %1542 = vmatprep.subr.bf16.mxu0 0
        %1543 = vmatpush1.bf16.xpose.msra.mxu0 0
        %1544 = vmatprep.subr.bf16.mxu0 0
        %1545 = vmatpush1.bf16.xpose.msra.mxu0 0
        %1546 = vmatprep.subr.bf16.mxu0 0
        %1547 = vmatpush1.bf16.xpose.msra.mxu0 0
        %1548 = vmatprep.mubr.bf16.mxu0 0
        %1549 = vmatmul.mubr.bf16.gmra.mrb[0].mxu0 %v1505
        %v1550 = vpop.f32.mrb[0].mxu0
        %v1551 = vadd.f32 0.0, %v1550
        %v1552 = vpop.f32.mrb[0].mxu0
        %v1553 = vpop.f32.mrb[0].mxu0
        %v1554 = vadd.f32 0.0, %v1553
        %v1555 = vpop.f32.mrb[0].mxu0
        %1556 = vdwg.mxu0
        %v1557 = vmul.f32 %v1489, 0.35355338
        %v1558 = vmul.f32 %v1492, 0.35355338
        %v1559 = vmul.f32 %v1551, 0.35355338
        %v1560 = vmul.f32 %v1554, 0.35355338
        %v1561 = vld [vmem:[%s6] sm:$0xff]
        %v1562 = vld [vmem:[%s6 + $0x8] sm:$0xf]
        %v1563 = vadd.f32 %v1557, %v1561
        %v1564 = vadd.f32 %v1558, %v1562
        %v1565 = vadd.f32 %v1559, %v1561
        %v1566 = vadd.f32 %v1560, %v1562
        %vm1567 = vcmask 392192
        %v1568 = vsel %vm1567, %v1563, -inf
        %1569 = vmax.xlane.f32.xlu0 %v1568
        %v1570 = vpop.xlane.xlu0 %1569
        %vm1571 = vcmask 388096
        %v1572 = vsel %vm1571, %v1564, -inf
        %1573 = vmax.xlane.f32.xlu0 %v1572
        %v1574 = vpop.xlane.xlu0 %1573
        %v1575 = vsel %vm1567, %v1565, -inf
        %1576 = vmax.xlane.f32.xlu0 %v1575
        %v1577 = vpop.xlane.xlu0 %1576
        %v1578 = vsel %vm1571, %v1566, -inf
        %1579 = vmax.xlane.f32.xlu0 %v1578
        %v1580 = vpop.xlane.xlu0 %1579
        %v1581 = vsub.f32 %v1563, %v1570
        %v1582 = vsub.f32 %v1564, %v1574
        %v1583 = vsub.f32 %v1565, %v1577
        %v1584 = vsub.f32 %v1566, %v1580
        %v1585 = vmul.f32 %v1581, 1.442695
        %v1586 = vpow.pop %v1585
        %v1587 = vmul.f32 %v1582, 1.442695
        %v1588 = vpow.pop %v1587
        %v1589 = vmul.f32 %v1583, 1.442695
        %v1590 = vpow.pop %v1589
        %v1591 = vmul.f32 %v1584, 1.442695
        %v1592 = vpow.pop %v1591
        %v1597 = vcombine.high %v1586, %v1586
        %v1598 = vcombine.high %v1590, %v1590
        %v1599 = vcombine.low %v1586, %v1597
        %v1600 = vcombine.low %v1588, %v1590
        %v1601 = vcombine.low %v1598, %v1592
        %v1605 = vpack.c.bf16 %v1600, %v1599
        %v1606 = vpack.c.bf16 %v1601, %v1601
        %v1607 = vpack.c.bf16 %v1339, %v1338
        %v1608 = vpack.c.bf16 %v1341, %v1340
        %v1609 = vpack.c.bf16 %v1343, %v1342
        %v1611 = vsel %vm1567, %v1605, 0
        %v1614 = vsel %vm1567, %v1606, 0
        %1616 = vmatprep.subr.bf16.mxu0 0
        %1617 = vmatpush1.bf16.msra.mxu0 %v1607
        %1618 = vmatprep.subr.bf16.mxu0 0
        %1619 = vmatpush1.bf16.msra.mxu0 %v1608
        %1620 = vmatprep.subr.bf16.mxu0 0
        %1621 = vmatpush1.bf16.msra.mxu0 %v1609
        %1622 = vmatprep.subr.bf16.mxu0 0
        %1623 = vmatpush1.bf16.msra.mxu0 0
        %1624 = vmatprep.subr.bf16.mxu0 0
        %1625 = vmatpush1.bf16.msra.mxu0 0
        %1626 = vmatprep.subr.bf16.mxu0 0
        %1627 = vmatpush1.bf16.msra.mxu0 0
        %1628 = vmatprep.subr.bf16.mxu0 0
        %1629 = vmatpush1.bf16.msra.mxu0 0
        %1630 = vmatprep.subr.bf16.mxu0 0
        %1631 = vmatpush1.bf16.msra.mxu0 0
        %1632 = vmatprep.subr.bf16.mxu0 0
        %1633 = vmatpush1.bf16.msra.mxu0 0
        %1634 = vmatprep.subr.bf16.mxu0 0
        %1635 = vmatpush1.bf16.msra.mxu0 0
        %1636 = vmatprep.subr.bf16.mxu0 0
        %1637 = vmatpush1.bf16.msra.mxu0 0
        %1638 = vmatprep.subr.bf16.mxu0 0
        %1639 = vmatpush1.bf16.msra.mxu0 0
        %1640 = vmatprep.subr.bf16.mxu0 0
        %1641 = vmatpush1.bf16.msra.mxu0 0
        %1642 = vmatprep.subr.bf16.mxu0 0
        %1643 = vmatpush1.bf16.msra.mxu0 0
        %1644 = vmatprep.subr.bf16.mxu0 0
        %1645 = vmatpush1.bf16.msra.mxu0 0
        %1646 = vmatprep.subr.bf16.mxu0 0
        %1647 = vmatpush1.bf16.msra.mxu0 0
        %1648 = vmatprep.mubr.bf16.mxu0 0
        %1649 = vmatmul.mubr.bf16.gmra.mrb[0].mxu0 %v1611
        %v1650 = vpop.f32.mrb[0].mxu0
        %v1651 = vadd.f32 0.0, %v1650
        %v1652 = vpop.f32.mrb[0].mxu0
        %v1653 = vpop.f32.mrb[0].mxu0
        %v1654 = vadd.f32 0.0, %v1653
        %v1655 = vpop.f32.mrb[0].mxu0
        %1656 = vmatprep.mubr.bf16.mxu0 0
        %1657 = vmatmul.mubr.bf16.gmra.mrb[0].mxu0 %v1614
        %v1658 = vpop.f32.mrb[0].mxu0
        %v1659 = vadd.f32 0.0, %v1658
        %v1660 = vpop.f32.mrb[0].mxu0
        %v1661 = vpop.f32.mrb[0].mxu0
        %v1662 = vpop.f32.mrb[0].mxu0
        %1663 = vdwg.mxu0
        %v1667 = vcombine.high %v1651, %v1651
        %v1668 = vcombine.high %v1654, %v1654
        %v1669 = vcombine.high %v1659, %v1659
        %v1673 = vpack.c.bf16 %v1588, %v1586
        %v1674 = vpack.c.bf16 %v1592, %v1590
        %v1675 = vpack.c.bf16 %v1414, %v1413
        %v1676 = vpack.c.bf16 %v1416, %v1415
        %v1677 = vpack.c.bf16 %v1418, %v1417
        %v1678 = vpack.c.bf16 %v1420, %v1419
        %v1679 = vpack.c.bf16 %v1422, %v1421
        %v1680 = vpack.c.bf16 %v1424, %v1423
        %1684 = vrot.lane.b32.xlu0 %v1675, 64
        %v1685 = vpop.permute.xlu0 %1684
        %1686 = vrot.lane.b32.xlu0 %v1676, 64
        %v1687 = vpop.permute.xlu0 %1686
        %1688 = vrot.lane.b32.xlu0 %v1677, 64
        %v1689 = vpop.permute.xlu0 %1688
        %v1694 = vsel %vm1567, %v1673, 0
        %1696 = vmatprep.subr.bf16.mxu0 0
        %1697 = vmatpush1.bf16.msra.mxu0 %v1685
        %1698 = vmatprep.subr.bf16.mxu0 0
        %1699 = vmatpush1.bf16.msra.mxu0 %v1687
        %1700 = vmatprep.subr.bf16.mxu0 0
        %1701 = vmatpush1.bf16.msra.mxu0 %v1689
        %1702 = vmatprep.subr.bf16.mxu0 0
        %1703 = vmatpush1.bf16.msra.mxu0 0
        %1704 = vmatprep.subr.bf16.mxu0 0
        %1705 = vmatpush1.bf16.msra.mxu0 0
        %1706 = vmatprep.subr.bf16.mxu0 0
        %1707 = vmatpush1.bf16.msra.mxu0 0
        %1708 = vmatprep.subr.bf16.mxu0 0
        %1709 = vmatpush1.bf16.msra.mxu0 0
        %1710 = vmatprep.subr.bf16.mxu0 0
        %1711 = vmatpush1.bf16.msra.mxu0 0
        %1712 = vmatprep.subr.bf16.mxu0 0
        %1713 = vmatpush1.bf16.msra.mxu0 0
        %1714 = vmatprep.subr.bf16.mxu0 0
        %1715 = vmatpush1.bf16.msra.mxu0 0
        %1716 = vmatprep.subr.bf16.mxu0 0
        %1717 = vmatpush1.bf16.msra.mxu0 0
        %1718 = vmatprep.subr.bf16.mxu0 0
        %1719 = vmatpush1.bf16.msra.mxu0 0
        %1720 = vmatprep.subr.bf16.mxu0 0
        %1721 = vmatpush1.bf16.msra.mxu0 0
        %1722 = vmatprep.subr.bf16.mxu0 0
        %1723 = vmatpush1.bf16.msra.mxu0 0
        %1724 = vmatprep.subr.bf16.mxu0 0
        %1725 = vmatpush1.bf16.msra.mxu0 0
        %1726 = vmatprep.subr.bf16.mxu0 0
        %1727 = vmatpush1.bf16.msra.mxu0 0
        %1728 = vmatprep.mubr.bf16.mxu0 0
        %1729 = vmatmul.mubr.bf16.gmra.mrb[0].mxu0 %v1694
        %v1730 = vpop.f32.mrb[0].mxu0
        %v1731 = vadd.f32 0.0, %v1730
        %v1732 = vpop.f32.mrb[0].mxu0
        %v1733 = vpop.f32.mrb[0].mxu0
        %v1734 = vadd.f32 0.0, %v1733
        %v1735 = vpop.f32.mrb[0].mxu0
        %1736 = vdwg.mxu0
        %1740 = vrot.lane.b32.xlu0 %v1678, 64
        %v1741 = vpop.permute.xlu0 %1740
        %1742 = vrot.lane.b32.xlu0 %v1679, 64
        %v1743 = vpop.permute.xlu0 %1742
        %1744 = vrot.lane.b32.xlu0 %v1680, 64
        %v1745 = vpop.permute.xlu0 %1744
        %v1750 = vsel %vm1567, %v1674, 0
        %1752 = vmatprep.subr.bf16.mxu0 0
        %1753 = vmatpush1.bf16.msra.mxu0 %v1741
        %1754 = vmatprep.subr.bf16.mxu0 0
        %1755 = vmatpush1.bf16.msra.mxu0 %v1743
        %1756 = vmatprep.subr.bf16.mxu0 0
        %1757 = vmatpush1.bf16.msra.mxu0 %v1745
        %1758 = vmatprep.subr.bf16.mxu0 0
        %1759 = vmatpush1.bf16.msra.mxu0 0
        %1760 = vmatprep.subr.bf16.mxu0 0
        %1761 = vmatpush1.bf16.msra.mxu0 0
        %1762 = vmatprep.subr.bf16.mxu0 0
        %1763 = vmatpush1.bf16.msra.mxu0 0
        %1764 = vmatprep.subr.bf16.mxu0 0
        %1765 = vmatpush1.bf16.msra.mxu0 0
        %1766 = vmatprep.subr.bf16.mxu0 0
        %1767 = vmatpush1.bf16.msra.mxu0 0
        %1768 = vmatprep.subr.bf16.mxu0 0
        %1769 = vmatpush1.bf16.msra.mxu0 0
        %1770 = vmatprep.subr.bf16.mxu0 0
        %1771 = vmatpush1.bf16.msra.mxu0 0
        %1772 = vmatprep.subr.bf16.mxu0 0
        %1773 = vmatpush1.bf16.msra.mxu0 0
        %1774 = vmatprep.subr.bf16.mxu0 0
        %1775 = vmatpush1.bf16.msra.mxu0 0
        %1776 = vmatprep.subr.bf16.mxu0 0
        %1777 = vmatpush1.bf16.msra.mxu0 0
        %1778 = vmatprep.subr.bf16.mxu0 0
        %1779 = vmatpush1.bf16.msra.mxu0 0
        %1780 = vmatprep.subr.bf16.mxu0 0
        %1781 = vmatpush1.bf16.msra.mxu0 0
        %1782 = vmatprep.subr.bf16.mxu0 0
        %1783 = vmatpush1.bf16.msra.mxu0 0
        %1784 = vmatprep.mubr.bf16.mxu0 0
        %1785 = vmatmul.mubr.bf16.gmra.mrb[0].mxu0 %v1750
        %v1786 = vpop.f32.mrb[0].mxu0
        %v1787 = vadd.f32 0.0, %v1786
        %v1788 = vpop.f32.mrb[0].mxu0
        %v1789 = vpop.f32.mrb[0].mxu0
        %v1790 = vadd.f32 0.0, %v1789
        %v1791 = vpop.f32.mrb[0].mxu0
        %1792 = vdwg.mxu0
        %v1793 = vmax.f32 %v1651, 1e-20
        %v1794 = vmax.f32 %v1667, 1e-20
        %v1795 = vmax.f32 %v1654, 1e-20
        %v1796 = vmax.f32 %v1668, 1e-20
        %v1797 = vmax.f32 %v1659, 1e-20
        %v1798 = vmax.f32 %v1669, 1e-20
        %v1799 = vrcp.pop %v1793
        %v1800 = vrcp.pop %v1794
        %v1801 = vrcp.pop %v1795
        %v1802 = vrcp.pop %v1796
        %v1803 = vrcp.pop %v1797
        %v1804 = vrcp.pop %v1798
        %v1809 = vcombine.low %v1799, %v1800
        %v1810 = vcombine.low %v1802, %v1803
        %v1813 = vmul.f32 %v1731, %v1809
        %v1814 = vmul.f32 %v1734, %v1801
        %v1815 = vmul.f32 %v1787, %v1810
        %v1816 = vmul.f32 %v1790, %v1804
        %v1821 = vcombine.high %v1813, %v1813
        %v1822 = vcombine.high %v1815, %v1815
        %v1823 = vld [vmem:[%s868] sm:$0xf]
        %v1824 = vld [vmem:[%s868 + $0x4] sm:$0xf]
        %v1825 = vld [vmem:[%s868 + $0x8] sm:$0xf]
        %v1826 = vld [vmem:[%s868 + $0xc] sm:$0xf]
        %v1827 = vcombine.low %v1813, %v1821
        %v1828 = vcombine.low %v1814, %v1815
        %v1829 = vcombine.low %v1822, %v1816
        %v1833 = vpack.c.bf16 %v1828, %v1827
        %v1834 = vpack.c.bf16 %v1829, %v1829
        %v1835 = vld [vmem:[%s871] sm:$0x1]
        %v1837 = vlaneseq
        %v1838 = vshrl.u32 %v1837, 7
        %v1839 = vsub.s32 0, %v1838
        %v1840 = vrot.slane %v1835, %v1839
        %v1846 = vunpack.c.l.b16 %v1823
        %v1847 = vunpack.c.l.b16 %v1824
        %v1848 = vunpack.c.l.b16 %v1825
        %v1849 = vunpack.c.l.b16 %v1826
        %v1850 = vpack.c.b16 %v1847, %v1846
        %v1851 = vpack.c.b16 %v1849, %v1848
        %v1855 = vsel %vm1165, %v1833, 0
        %v1858 = vsel %vm1165, %v1834, 0
        %1860 = vmatprep.subr.bf16.mxu0 0
        %1861 = vmatpush1.bf16.msra.mxu0 %v1850
        %1862 = vmatprep.subr.bf16.mxu0 0
        %1863 = vmatpush1.bf16.msra.mxu0 %v1851
        %1864 = vmatprep.subr.bf16.mxu0 0
        %1865 = vmatpush1.bf16.msra.mxu0 0
        %1866 = vmatprep.subr.bf16.mxu0 0
        %1867 = vmatpush1.bf16.msra.mxu0 0
        %1868 = vmatprep.subr.bf16.mxu0 0
        %1869 = vmatpush1.bf16.msra.mxu0 0
        %1870 = vmatprep.subr.bf16.mxu0 0
        %1871 = vmatpush1.bf16.msra.mxu0 0
        %1872 = vmatprep.subr.bf16.mxu0 0
        %1873 = vmatpush1.bf16.msra.mxu0 0
        %1874 = vmatprep.subr.bf16.mxu0 0
        %1875 = vmatpush1.bf16.msra.mxu0 0
        %1876 = vmatprep.subr.bf16.mxu0 0
        %1877 = vmatpush1.bf16.msra.mxu0 0
        %1878 = vmatprep.subr.bf16.mxu0 0
        %1879 = vmatpush1.bf16.msra.mxu0 0
        %1880 = vmatprep.subr.bf16.mxu0 0
        %1881 = vmatpush1.bf16.msra.mxu0 0
        %1882 = vmatprep.subr.bf16.mxu0 0
        %1883 = vmatpush1.bf16.msra.mxu0 0
        %1884 = vmatprep.subr.bf16.mxu0 0
        %1885 = vmatpush1.bf16.msra.mxu0 0
        %1886 = vmatprep.subr.bf16.mxu0 0
        %1887 = vmatpush1.bf16.msra.mxu0 0
        %1888 = vmatprep.subr.bf16.mxu0 0
        %1889 = vmatpush1.bf16.msra.mxu0 0
        %1890 = vmatprep.subr.bf16.mxu0 0
        %1891 = vmatpush1.bf16.msra.mxu0 0
        %1892 = vmatprep.mubr.bf16.mxu0 0
        %1893 = vmatmul.mubr.bf16.gmra.mrb[0].mxu0 %v1855
        %v1894 = vpop.f32.mrb[0].mxu0
        %v1895 = vadd.f32 %v1840, %v1894
        %v1896 = vpop.f32.mrb[0].mxu0
        %v1897 = vpop.f32.mrb[0].mxu0
        %v1898 = vadd.f32 %v1840, %v1897
        %v1899 = vpop.f32.mrb[0].mxu0
        %1900 = vmatprep.mubr.bf16.mxu0 0
        %1901 = vmatmul.mubr.bf16.gmra.mrb[0].mxu0 %v1858
        %v1902 = vpop.f32.mrb[0].mxu0
        %v1903 = vadd.f32 %v1840, %v1902
        %v1904 = vpop.f32.mrb[0].mxu0
        %v1905 = vpop.f32.mrb[0].mxu0
        %v1906 = vpop.f32.mrb[0].mxu0
        %1907 = vdwg.mxu0
        %v1911 = vcombine.high %v1895, %v1895
        %v1912 = vcombine.high %v1898, %v1898
        %v1913 = vcombine.high %v1903, %v1903
        %v1915 = vcombine.low %v1895, %v1911
        %v1916 = vcombine.low %v1912, %v1903
        %v1919 = vadd.f32 %v1159, %v1915
        %v1920 = vadd.f32 %v1160, %v1898
        %v1921 = vadd.f32 %v1161, %v1916
        %v1922 = vadd.f32 %v1162, %v1913
        %v1923 = vld [vmem:[%s874] sm:$0x1]
        %v1924 = vld [vmem:[%s877] sm:$0x1]
        %v1925 = vsel %vm1165, %v1919, 0.0
        %1926 = vadd.xlane.f32.xlu0 %v1925
        %v1927 = vpop.xlane.xlu0 %1926
        %v1928 = vsel %vm1169, %v1920, 0.0
        %1929 = vadd.xlane.f32.xlu0 %v1928
        %v1930 = vpop.xlane.xlu0 %1929
        %v1931 = vsel %vm1165, %v1921, 0.0
        %1932 = vadd.xlane.f32.xlu0 %v1931
        %v1933 = vpop.xlane.xlu0 %1932
        %v1934 = vsel %vm1169, %v1922, 0.0
        %1935 = vadd.xlane.f32.xlu0 %v1934
        %v1936 = vpop.xlane.xlu0 %1935
        %v1937 = vmul.f32 %v1927, %v1179
        %v1938 = vmul.f32 %v1930, %v1179
        %v1939 = vmul.f32 %v1933, %v1179
        %v1940 = vmul.f32 %v1936, %v1179
        %v1941 = vsub.f32 %v1919, %v1937
        %v1942 = vsub.f32 %v1920, %v1938
        %v1943 = vsub.f32 %v1921, %v1939
        %v1944 = vsub.f32 %v1922, %v1940
        %v1945 = vmul.f32 %v1941, %v1941
        %v1946 = vmul.f32 %v1942, %v1942
        %v1947 = vmul.f32 %v1943, %v1943
        %v1948 = vmul.f32 %v1944, %v1944
        %v1949 = vsel %vm1165, %v1945, 0.0
        %1950 = vadd.xlane.f32.xlu0 %v1949
        %v1951 = vpop.xlane.xlu0 %1950
        %v1952 = vsel %vm1169, %v1946, 0.0
        %1953 = vadd.xlane.f32.xlu0 %v1952
        %v1954 = vpop.xlane.xlu0 %1953
        %v1955 = vsel %vm1165, %v1947, 0.0
        %1956 = vadd.xlane.f32.xlu0 %v1955
        %v1957 = vpop.xlane.xlu0 %1956
        %v1958 = vsel %vm1169, %v1948, 0.0
        %1959 = vadd.xlane.f32.xlu0 %v1958
        %v1960 = vpop.xlane.xlu0 %1959
        %v1961 = vmul.f32 %v1951, %v1179
        %v1962 = vmul.f32 %v1954, %v1179
        %v1963 = vmul.f32 %v1957, %v1179
        %v1964 = vmul.f32 %v1960, %v1179
        %v1965 = vadd.f32 %v1961, 1e-05
        %v1966 = vadd.f32 %v1962, 1e-05
        %v1967 = vadd.f32 %v1963, 1e-05
        %v1968 = vadd.f32 %v1964, 1e-05
        %v1969 = vrsqrt.pop %v1965
        %v1970 = vrsqrt.pop %v1966
        %v1971 = vrsqrt.pop %v1967
        %v1972 = vrsqrt.pop %v1968
        %v1973 = vmul.f32 %v1941, %v1969
        %v1974 = vmul.f32 %v1942, %v1970
        %v1975 = vmul.f32 %v1943, %v1971
        %v1976 = vmul.f32 %v1944, %v1972
        %v1978 = vlaneseq
        %v1979 = vshrl.u32 %v1978, 7
        %v1980 = vsub.s32 0, %v1979
        %v1981 = vrot.slane %v1923, %v1980
        %v1983 = vmul.f32 %v1973, %v1981
        %v1984 = vmul.f32 %v1974, %v1981
        %v1985 = vmul.f32 %v1975, %v1981
        %v1986 = vmul.f32 %v1976, %v1981
        %v1988 = vlaneseq
        %v1989 = vshrl.u32 %v1988, 7
        %v1990 = vsub.s32 0, %v1989
        %v1991 = vrot.slane %v1924, %v1990
        %v1993 = vadd.f32 %v1983, %v1991
        %v1994 = vadd.f32 %v1984, %v1991
        %v1995 = vadd.f32 %v1985, %v1991
        %v1996 = vadd.f32 %v1986, %v1991
        %v2001 = vcombine.high %v1993, %v1993
        %v2002 = vcombine.high %v1995, %v1995
        %v2003 = vld [vmem:[%s882] sm:$0xf]
        %v2004 = vld [vmem:[%s882 + $0x4] sm:$0xf]
        %v2005 = vld [vmem:[%s882 + $0x8] sm:$0xf]
        %v2006 = vld [vmem:[%s882 + $0xc] sm:$0xf]
        %v2007 = vcombine.low %v1993, %v2001
        %v2008 = vcombine.low %v1994, %v1995
        %v2009 = vcombine.low %v2002, %v1996
        %v2013 = vpack.c.bf16 %v2008, %v2007
        %v2014 = vpack.c.bf16 %v2009, %v2009
        %v2015 = vld [vmem:[%s885] sm:$0x1]
        %v2017 = vlaneseq
        %v2018 = vshrl.u32 %v2017, 7
        %v2019 = vsub.s32 0, %v2018
        %v2020 = vrot.slane %v2015, %v2019
        %v2026 = vunpack.c.l.b16 %v2003
        %v2027 = vunpack.c.l.b16 %v2004
        %v2028 = vunpack.c.l.b16 %v2005
        %v2029 = vunpack.c.l.b16 %v2006
        %v2030 = vpack.c.b16 %v2027, %v2026
        %v2031 = vpack.c.b16 %v2029, %v2028
        %v2035 = vsel %vm1165, %v2013, 0
        %v2038 = vsel %vm1165, %v2014, 0
        %2040 = vmatprep.subr.bf16.mxu0 0
        %2041 = vmatpush1.bf16.msra.mxu0 %v2030
        %2042 = vmatprep.subr.bf16.mxu0 0
        %2043 = vmatpush1.bf16.msra.mxu0 %v2031
        %2044 = vmatprep.subr.bf16.mxu0 0
        %2045 = vmatpush1.bf16.msra.mxu0 0
        %2046 = vmatprep.subr.bf16.mxu0 0
        %2047 = vmatpush1.bf16.msra.mxu0 0
        %2048 = vmatprep.subr.bf16.mxu0 0
        %2049 = vmatpush1.bf16.msra.mxu0 0
        %2050 = vmatprep.subr.bf16.mxu0 0
        %2051 = vmatpush1.bf16.msra.mxu0 0
        %2052 = vmatprep.subr.bf16.mxu0 0
        %2053 = vmatpush1.bf16.msra.mxu0 0
        %2054 = vmatprep.subr.bf16.mxu0 0
        %2055 = vmatpush1.bf16.msra.mxu0 0
        %2056 = vmatprep.subr.bf16.mxu0 0
        %2057 = vmatpush1.bf16.msra.mxu0 0
        %2058 = vmatprep.subr.bf16.mxu0 0
        %2059 = vmatpush1.bf16.msra.mxu0 0
        %2060 = vmatprep.subr.bf16.mxu0 0
        %2061 = vmatpush1.bf16.msra.mxu0 0
        %2062 = vmatprep.subr.bf16.mxu0 0
        %2063 = vmatpush1.bf16.msra.mxu0 0
        %2064 = vmatprep.subr.bf16.mxu0 0
        %2065 = vmatpush1.bf16.msra.mxu0 0
        %2066 = vmatprep.subr.bf16.mxu0 0
        %2067 = vmatpush1.bf16.msra.mxu0 0
        %2068 = vmatprep.subr.bf16.mxu0 0
        %2069 = vmatpush1.bf16.msra.mxu0 0
        %2070 = vmatprep.subr.bf16.mxu0 0
        %2071 = vmatpush1.bf16.msra.mxu0 0
        %2072 = vmatprep.mubr.bf16.mxu0 0
        %2073 = vmatmul.mubr.bf16.gmra.mrb[0].mxu0 %v2035
        %v2074 = vpop.f32.mrb[0].mxu0
        %v2075 = vadd.f32 %v2020, %v2074
        %v2076 = vpop.f32.mrb[0].mxu0
        %v2077 = vpop.f32.mrb[0].mxu0
        %v2078 = vadd.f32 %v2020, %v2077
        %v2079 = vpop.f32.mrb[0].mxu0
        %2080 = vmatprep.mubr.bf16.mxu0 0
        %2081 = vmatmul.mubr.bf16.gmra.mrb[0].mxu0 %v2038
        %v2082 = vpop.f32.mrb[0].mxu0
        %v2083 = vadd.f32 %v2020, %v2082
        %v2084 = vpop.f32.mrb[0].mxu0
        %v2085 = vpop.f32.mrb[0].mxu0
        %v2086 = vpop.f32.mrb[0].mxu0
        %2087 = vdwg.mxu0
        %v2088 = vmul.f32 %v2075, %v2075
        %v2089 = vmul.f32 %v2078, %v2078
        %v2090 = vmul.f32 %v2083, %v2083
        %v2091 = vmul.f32 %v2075, %v2088
        %v2092 = vmul.f32 %v2078, %v2089
        %v2093 = vmul.f32 %v2083, %v2090
        %v2094 = vmul.f32 %v2091, 0.044715
        %v2095 = vmul.f32 %v2092, 0.044715
        %v2096 = vmul.f32 %v2093, 0.044715
        %v2097 = vadd.f32 %v2075, %v2094
        %v2098 = vadd.f32 %v2078, %v2095
        %v2099 = vadd.f32 %v2083, %v2096
        %v2100 = vmul.f32 %v2097, 0.7978846
        %v2101 = vmul.f32 %v2098, 0.7978846
        %v2102 = vmul.f32 %v2099, 0.7978846
        %v2103 = vtanh.pop %v2100
        %v2104 = vtanh.pop %v2101
        %v2105 = vtanh.pop %v2102
        %v2106 = vadd.f32 %v2103, 1.0
        %v2107 = vadd.f32 %v2104, 1.0
        %v2108 = vadd.f32 %v2105, 1.0
        %v2109 = vmul.f32 %v2106, 0.5
        %v2110 = vmul.f32 %v2107, 0.5
        %v2111 = vmul.f32 %v2108, 0.5
        %v2112 = vmul.f32 %v2075, %v2109
        %v2113 = vmul.f32 %v2078, %v2110
        %v2114 = vmul.f32 %v2083, %v2111
        %v2115 = vld [vmem:[%s890] sm:$0xf]
        %v2116 = vld [vmem:[%s890 + $0x4] sm:$0xf]
        %v2117 = vld [vmem:[%s890 + $0x8] sm:$0xf]
        %v2118 = vld [vmem:[%s890 + $0xc] sm:$0xf]
        %v2119 = vld [vmem:[%s890 + $0x10] sm:$0xf]
        %v2120 = vld [vmem:[%s890 + $0x14] sm:$0xf]
        %v2121 = vld [vmem:[%s890 + $0x18] sm:$0xf]
        %v2122 = vld [vmem:[%s890 + $0x1c] sm:$0xf]
        %v2123 = vld [vmem:[%s890 + $0x20] sm:$0xf]
        %v2124 = vld [vmem:[%s890 + $0x24] sm:$0xf]
        %v2125 = vld [vmem:[%s890 + $0x28] sm:$0xf]
        %v2126 = vld [vmem:[%s890 + $0x2c] sm:$0xf]
        %v2127 = vld [vmem:[%s890 + $0x30] sm:$0xf]
        %v2128 = vld [vmem:[%s890 + $0x34] sm:$0xf]
        %v2129 = vld [vmem:[%s890 + $0x38] sm:$0xf]
        %v2130 = vld [vmem:[%s890 + $0x3c] sm:$0xf]
        %v2131 = vpack.c.bf16 %v2113, %v2112
        %v2132 = vpack.c.bf16 %v2114, %v2114
        %v2133 = vld [vmem:[%s893] sm:$0x1]
        %v2135 = vlaneseq
        %v2136 = vshrl.u32 %v2135, 7
        %v2137 = vsub.s32 0, %v2136
        %v2138 = vrot.slane %v2133, %v2137
        %v2156 = vunpack.c.l.b16 %v2115
        %v2157 = vunpack.c.l.b16 %v2116
        %v2158 = vunpack.c.l.b16 %v2117
        %v2159 = vunpack.c.l.b16 %v2118
        %v2160 = vunpack.c.l.b16 %v2119
        %v2161 = vunpack.c.l.b16 %v2120
        %v2162 = vunpack.c.l.b16 %v2121
        %v2163 = vunpack.c.l.b16 %v2122
        %v2164 = vunpack.c.l.b16 %v2123
        %v2165 = vunpack.c.l.b16 %v2124
        %v2166 = vunpack.c.l.b16 %v2125
        %v2167 = vunpack.c.l.b16 %v2126
        %v2168 = vunpack.c.l.b16 %v2127
        %v2169 = vunpack.c.l.b16 %v2128
        %v2170 = vunpack.c.l.b16 %v2129
        %v2171 = vunpack.c.l.b16 %v2130
        %v2172 = vpack.c.b16 %v2157, %v2156
        %v2173 = vpack.c.b16 %v2159, %v2158
        %v2174 = vpack.c.b16 %v2161, %v2160
        %v2175 = vpack.c.b16 %v2163, %v2162
        %v2176 = vpack.c.b16 %v2165, %v2164
        %v2177 = vpack.c.b16 %v2167, %v2166
        %v2178 = vpack.c.b16 %v2169, %v2168
        %v2179 = vpack.c.b16 %v2171, %v2170
        %2188 = vmatprep.subr.bf16.mxu0 0
        %2189 = vmatpush1.bf16.msra.mxu0 %v2172
        %2190 = vmatprep.subr.bf16.mxu0 0
        %2191 = vmatpush1.bf16.msra.mxu0 %v2173
        %2192 = vmatprep.subr.bf16.mxu0 0
        %2193 = vmatpush1.bf16.msra.mxu0 %v2174
        %2194 = vmatprep.subr.bf16.mxu0 0
        %2195 = vmatpush1.bf16.msra.mxu0 %v2175
        %2196 = vmatprep.subr.bf16.mxu0 0
        %2197 = vmatpush1.bf16.msra.mxu0 %v2176
        %2198 = vmatprep.subr.bf16.mxu0 0
        %2199 = vmatpush1.bf16.msra.mxu0 %v2177
        %2200 = vmatprep.subr.bf16.mxu0 0
        %2201 = vmatpush1.bf16.msra.mxu0 %v2178
        %2202 = vmatprep.subr.bf16.mxu0 0
        %2203 = vmatpush1.bf16.msra.mxu0 %v2179
        %2204 = vmatprep.subr.bf16.mxu0 0
        %2205 = vmatpush1.bf16.msra.mxu0 0
        %2206 = vmatprep.subr.bf16.mxu0 0
        %2207 = vmatpush1.bf16.msra.mxu0 0
        %2208 = vmatprep.subr.bf16.mxu0 0
        %2209 = vmatpush1.bf16.msra.mxu0 0
        %2210 = vmatprep.subr.bf16.mxu0 0
        %2211 = vmatpush1.bf16.msra.mxu0 0
        %2212 = vmatprep.subr.bf16.mxu0 0
        %2213 = vmatpush1.bf16.msra.mxu0 0
        %2214 = vmatprep.subr.bf16.mxu0 0
        %2215 = vmatpush1.bf16.msra.mxu0 0
        %2216 = vmatprep.subr.bf16.mxu0 0
        %2217 = vmatpush1.bf16.msra.mxu0 0
        %2218 = vmatprep.subr.bf16.mxu0 0
        %2219 = vmatpush1.bf16.msra.mxu0 0
        %2220 = vmatprep.mubr.bf16.mxu0 0
        %2221 = vmatmul.mubr.bf16.gmra.mrb[0].mxu0 %v2131
        %v2222 = vpop.f32.mrb[0].mxu0
        %v2223 = vadd.f32 %v2138, %v2222
        %v2224 = vpop.f32.mrb[0].mxu0
        %v2225 = vpop.f32.mrb[0].mxu0
        %v2226 = vadd.f32 %v2138, %v2225
        %v2227 = vpop.f32.mrb[0].mxu0
        %2228 = vmatprep.mubr.bf16.mxu0 0
        %2229 = vmatmul.mubr.bf16.gmra.mrb[0].mxu0 %v2132
        %v2230 = vpop.f32.mrb[0].mxu0
        %v2231 = vadd.f32 %v2138, %v2230
        %v2232 = vpop.f32.mrb[0].mxu0
        %v2233 = vpop.f32.mrb[0].mxu0
        %v2234 = vpop.f32.mrb[0].mxu0
        %2235 = vdwg.mxu0
        %v2239 = vcombine.high %v2223, %v2223
        %v2240 = vcombine.high %v2226, %v2226
        %v2241 = vcombine.high %v2231, %v2231
        %v2243 = vcombine.low %v2223, %v2239
        %v2244 = vcombine.low %v2240, %v2231
        %v2247 = vadd.f32 %v1919, %v2243
        %v2248 = vadd.f32 %v1920, %v2226
        %v2249 = vadd.f32 %v1921, %v2244
        %v2250 = vadd.f32 %v1922, %v2241
        %v2251 = vpack.c.bf16 %v2248, %v2247
        %v2252 = vpack.c.bf16 %v2250, %v2249
        %v2255 = vunpack.c.l.b16 %v2251
        %v2256 = vunpack.c.h.b16 %v2251
        %v2257 = vunpack.c.l.b16 %v2252
        %v2258 = vunpack.c.h.b16 %v2252
        %v2259 = vpack.c.b16 %v2255, %v2255
        %v2260 = vpack.c.b16 %v2256, %v2256
        %v2261 = vpack.c.b16 %v2257, %v2257
        %v2262 = vpack.c.b16 %v2258, %v2258
        %2267 = vst.msk [vmem:[#allocation2] sm:$0xf] %vm1169, %v2259
        %vm2268 = vcmask 254976
        %2269 = vst.msk [vmem:[#allocation2 + $0x4] sm:$0x3] %vm2268, %v2260
        %2270 = vst.msk [vmem:[#allocation2 + $0x8] sm:$0xf] %vm1169, %v2261
        %2271 = vst.msk [vmem:[#allocation2 + $0xc] sm:$0x3] %vm2268, %v2262
        %p2272 = scmp.eq.s32.totalorder %s37, 1
        // Predicated region
        $region117: #{clip_caption_forward.1} parent=111 // pred_check
          %p2273 = pneg %p2272
        $region118: #{clip_caption_forward.1} parent=111 // pred_check_branch
          %2275 = sbr.rel (%p2273) target = $region120
        $region119: #{clip_caption_forward.1} parent=111 // pred_region
          %v2280 = vcombine.high %v2247, %v2247
          %v2281 = vcombine.high %v2249, %v2249
          %v2284 = vld [vmem:[%s20] sm:$0x1]
          %v2285 = vld [vmem:[%s21] sm:$0x1]
          %v2286 = vcombine.low %v2247, %v2280
          %v2287 = vcombine.low %v2248, %v2249
          %v2288 = vcombine.low %v2281, %v2250
          %v2292 = vsel %vm1165, %v2286, 0.0
          %2293 = vadd.xlane.f32.xlu0 %v2292
          %v2294 = vpop.xlane.xlu0 %2293
          %v2295 = vsel %vm1165, %v2287, 0.0
          %2296 = vadd.xlane.f32.xlu0 %v2295
          %v2297 = vpop.xlane.xlu0 %2296
          %v2298 = vsel %vm1165, %v2288, 0.0
          %2299 = vadd.xlane.f32.xlu0 %v2298
          %v2300 = vpop.xlane.xlu0 %2299
          %v2301 = vmul.f32 %v2294, %v1179
          %v2302 = vmul.f32 %v2297, %v1179
          %v2303 = vmul.f32 %v2300, %v1179
          %v2308 = vunpack.c.l.s4 839922192
          %v2309 = vunpack.c.0.s8 %v2308
          %v2310 = vlaneseq
          %v2311 = vshrl.u32 %v2310, 7
          %v2312 = vsub.s32 %v2309, %v2311
          %v2313 = vrot.slane %v2301, %v2312
          %v2315 = vunpack.c.l.s4 1985246804
          %v2316 = vunpack.c.0.s8 %v2315
          %v2317 = vlaneseq
          %v2318 = vshrl.u32 %v2317, 7
          %v2319 = vsub.s32 %v2316, %v2318
          %v2320 = vrot.slane %v2301, %v2319
          %v2322 = vunpack.c.l.s4 839922192
          %v2323 = vunpack.c.0.s8 %v2322
          %v2324 = vlaneseq
          %v2325 = vshrl.u32 %v2324, 7
          %v2326 = vsub.s32 %v2323, %v2325
          %v2327 = vrot.slane %v2302, %v2326
          %v2329 = vunpack.c.l.s4 1985246804
          %v2330 = vunpack.c.0.s8 %v2329
          %v2331 = vlaneseq
          %v2332 = vshrl.u32 %v2331, 7
          %v2333 = vsub.s32 %v2330, %v2332
          %v2334 = vrot.slane %v2302, %v2333
          %v2336 = vunpack.c.l.s4 839922192
          %v2337 = vunpack.c.0.s8 %v2336
          %v2338 = vlaneseq
          %v2339 = vshrl.u32 %v2338, 7
          %v2340 = vsub.s32 %v2337, %v2339
          %v2341 = vrot.slane %v2303, %v2340
          %v2343 = vunpack.c.l.s4 1985246804
          %v2344 = vunpack.c.0.s8 %v2343
          %v2345 = vlaneseq
          %v2346 = vshrl.u32 %v2345, 7
          %v2347 = vsub.s32 %v2344, %v2346
          %v2348 = vrot.slane %v2303, %v2347
          %v2355 = vsub.f32 %v2247, %v2313
          %v2356 = vsub.f32 %v2280, %v2320
          %v2357 = vsub.f32 %v2248, %v2327
          %v2358 = vsub.f32 %v2249, %v2334
          %v2359 = vsub.f32 %v2281, %v2341
          %v2360 = vsub.f32 %v2250, %v2348
          %v2361 = vmul.f32 %v2355, %v2355
          %v2362 = vmul.f32 %v2356, %v2356
          %v2363 = vmul.f32 %v2357, %v2357
          %v2364 = vmul.f32 %v2358, %v2358
          %v2365 = vmul.f32 %v2359, %v2359
          %v2366 = vmul.f32 %v2360, %v2360
          %v2373 = vcombine.low %v2361, %v2362
          %v2374 = vcombine.low %v2363, %v2364
          %v2375 = vcombine.low %v2365, %v2366
          %v2379 = vsel %vm1165, %v2373, 0.0
          %2380 = vadd.xlane.f32.xlu0 %v2379
          %v2381 = vpop.xlane.xlu0 %2380
          %v2382 = vsel %vm1165, %v2374, 0.0
          %2383 = vadd.xlane.f32.xlu0 %v2382
          %v2384 = vpop.xlane.xlu0 %2383
          %v2385 = vsel %vm1165, %v2375, 0.0
          %2386 = vadd.xlane.f32.xlu0 %v2385
          %v2387 = vpop.xlane.xlu0 %2386
          %v2388 = vmul.f32 %v2381, %v1179
          %v2389 = vmul.f32 %v2384, %v1179
          %v2390 = vmul.f32 %v2387, %v1179
          %v2391 = vadd.f32 %v2388, 1e-05
          %v2392 = vadd.f32 %v2389, 1e-05
          %v2393 = vadd.f32 %v2390, 1e-05
          %v2394 = vrsqrt.pop %v2391
          %v2395 = vrsqrt.pop %v2392
          %v2396 = vrsqrt.pop %v2393
          %v2401 = vunpack.c.l.s4 839922192
          %v2402 = vunpack.c.0.s8 %v2401
          %v2403 = vlaneseq
          %v2404 = vshrl.u32 %v2403, 7
          %v2405 = vsub.s32 %v2402, %v2404
          %v2406 = vrot.slane %v2394, %v2405
          %v2408 = vunpack.c.l.s4 1985246804
          %v2409 = vunpack.c.0.s8 %v2408
          %v2410 = vlaneseq
          %v2411 = vshrl.u32 %v2410, 7
          %v2412 = vsub.s32 %v2409, %v2411
          %v2413 = vrot.slane %v2394, %v2412
          %v2415 = vunpack.c.l.s4 839922192
          %v2416 = vunpack.c.0.s8 %v2415
          %v2417 = vlaneseq
          %v2418 = vshrl.u32 %v2417, 7
          %v2419 = vsub.s32 %v2416, %v2418
          %v2420 = vrot.slane %v2395, %v2419
          %v2422 = vunpack.c.l.s4 1985246804
          %v2423 = vunpack.c.0.s8 %v2422
          %v2424 = vlaneseq
          %v2425 = vshrl.u32 %v2424, 7
          %v2426 = vsub.s32 %v2423, %v2425
          %v2427 = vrot.slane %v2395, %v2426
          %v2429 = vunpack.c.l.s4 839922192
          %v2430 = vunpack.c.0.s8 %v2429
          %v2431 = vlaneseq
          %v2432 = vshrl.u32 %v2431, 7
          %v2433 = vsub.s32 %v2430, %v2432
          %v2434 = vrot.slane %v2396, %v2433
          %v2436 = vunpack.c.l.s4 1985246804
          %v2437 = vunpack.c.0.s8 %v2436
          %v2438 = vlaneseq
          %v2439 = vshrl.u32 %v2438, 7
          %v2440 = vsub.s32 %v2437, %v2439
          %v2441 = vrot.slane %v2396, %v2440
          %v2448 = vmul.f32 %v2355, %v2406
          %v2449 = vmul.f32 %v2356, %v2413
          %v2450 = vmul.f32 %v2357, %v2420
          %v2451 = vmul.f32 %v2358, %v2427
          %v2452 = vmul.f32 %v2359, %v2434
          %v2453 = vmul.f32 %v2360, %v2441
          %v2455 = vlaneseq
          %v2456 = vshrl.u32 %v2455, 7
          %v2457 = vsub.s32 0, %v2456
          %v2458 = vrot.slane %v2284, %v2457
          %v2460 = vcombine.high %v2458, %v2458
          %v2462 = vmul.f32 %v2448, %v2458
          %v2463 = vmul.f32 %v2449, %v2460
          %v2464 = vmul.f32 %v2450, %v2458
          %v2465 = vmul.f32 %v2451, %v2460
          %v2466 = vmul.f32 %v2452, %v2458
          %v2467 = vmul.f32 %v2453, %v2460
          %v2469 = vlaneseq
          %v2470 = vshrl.u32 %v2469, 7
          %v2471 = vsub.s32 0, %v2470
          %v2472 = vrot.slane %v2285, %v2471
          %v2474 = vcombine.high %v2472, %v2472
          %v2476 = vadd.f32 %v2462, %v2472
          %v2477 = vadd.f32 %v2463, %v2474
          %v2478 = vadd.f32 %v2464, %v2472
          %v2479 = vadd.f32 %v2465, %v2474
          %v2480 = vadd.f32 %v2466, %v2472
          %v2481 = vadd.f32 %v2467, %v2474
          %v2488 = vcombine.low %v2476, %v2477
          %v2489 = vcombine.low %v2478, %v2479
          %v2490 = vcombine.low %v2480, %v2481
          %v2494 = vpack.c.bf16 %v2489, %v2488
          %v2495 = vpack.c.bf16 %v2490, %v2490
          %v2496 = vld [vmem:[%s4] sm:$0xf]
          %v2497 = vld [vmem:[%s4 + $0x4] sm:$0xf]
          %v2498 = vld [vmem:[%s4 + $0x8] sm:$0xf]
          %v2499 = vld [vmem:[%s4 + $0xc] sm:$0xf]
          %v2500 = vld [vmem:[%s4 + $0x10] sm:$0xf]
          %v2501 = vld [vmem:[%s4 + $0x14] sm:$0xf]
          %v2502 = vld [vmem:[%s4 + $0x18] sm:$0xf]
          %v2503 = vld [vmem:[%s4 + $0x1c] sm:$0xf]
          %v2504 = vld [vmem:[%s4 + $0x20] sm:$0xf]
          %v2505 = vld [vmem:[%s4 + $0x24] sm:$0xf]
          %v2506 = vld [vmem:[%s4 + $0x28] sm:$0xf]
          %v2507 = vld [vmem:[%s4 + $0x2c] sm:$0xf]
          %v2508 = vld [vmem:[%s4 + $0x30] sm:$0xf]
          %v2509 = vld [vmem:[%s4 + $0x34] sm:$0xf]
          %v2510 = vld [vmem:[%s4 + $0x38] sm:$0xf]
          %v2511 = vld [vmem:[%s4 + $0x3c] sm:$0xf]
          %v2528 = vunpack.c.l.b16 %v2496
          %v2529 = vunpack.c.l.b16 %v2497
          %v2530 = vunpack.c.l.b16 %v2498
          %v2531 = vunpack.c.l.b16 %v2499
          %v2532 = vunpack.c.l.b16 %v2500
          %v2533 = vunpack.c.l.b16 %v2501
          %v2534 = vunpack.c.l.b16 %v2502
          %v2535 = vunpack.c.l.b16 %v2503
          %v2536 = vunpack.c.l.b16 %v2504
          %v2537 = vunpack.c.l.b16 %v2505
          %v2538 = vunpack.c.l.b16 %v2506
          %v2539 = vunpack.c.l.b16 %v2507
          %v2540 = vunpack.c.l.b16 %v2508
          %v2541 = vunpack.c.l.b16 %v2509
          %v2542 = vunpack.c.l.b16 %v2510
          %v2543 = vunpack.c.l.b16 %v2511
          %v2544 = vpack.c.b16 %v2529, %v2528
          %v2545 = vpack.c.b16 %v2531, %v2530
          %v2546 = vpack.c.b16 %v2533, %v2532
          %v2547 = vpack.c.b16 %v2535, %v2534
          %v2548 = vpack.c.b16 %v2537, %v2536
          %v2549 = vpack.c.b16 %v2539, %v2538
          %v2550 = vpack.c.b16 %v2541, %v2540
          %v2551 = vpack.c.b16 %v2543, %v2542
          %v2553 = vsel %vm1165, %v2494, 0
          %v2556 = vsel %vm1165, %v2495, 0
          %v2559 = vsel %vm1165, %v2544, 0
          %v2562 = vsel %vm1165, %v2545, 0
          %v2565 = vsel %vm1165, %v2546, 0
          %v2568 = vsel %vm1165, %v2547, 0
          %v2571 = vsel %vm1165, %v2548, 0
          %v2574 = vsel %vm1165, %v2549, 0
          %v2577 = vsel %vm1165, %v2550, 0
          %v2580 = vsel %vm1165, %v2551, 0
          %2582 = vmatprep.subr.bf16.mxu0 0
          %2583 = vmatpush1.bf16.xpose.msra.mxu0 %v2559
          %2584 = vmatprep.subr.bf16.mxu0 0
          %2585 = vmatpush1.bf16.xpose.msra.mxu0 %v2562
          %2586 = vmatprep.subr.bf16.mxu0 0
          %2587 = vmatpush1.bf16.xpose.msra.mxu0 %v2565
          %2588 = vmatprep.subr.bf16.mxu0 0
          %2589 = vmatpush1.bf16.xpose.msra.mxu0 %v2568
          %2590 = vmatprep.subr.bf16.mxu0 0
          %2591 = vmatpush1.bf16.xpose.msra.mxu0 %v2571
          %2592 = vmatprep.subr.bf16.mxu0 0
          %2593 = vmatpush1.bf16.xpose.msra.mxu0 %v2574
          %2594 = vmatprep.subr.bf16.mxu0 0
          %2595 = vmatpush1.bf16.xpose.msra.mxu0 %v2577
          %2596 = vmatprep.subr.bf16.mxu0 0
          %2597 = vmatpush1.bf16.xpose.msra.mxu0 %v2580
          %2598 = vmatprep.subr.bf16.mxu0 0
          %2599 = vmatpush1.bf16.xpose.msra.mxu0 0
          %2600 = vmatprep.subr.bf16.mxu0 0
          %2601 = vmatpush1.bf16.xpose.msra.mxu0 0
          %2602 = vmatprep.subr.bf16.mxu0 0
          %2603 = vmatpush1.bf16.xpose.msra.mxu0 0
          %2604 = vmatprep.subr.bf16.mxu0 0
          %2605 = vmatpush1.bf16.xpose.msra.mxu0 0
          %2606 = vmatprep.subr.bf16.mxu0 0
          %2607 = vmatpush1.bf16.xpose.msra.mxu0 0
          %2608 = vmatprep.subr.bf16.mxu0 0
          %2609 = vmatpush1.bf16.xpose.msra.mxu0 0
          %2610 = vmatprep.subr.bf16.mxu0 0
          %2611 = vmatpush1.bf16.xpose.msra.mxu0 0
          %2612 = vmatprep.subr.bf16.mxu0 0
          %2613 = vmatpush1.bf16.xpose.msra.mxu0 0
          %2614 = vmatprep.mubr.bf16.mxu0 0
          %2615 = vmatmul.mubr.bf16.gmra.mrb[0].mxu0 %v2553
          %v2616 = vpop.f32.mrb[0].mxu0
          %v2617 = vadd.f32 0.0, %v2616
          %v2618 = vpop.f32.mrb[0].mxu0
          %v2619 = vpop.f32.mrb[0].mxu0
          %v2620 = vadd.f32 0.0, %v2619
          %v2621 = vpop.f32.mrb[0].mxu0
          %2622 = vmatprep.mubr.bf16.mxu0 0
          %2623 = vmatmul.mubr.bf16.gmra.mrb[0].mxu0 %v2556
          %v2624 = vpop.f32.mrb[0].mxu0
          %v2625 = vadd.f32 0.0, %v2624
          %v2626 = vpop.f32.mrb[0].mxu0
          %v2627 = vpop.f32.mrb[0].mxu0
          %v2628 = vpop.f32.mrb[0].mxu0
          %2629 = vdwg.mxu0
          %2630 = vst [vmem:[%s23] sm:$0xff] %v2617
          %2631 = vst [vmem:[%s23 + $0x8] sm:$0xff] %v2620
          %2632 = vst [vmem:[%s23 + $0x10] sm:$0xff] %v2625
          %v2633 = vld [vmem:[%s22] sm:$0xff]
          %v2634 = vld [vmem:[%s22 + $0x8] sm:$0xff]
          %v2635 = vld [vmem:[%s22 + $0x10] sm:$0xff]
          %v2636 = vlaneseq
          %v2637 = vand.u32 %v2636, 127
          %vm2638 = vcmp.lt.s32.totalorder %v2637, 64
          %v2639 = vsel %vm2638, %v2617, -1e+30
          %v2640 = vsel %vm2638, %v2620, -1e+30
          %v2641 = vsel %vm2638, %v2625, -1e+30
          %2642 = vmax.xlane.f32.xlu0 %v2639
          %v2643 = vpop.xlane.xlu0 %2642
          %2644 = vmax.xlane.f32.xlu0 %v2640
          %v2645 = vpop.xlane.xlu0 %2644
          %2646 = vmax.xlane.f32.xlu0 %v2641
          %v2647 = vpop.xlane.xlu0 %2646
          %v2648 = vsub.f32 %v2639, %v2643
          %v2649 = vsub.f32 %v2640, %v2645
          %v2650 = vsub.f32 %v2641, %v2647
          %v2651 = vmul.f32 %v2648, 1.442695
          %v2652 = vpow.pop %v2651
          %v2653 = vmul.f32 %v2649, 1.442695
          %v2654 = vpow.pop %v2653
          %v2655 = vmul.f32 %v2650, 1.442695
          %v2656 = vpow.pop %v2655
          %2657 = vadd.xlane.f32.xlu0 %v2652
          %v2658 = vpop.xlane.xlu0 %2657
          %2659 = vadd.xlane.f32.xlu0 %v2654
          %v2660 = vpop.xlane.xlu0 %2659
          %2661 = vadd.xlane.f32.xlu0 %v2656
          %v2662 = vpop.xlane.xlu0 %2661
          %v2663 = vlog2.pop %v2658
          %v2664 = vmul.f32 %v2663, 0.6931472
          %v2665 = vlog2.pop %v2660
          %v2666 = vmul.f32 %v2665, 0.6931472
          %v2667 = vlog2.pop %v2662
          %v2668 = vmul.f32 %v2667, 0.6931472
          %v2669 = vadd.f32 %v2643, %v2664
          %v2670 = vadd.f32 %v2645, %v2666
          %v2671 = vadd.f32 %v2647, %v2668
          %2672 = vset.pattern.permute.xlu0 0
          %2673 = vperm.xlu0 %2672, %v2633
          %v2674 = vpop.permute.xlu0 %2673
          %2675 = vset.pattern.permute.xlu0 0
          %2676 = vperm.xlu0 %2675, %v2634
          %v2677 = vpop.permute.xlu0 %2676
          %2678 = vset.pattern.permute.xlu0 0
          %2679 = vperm.xlu0 %2678, %v2635
          %v2680 = vpop.permute.xlu0 %2679
          %vm2681 = vcmp.eq.s32.totalorder %v2674, %v2637
          %vm2682 = vcmp.eq.s32.totalorder %v2677, %v2637
          %vm2683 = vcmp.eq.s32.totalorder %v2680, %v2637
          %v2684 = vsel %vm2681, 1, 0
          %v2685 = vsel %vm2682, 1, 0
          %v2686 = vsel %vm2683, 1, 0
          %v2687 = vcvt.s32.f32 %v2684
          %v2688 = vcvt.s32.f32 %v2685
          %v2689 = vcvt.s32.f32 %v2686
          %v2690 = vmul.f32 %v2639, %v2687
          %v2691 = vmul.f32 %v2640, %v2688
          %v2692 = vmul.f32 %v2641, %v2689
          %2693 = vadd.xlane.f32.xlu0 %v2690
          %v2694 = vpop.xlane.xlu0 %2693
          %2695 = vadd.xlane.f32.xlu0 %v2691
          %v2696 = vpop.xlane.xlu0 %2695
          %2697 = vadd.xlane.f32.xlu0 %v2692
          %v2698 = vpop.xlane.xlu0 %2697
          %vm2699 = vcmp.ne.s32.totalorder %v2633, 4294967196
          %vm2700 = vcmp.ne.s32.totalorder %v2634, 4294967196
          %vm2701 = vcmp.ne.s32.totalorder %v2635, 4294967196
          %v2702 = vsel %vm2699, 1, 0
          %v2703 = vsel %vm2700, 1, 0
          %v2704 = vsel %vm2701, 1, 0
          %v2705 = vcvt.s32.f32 %v2702
          %v2706 = vcvt.s32.f32 %v2703
          %v2707 = vcvt.s32.f32 %v2704
          %v2708 = vsub.f32 %v2669, %v2694
          %v2709 = vsub.f32 %v2670, %v2696
          %v2710 = vsub.f32 %v2671, %v2698
          %v2711 = vmul.f32 %v2708, %v2705
          %v2712 = vmul.f32 %v2709, %v2706
          %v2713 = vmul.f32 %v2710, %v2707
          %vm2714 = vcmask 7168
          %v2715 = vsel %vm2714, %v2711, 0.0
          %v2716 = vsel %vm2714, %v2712, 0.0
          %v2717 = vadd.f32 %v2715, %v2716
          %v2718 = vsel %vm2714, %v2713, 0.0
          %v2719 = vadd.f32 %v2717, %v2718
          %v2720 = vrot.slane %v2719, 4
          %v2721 = vadd.f32 %v2719, %v2720
          %v2722 = vrot.slane %v2721, 2
          %v2723 = vadd.f32 %v2721, %v2722
          %v2724 = vrot.slane %v2723, 1
          %v2725 = vadd.f32 %v2723, %v2724
          %v2726 = vsel %vm2714, %v2705, 0.0
          %v2727 = vsel %vm2714, %v2706, 0.0
          %v2728 = vadd.f32 %v2726, %v2727
          %v2729 = vsel %vm2714, %v2707, 0.0
          %v2730 = vadd.f32 %v2728, %v2729
          %v2731 = vrot.slane %v2730, 4
          %v2732 = vadd.f32 %v2730, %v2731
          %v2733 = vrot.slane %v2732, 2
          %v2734 = vadd.f32 %v2732, %v2733
          %v2735 = vrot.slane %v2734, 1
          %v2736 = vadd.f32 %v2734, %v2735
          %v2737 = vmax.f32 %v2736, 1.0
          %v2738 = vrcp.pop %v2737
          %v2739 = vmul.f32 %v2725, %v2738
          %vm2740 = vcmask 0
          %2741 = vst.msk [vmem:[#allocation3] sm:$0x1] %vm2740, %v2739
        $region120: #{clip_caption_forward.1} parent=111 // pred_fallthru
          _
        // Predicated region
        $region121: #{clip_caption_forward.1} parent=111 // pred_check
          %p2742 = pneg %p593
        $region122: #{clip_caption_forward.1} parent=111 // pred_check_branch
          %2744 = sbr.rel (%p2742) target = $region124
        $region123: #{clip_caption_forward.1} parent=111 // pred_region
          _
        $region124: #{clip_caption_forward.1} parent=111 // pred_fallthru
          _
        // Predicated region
        $region125: #{clip_caption_forward.1} parent=111 // pred_check
          %p2745 = pneg %p614
        $region126: #{clip_caption_forward.1} parent=111 // pred_check_branch
          %2747 = sbr.rel (%p2745) target = $region128
        $region127: #{clip_caption_forward.1} parent=111 // pred_region
          %s2749 = ssub.s32 16, 16
          %2750 = vsyncadd [#allocation4], %s2749
          %s2752 = sshll.u32 [#allocation3], 4
          %s2753 = int_to_ptr.vmem [resolvable:$true] %s2752
          %2755 = dma.vmem_to_hbm [thread:$0]  %s2753, 16, %s24, [#allocation4]
        $region128: #{clip_caption_forward.1} parent=111 // pred_fallthru
          _
        // Predicated region
        $region129: #{clip_caption_forward.1} parent=111 // pred_check
          %p2756 = pneg %p593
        $region130: #{clip_caption_forward.1} parent=111 // pred_check_branch
          %2758 = sbr.rel (%p2756) target = $region132
        $region131: #{clip_caption_forward.1} parent=111 // pred_region
          _
        $region132: #{clip_caption_forward.1} parent=111 // pred_fallthru
          _
        // Predicated region
        $region133: #{clip_caption_forward.1} parent=111 // pred_check
          %p2759 = pneg %p614
        $region134: #{clip_caption_forward.1} parent=111 // pred_check_branch
          %2761 = sbr.rel (%p2759) target = $region136
        $region135: #{clip_caption_forward.1} parent=111 // pred_region
          %2762 = dma.done [#allocation4], 16
        $region136: #{clip_caption_forward.1} parent=111 // pred_fallthru
          _
      $region112: #{clip_caption_forward.1} parent=5 // pred_fallthru
        _
      %p2763 = scmp.le.s32.totalorder 2, %s32
      // Predicated region
      $region137: #{clip_caption_forward.1} parent=5 // pred_check
        %p2764 = pneg %p2763
      $region138: #{clip_caption_forward.1} parent=5 // pred_check_branch
        %2766 = sbr.rel (%p2764) target = $region140
      $region139: #{clip_caption_forward.1} parent=5 // pred_region
        %s2767 = ssub.s32 %s32, 2
      $region140: #{clip_caption_forward.1} parent=5 // pred_fallthru
        _
    $region6: #{clip_caption_forward.1} parent=1 // loop_footer
      %s36 = sadd.s32 1, %s32
    $region7: #{clip_caption_forward.1} parent=1 // loop_footer_branch
      %31 = sbr.rel target = $region3
    $region8: #{clip_caption_forward.1} parent=1 // loop_exit
      _
    %2768 = vsyncpa [#allocation4], 1
    %s2769 = scalar_lea.sflag [#allocation4], 1
    %2770 = vsyncpa %s2769, 1

</llo_original>
